<compile_context>
chip_gen: v7x
topology: tpu7x:2x2x1
jax: 0.10.0
libtpu: 0.0.40
codegen_flags: <defaults>
</compile_context>

<pallas_src>
import jax
import jax.numpy as jnp
import numpy as np
from jax import lax
from jax.experimental import pallas as pl
from jax.experimental.pallas import tpu as pltpu

# ----------------------------- synthetic config ------------------------------
N = 4          # number of classes (batch size for 'style_content')
K = 4          # number of style prompt vectors (batch size for 'style')
S = 8          # sequence length (stand-in for CLIP's 77)
D = 128        # transformer width (stand-in for 1024) -- lane-dense
H = 4          # attention heads
DH = D // H    # head dim
MLP = 4 * D    # mlp hidden dim
P = 128        # text projection dim (stand-in for 1024) -- lane-dense
L = 2          # transformer layers
EPS = 1e-5
NEG = -1e9


# ------------------- shared math (used by kernel AND reference) --------------
def _layernorm(x, w, b):
    # single-pass LN: one reduction sweep for mean and mean-of-squares
    mu = jnp.mean(x, axis=-1, keepdims=True)
    ms = jnp.mean(x * x, axis=-1, keepdims=True)
    var = ms - mu * mu
    return (x - mu) * lax.rsqrt(var + EPS) * w + b


def _mm(a, w):
    # bf16 MXU inputs, f32 accumulation (weights are stored bf16)
    return jnp.dot(a.astype(jnp.bfloat16), w, preferred_element_type=jnp.float32)


def _block_math(x, mask, wqkv, bqkv, wo, bo,
                ln1w, ln1b, ln2w, ln2b, w1, b1, w2, b2):
    """One pre-LN transformer block on flattened activations x: (B*S, D)."""
    BS = x.shape[0]
    B = BS // S

    # ---- attention, heads folded into a single leading batch axis ----------
    h = _layernorm(x, ln1w, ln1b)
    qkv = _mm(h, wqkv) + bqkv                          # (BS, 3D); scale in W_q

    def fold_heads(base):
        # (BS, D) column slab -> (H*B, S, DH), head-major on the batch axis
        return jnp.concatenate(
            [qkv[:, base + hh * DH: base + (hh + 1) * DH].reshape(B, S, DH)
             for hh in range(H)], axis=0).astype(jnp.bfloat16)

    qn = fold_heads(0)                                 # (H*B, S, DH)
    kn = fold_heads(D)
    vn = fold_heads(2 * D)

    s = jnp.einsum('nqd,nkd->nqk', qn, kn,
                   preferred_element_type=jnp.float32) + mask   # (H*B, S, S)
    s = s - jnp.max(s, axis=-1, keepdims=True)
    p = jnp.exp(s)
    p = p / jnp.sum(p, axis=-1, keepdims=True)         # exact softmax
    o = jnp.einsum('nqk,nkd->nqd', p.astype(jnp.bfloat16), vn,
                   preferred_element_type=jnp.float32)          # (H*B, S, DH)

    # unfold heads onto the lane axis -> (BS, D), then ONE K=128 W_o matmul
    o_full = jnp.concatenate(
        [o[hh * B:(hh + 1) * B].reshape(BS, DH) for hh in range(H)], axis=-1)
    x1 = x + _mm(o_full, wo) + bo

    # ------------------------------ pre-LN MLP -------------------------------
    h2 = _layernorm(x1, ln2w, ln2b)
    m = jax.nn.gelu(_mm(h2, w1) + b1)
    return x1 + _mm(m, w2) + b2


def _project_normalize(pooled, proj):
    f = _mm(pooled, proj)                              # (B, P)
    inv = lax.rsqrt(jnp.sum(f * f, axis=-1, keepdims=True) + 1e-12)
    return f * inv


# --------------------------- fused text-tower kernel --------------------------
def _text_tower_kernel(x0_ref, mask_ref, wqkv_ref, bqkv_ref, wo_ref, bo_ref,
                       ln1w_ref, ln1b_ref, ln2w_ref, ln2b_ref,
                       w1_ref, b1_ref, w2_ref, b2_ref,
                       lnfw_ref, lnfb_ref, proj_ref, onehot_ref,
                       lhs_ref, feat_ref, x_acc):
    l = pl.program_id(0)

    @pl.when(l == 0)
    def _():
        x_acc[...] = x0_ref[...]                       # load initial activations once

    x = x_acc[...]                                     # (B*S, D) f32, VMEM-resident
    x_new = _block_math(x, mask_ref[...],
                        wqkv_ref[0], bqkv_ref[0], wo_ref[0], bo_ref[0],
                        ln1w_ref[0], ln1b_ref[0], ln2w_ref[0], ln2b_ref[0],
                        w1_ref[0], b1_ref[0], w2_ref[0], b2_ref[0])
    x_acc[...] = x_new

    # ---- final layer: ln_final + argmax pooling + projection + L2-normalize --
    @pl.when(l == pl.num_programs(0) - 1)
    def _():
        hf = _layernorm(x_new, lnfw_ref[...], lnfb_ref[...])
        lhs_ref[...] = hf                              # last_hidden_state (flattened)
        # one-hot EOT pooling on the MXU: bf16 x bf16 -> f32 (exact selection)
        pooled = jnp.dot(onehot_ref[...], hf.astype(jnp.bfloat16),
                         preferred_element_type=jnp.float32)    # (B, D)
        feat_ref[...] = _project_normalize(pooled, proj_ref[...])


def text_tower(p, x2d, mask, onehot):
    BS = x2d.shape[0]
    B = onehot.shape[0]

    def stacked(*tail):                                # per-layer (leading L) weights
        nz = len(tail)
        return pl.BlockSpec((1,) + tuple(tail), lambda l, nz=nz: (l,) + (0,) * nz)

    def shared(*shape):                                # layer-invariant arrays
        nd = len(shape)
        return pl.BlockSpec(tuple(shape), lambda l, nd=nd: (0,) * nd)

    grid_spec = pltpu.PrefetchScalarGridSpec(
        num_scalar_prefetch=0,
        grid=(L,),
        in_specs=[
            shared(BS, D),                             # x0
            shared(S, S),                              # causal mask (built once)
            stacked(D, 3 * D),                         # wqkv (bf16)
            stacked(1, 3 * D),                         # bqkv
            stacked(D, D),                             # wo (bf16)
            stacked(1, D),                             # bo
            stacked(1, D), stacked(1, D),              # ln1w, ln1b
            stacked(1, D), stacked(1, D),              # ln2w, ln2b
            stacked(D, MLP),                           # w1 (bf16)
            stacked(1, MLP),                           # b1
            stacked(MLP, D),                           # w2 (bf16)
            stacked(1, D),                             # b2
            shared(1, D), shared(1, D),                # lnfw, lnfb
            shared(D, P),                              # proj (bf16)
            shared(B, BS),                             # one-hot pooling matrix (bf16)
        ],
        out_specs=(shared(BS, D), shared(B, P)),
        scratch_shapes=[pltpu.VMEM((BS, D), jnp.float32)],
    )
    return pl.pallas_call(
        _text_tower_kernel,
        out_shape=(jax.ShapeDtypeStruct((BS, D), jnp.float32),
                   jax.ShapeDtypeStruct((B, P), jnp.float32)),
        grid_spec=grid_spec,
        compiler_params=pltpu.CompilerParams(
            dimension_semantics=("arbitrary",),
            # Toy sizes: per-layer bf16 weights ~0.4 MiB, depth-2 buffering is
            # tiny.  For real CLIP-H (D=1024) raise this (~96 MiB on v6e) or
            # split the MLP weight streaming to stay under v7x's 64 MiB.
            vmem_limit_bytes=32 * 1024 * 1024),
    )(x2d, mask, p['wqkv'], p['bqkv'], p['wo'], p['bo'],
      p['ln1w'], p['ln1b'], p['ln2w'], p['ln2b'],
      p['w1'], p['b1'], p['w2'], p['b2'],
      p['lnfw'], p['lnfb'], p['proj'], onehot)


# ----------------------------- parameter setup -------------------------------
def init_params(key):
    ks = iter(jax.random.split(key, 32))

    def nrm(shape, std=0.02):
        return jax.random.normal(next(ks), shape, jnp.float32) * std

    scale = DH ** -0.5
    wq = nrm((L, D, D)) * scale                        # fold attention scale into W_q
    wk = nrm((L, D, D))
    wv = nrm((L, D, D))
    params = {
        # embeddings / prompt pieces (roles of token_embedding, ctx, pos_embed)
        'ctx': nrm((K, 1, D)),                         # nn.Parameter pseudo_vector
        'pos': nrm((S, D)),                            # positional_embedding
        'emb_p_style': nrm((K, S, D), 1.0),            # token_embedding('a * style of a')
        'emb_prompt': nrm((N, S, D), 1.0),             # token_embedding(prompt_list)
        # stacked transformer weights (matmul weights stored in bf16)
        'wqkv': jnp.concatenate([wq, wk, wv], axis=-1).astype(jnp.bfloat16),
        'bqkv': nrm((L, 1, 3 * D)),
        'wo': nrm((L, D, D)).astype(jnp.bfloat16),
        'bo': nrm((L, 1, D)),
        'ln1w': 1.0 + nrm((L, 1, D), 0.05), 'ln1b': nrm((L, 1, D), 0.05),
        'ln2w': 1.0 + nrm((L, 1, D), 0.05), 'ln2b': nrm((L, 1, D), 0.05),
        'w1': nrm((L, D, MLP)).astype(jnp.bfloat16), 'b1': nrm((L, 1, MLP)),
        'w2': nrm((L, MLP, D)).astype(jnp.bfloat16), 'b2': nrm((L, 1, D)),
        # final LN + text projection
        'lnfw': 1.0 + nrm((1, D), 0.05), 'lnfb': nrm((1, D), 0.05),
        'proj': nrm((D, P), D ** -0.5).astype(jnp.bfloat16),
    }
    return params


def make_tokens(key, B):
    # synthetic token ids; a large "EOT" id at a per-row position so that
    # argmax(dim=-1) behaves like CLIP's EOT pooling.
    toks = jax.random.randint(key, (B, S), 1, 50, dtype=jnp.int32)
    eot_pos = (jnp.arange(B) % (S - 3)) + 3
    return toks.at[jnp.arange(B), eot_pos].set(999)


# ------------------------------- forward pass --------------------------------
def build_embedding(params, k, p_case):
    if p_case == 'style':
        # get_p_style(): cat([p_style_start, ctx, p_style_end], dim=1)
        start = params['emb_p_style'][:, :2, :]
        end = params['emb_p_style'][:, 3:, :]
        return jnp.concatenate([start, params['ctx'], end], axis=1)          # (K,S,D)
    # get_p_style_content_NEW_K(k)
    ctx = jnp.broadcast_to(params['ctx'][:, None, :, :], (K, N, 1, D))[k]    # (N,1,D)
    start = params['emb_prompt'][:, :2, :]
    end = params['emb_prompt'][:, 3:, :]
    return jnp.concatenate([start, ctx, end], axis=1)                        # (N,S,D)


def _causal_mask():
    return jnp.triu(jnp.full((S, S), NEG, jnp.float32), k=1)


def forward(params, tokens_style, tokens_prompt, k, p_case):
    emb = build_embedding(params, k, p_case)
    tokens = tokens_style if p_case == 'style' else tokens_prompt
    B = emb.shape[0]
    x2d = (emb + params['pos'][None]).reshape(B * S, D)       # + positional_embedding
    mask = _causal_mask()
    pool_idx = jnp.argmax(tokens, axis=-1).astype(jnp.int32)
    onehot = (jnp.arange(B * S, dtype=jnp.int32)[None, :]
              == (jnp.arange(B, dtype=jnp.int32) * S + pool_idx)[:, None]
              ).astype(jnp.bfloat16)                          # (B, B*S) pooling matrix
    lhs2d, feat = text_tower(params, x2d, mask, onehot)
    return [lhs2d.reshape(B, S, D), feat]


# ------------------------- pure-JAX reference (check) ------------------------
def forward_ref(params, tokens_style, tokens_prompt, k, p_case):
    emb = build_embedding(params, k, p_case)
    tokens = tokens_style if p_case == 'style' else tokens_prompt
    B = emb.shape[0]
    x = (emb + params['pos'][None]).reshape(B * S, D)
    mask = _causal_mask()
    for l in range(L):
        x = _block_math(x, mask,
                        params['wqkv'][l], params['bqkv'][l],
                        params['wo'][l], params['bo'][l],
                        params['ln1w'][l], params['ln1b'][l],
                        params['ln2w'][l], params['ln2b'][l],
                        params['w1'][l], params['b1'][l],
                        params['w2'][l], params['b2'][l])
    hf = _layernorm(x, params['lnfw'], params['lnfb'])
    lhs = hf.reshape(B, S, D)
    pooled = lhs[jnp.arange(B), jnp.argmax(tokens, axis=-1)]   # exact EOT selection
    feat = _project_normalize(pooled, params['proj'])
    return [lhs, feat]


# ----------------------------------- main -------------------------------------
if __name__ == "__main__":
    key = jax.random.PRNGKey(0)
    kp, kt1, kt2 = jax.random.split(key, 3)
    params = init_params(kp)
    tokens_style = make_tokens(kt1, K)        # tokenizer('a * style of a') stand-in
    tokens_prompt = make_tokens(kt2, N)       # tokenizer(prompt_list) stand-in

    for p_case, k_idx in (('style', 0), ('style_content', 1)):
        out = jax.block_until_ready(
            forward(params, tokens_style, tokens_prompt, k_idx, p_case))
        ref = forward_ref(params, tokens_style, tokens_prompt, k_idx, p_case)
        np.testing.assert_allclose(np.asarray(out[0]), np.asarray(ref[0]),
                                   rtol=5e-3, atol=5e-3)
        np.testing.assert_allclose(np.asarray(out[1]), np.asarray(ref[1]),
                                   rtol=5e-3, atol=5e-3)

    # TODO(synk): pretrained open_clip CLIP-ViT-H weights, the BPE tokenizer and
    # the StableDiffusionPipeline have no in-kernel equivalent; replaced with
    # deterministic synthetic parameters of the same structure.
    print("KERNEL_OK")
</pallas_src>

<mosaic_0001>
module attributes {stable_mosaic.version = 11 : i64} {
  func.func @_text_tower_kernel(%arg0: i32, %arg1: memref<32x128xf32, #tpu.memory_space<vmem>>, %arg2: memref<8x8xf32, #tpu.memory_space<vmem>>, %arg3: memref<1x128x384xbf16, #tpu.memory_space<vmem>>, %arg4: memref<1x1x384xf32, #tpu.memory_space<vmem>>, %arg5: memref<1x128x128xbf16, #tpu.memory_space<vmem>>, %arg6: memref<1x1x128xf32, #tpu.memory_space<vmem>>, %arg7: memref<1x1x128xf32, #tpu.memory_space<vmem>>, %arg8: memref<1x1x128xf32, #tpu.memory_space<vmem>>, %arg9: memref<1x1x128xf32, #tpu.memory_space<vmem>>, %arg10: memref<1x1x128xf32, #tpu.memory_space<vmem>>, %arg11: memref<1x128x512xbf16, #tpu.memory_space<vmem>>, %arg12: memref<1x1x512xf32, #tpu.memory_space<vmem>>, %arg13: memref<1x512x128xbf16, #tpu.memory_space<vmem>>, %arg14: memref<1x1x128xf32, #tpu.memory_space<vmem>>, %arg15: memref<1x128xf32, #tpu.memory_space<vmem>>, %arg16: memref<1x128xf32, #tpu.memory_space<vmem>>, %arg17: memref<128x128xbf16, #tpu.memory_space<vmem>>, %arg18: memref<4x32xbf16, #tpu.memory_space<vmem>>, %arg19: memref<32x128xf32, #tpu.memory_space<vmem>>, %arg20: memref<4x128xf32, #tpu.memory_space<vmem>>, %arg21: memref<32x128xf32, #tpu.memory_space<vmem>>) attributes {dimension_semantics = [#tpu.dimension_semantics<arbitrary>], iteration_bounds = array<i64: 2>, scalar_prefetch = 0 : i64, scratch_operands = 1 : i64, tpu.core_type = #tpu.core_type<tc>, window_params = [{pipeline_mode = #tpu.pipeline_mode<synchronous>, transform_indices = @transform_0, window_bounds = array<i64: 32, 128>}, {pipeline_mode = #tpu.pipeline_mode<synchronous>, transform_indices = @transform_1, window_bounds = array<i64: 8, 8>}, {transform_indices = @transform_2, window_bounds = array<i64: 1, 128, 384>}, {transform_indices = @transform_3, window_bounds = array<i64: 1, 1, 384>}, {transform_indices = @transform_4, window_bounds = array<i64: 1, 128, 128>}, {transform_indices = @transform_5, window_bounds = array<i64: 1, 1, 128>}, {transform_indices = @transform_6, window_bounds = array<i64: 1, 1, 128>}, {transform_indices = @transform_7, window_bounds = array<i64: 1, 1, 128>}, {transform_indices = @transform_8, window_bounds = array<i64: 1, 1, 128>}, {transform_indices = @transform_9, window_bounds = array<i64: 1, 1, 128>}, {transform_indices = @transform_10, window_bounds = array<i64: 1, 128, 512>}, {transform_indices = @transform_11, window_bounds = array<i64: 1, 1, 512>}, {transform_indices = @transform_12, window_bounds = array<i64: 1, 512, 128>}, {transform_indices = @transform_13, window_bounds = array<i64: 1, 1, 128>}, {pipeline_mode = #tpu.pipeline_mode<synchronous>, transform_indices = @transform_14, window_bounds = array<i64: 1, 128>}, {pipeline_mode = #tpu.pipeline_mode<synchronous>, transform_indices = @transform_15, window_bounds = array<i64: 1, 128>}, {pipeline_mode = #tpu.pipeline_mode<synchronous>, transform_indices = @transform_16, window_bounds = array<i64: 128, 128>}, {pipeline_mode = #tpu.pipeline_mode<synchronous>, transform_indices = @transform_17, window_bounds = array<i64: 4, 32>}, {pipeline_mode = #tpu.pipeline_mode<synchronous>, transform_indices = @transform_18, window_bounds = array<i64: 32, 128>}, {pipeline_mode = #tpu.pipeline_mode<synchronous>, transform_indices = @transform_19, window_bounds = array<i64: 4, 128>}]} {
    %c0_i32 = arith.constant 0 : i32
    %0 = arith.cmpi eq, %arg0, %c0_i32 : i32
    %1 = arith.extui %0 : i1 to i32
    %c0_i32_0 = arith.constant 0 : i32
    %2 = arith.cmpi ne, %1, %c0_i32_0 : i32
    scf.if %2 {
      %c0_64 = arith.constant 0 : index
      %c0_65 = arith.constant 0 : index
      %162 = vector.load %arg1[%c0_64, %c0_65] : memref<32x128xf32, #tpu.memory_space<vmem>>, vector<32x128xf32>
      %c0_66 = arith.constant 0 : index
      %c0_67 = arith.constant 0 : index
      %163 = vector.load %arg21[%c0_66, %c0_67] : memref<32x128xf32, #tpu.memory_space<vmem>>, vector<32x128xf32>
      tpu.vector_store %arg21[%c0_66, %c0_67], %162 {strides = array<i32>} : memref<32x128xf32, #tpu.memory_space<vmem>>, vector<32x128xf32>,
    } else {
    }
    %c0 = arith.constant 0 : index
    %c0_1 = arith.constant 0 : index
    %3 = vector.load %arg21[%c0, %c0_1] : memref<32x128xf32, #tpu.memory_space<vmem>>, vector<32x128xf32>
    %c0_2 = arith.constant 0 : index
    %c0_3 = arith.constant 0 : index
    %4 = vector.load %arg2[%c0_2, %c0_3] : memref<8x8xf32, #tpu.memory_space<vmem>>, vector<8x8xf32>
    %c0_4 = arith.constant 0 : index
    %c0_5 = arith.constant 0 : index
    %c0_6 = arith.constant 0 : index
    %5 = vector.load %arg3[%c0_4, %c0_5, %c0_6] : memref<1x128x384xbf16, #tpu.memory_space<vmem>>, vector<1x128x384xbf16>
    %6 = vector.shape_cast %5 : vector<1x128x384xbf16> to vector<128x384xbf16>
    %c0_7 = arith.constant 0 : index
    %c0_8 = arith.constant 0 : index
    %c0_9 = arith.constant 0 : index
    %7 = vector.load %arg4[%c0_7, %c0_8, %c0_9] : memref<1x1x384xf32, #tpu.memory_space<vmem>>, vector<1x1x384xf32>
    %8 = vector.shape_cast %7 : vector<1x1x384xf32> to vector<1x384xf32>
    %c0_10 = arith.constant 0 : index
    %c0_11 = arith.constant 0 : index
    %c0_12 = arith.constant 0 : index
    %9 = vector.load %arg5[%c0_10, %c0_11, %c0_12] : memref<1x128x128xbf16, #tpu.memory_space<vmem>>, vector<1x128x128xbf16>
    %10 = vector.shape_cast %9 : vector<1x128x128xbf16> to vector<128x128xbf16>
    %c0_13 = arith.constant 0 : index
    %c0_14 = arith.constant 0 : index
    %c0_15 = arith.constant 0 : index
    %11 = vector.load %arg6[%c0_13, %c0_14, %c0_15] : memref<1x1x128xf32, #tpu.memory_space<vmem>>, vector<1x1x128xf32>
    %12 = vector.shape_cast %11 : vector<1x1x128xf32> to vector<1x128xf32>
    %c0_16 = arith.constant 0 : index
    %c0_17 = arith.constant 0 : index
    %c0_18 = arith.constant 0 : index
    %13 = vector.load %arg7[%c0_16, %c0_17, %c0_18] : memref<1x1x128xf32, #tpu.memory_space<vmem>>, vector<1x1x128xf32>
    %14 = vector.shape_cast %13 : vector<1x1x128xf32> to vector<1x128xf32>
    %c0_19 = arith.constant 0 : index
    %c0_20 = arith.constant 0 : index
    %c0_21 = arith.constant 0 : index
    %15 = vector.load %arg8[%c0_19, %c0_20, %c0_21] : memref<1x1x128xf32, #tpu.memory_space<vmem>>, vector<1x1x128xf32>
    %16 = vector.shape_cast %15 : vector<1x1x128xf32> to vector<1x128xf32>
    %c0_22 = arith.constant 0 : index
    %c0_23 = arith.constant 0 : index
    %c0_24 = arith.constant 0 : index
    %17 = vector.load %arg9[%c0_22, %c0_23, %c0_24] : memref<1x1x128xf32, #tpu.memory_space<vmem>>, vector<1x1x128xf32>
    %18 = vector.shape_cast %17 : vector<1x1x128xf32> to vector<1x128xf32>
    %c0_25 = arith.constant 0 : index
    %c0_26 = arith.constant 0 : index
    %c0_27 = arith.constant 0 : index
    %19 = vector.load %arg10[%c0_25, %c0_26, %c0_27] : memref<1x1x128xf32, #tpu.memory_space<vmem>>, vector<1x1x128xf32>
    %20 = vector.shape_cast %19 : vector<1x1x128xf32> to vector<1x128xf32>
    %c0_28 = arith.constant 0 : index
    %c0_29 = arith.constant 0 : index
    %c0_30 = arith.constant 0 : index
    %21 = vector.load %arg11[%c0_28, %c0_29, %c0_30] : memref<1x128x512xbf16, #tpu.memory_space<vmem>>, vector<1x128x512xbf16>
    %22 = vector.shape_cast %21 : vector<1x128x512xbf16> to vector<128x512xbf16>
    %c0_31 = arith.constant 0 : index
    %c0_32 = arith.constant 0 : index
    %c0_33 = arith.constant 0 : index
    %23 = vector.load %arg12[%c0_31, %c0_32, %c0_33] : memref<1x1x512xf32, #tpu.memory_space<vmem>>, vector<1x1x512xf32>
    %24 = vector.shape_cast %23 : vector<1x1x512xf32> to vector<1x512xf32>
    %c0_34 = arith.constant 0 : index
    %c0_35 = arith.constant 0 : index
    %c0_36 = arith.constant 0 : index
    %25 = vector.load %arg13[%c0_34, %c0_35, %c0_36] : memref<1x512x128xbf16, #tpu.memory_space<vmem>>, vector<1x512x128xbf16>
    %26 = vector.shape_cast %25 : vector<1x512x128xbf16> to vector<512x128xbf16>
    %c0_37 = arith.constant 0 : index
    %c0_38 = arith.constant 0 : index
    %c0_39 = arith.constant 0 : index
    %27 = vector.load %arg14[%c0_37, %c0_38, %c0_39] : memref<1x1x128xf32, #tpu.memory_space<vmem>>, vector<1x1x128xf32>
    %28 = vector.shape_cast %27 : vector<1x1x128xf32> to vector<1x128xf32>
    %cst = arith.constant dense<0.000000e+00> : vector<32xf32>
    %29 = vector.multi_reduction <add>, %3, %cst [1] : vector<32x128xf32> to vector<32xf32>
    %30 = vector.shape_cast %29 : vector<32xf32> to vector<32x1xf32>
    %cst_40 = arith.constant 1.280000e+02 : f32
    %31 = vector.broadcast %cst_40 : f32 to vector<32x1xf32>
    %32 = arith.divf %30, %31 : vector<32x1xf32>
    %33 = arith.mulf %3, %3 : vector<32x128xf32>
    %cst_41 = arith.constant dense<0.000000e+00> : vector<32xf32>
    %34 = vector.multi_reduction <add>, %33, %cst_41 [1] : vector<32x128xf32> to vector<32xf32>
    %35 = vector.shape_cast %34 : vector<32xf32> to vector<32x1xf32>
    %cst_42 = arith.constant 1.280000e+02 : f32
    %36 = vector.broadcast %cst_42 : f32 to vector<32x1xf32>
    %37 = arith.divf %35, %36 : vector<32x1xf32>
    %38 = arith.mulf %32, %32 : vector<32x1xf32>
    %39 = arith.subf %37, %38 : vector<32x1xf32>
    %40 = vector.broadcast %32 : vector<32x1xf32> to vector<32x128xf32>
    %41 = arith.subf %3, %40 : vector<32x128xf32>
    %cst_43 = arith.constant 9.99999974E-6 : f32
    %42 = vector.broadcast %cst_43 : f32 to vector<32x1xf32>
    %43 = arith.addf %39, %42 : vector<32x1xf32>
    %44 = math.rsqrt %43 : vector<32x1xf32>
    %45 = vector.broadcast %44 : vector<32x1xf32> to vector<32x128xf32>
    %46 = arith.mulf %41, %45 : vector<32x128xf32>
    %47 = vector.broadcast %14 : vector<1x128xf32> to vector<32x128xf32>
    %48 = arith.mulf %46, %47 : vector<32x128xf32>
    %49 = vector.broadcast %16 : vector<1x128xf32> to vector<32x128xf32>
    %50 = arith.addf %48, %49 : vector<32x128xf32>
    %51 = arith.truncf %50 : vector<32x128xf32> to vector<32x128xbf16>
    %cst_44 = arith.constant dense<0.000000e+00> : vector<32x384xf32>
    %52 = tpu.matmul %51, %6, %cst_44 {dimension_numbers = #tpu.dot_dimension_numbers<[1], [0], [0], [1], [0, 0, 1, 1], [], []>} : vector<32x128xbf16>, vector<128x384xbf16>, vector<32x384xf32> -> vector<32x384xf32>
    %53 = vector.broadcast %8 : vector<1x384xf32> to vector<32x384xf32>
    %54 = arith.addf %52, %53 : vector<32x384xf32>
    %55 = vector.extract_strided_slice %54 {offsets = [0, 0], sizes = [32, 32], strides = [1, 1]} : vector<32x384xf32> to vector<32x32xf32>
    %56 = vector.shape_cast %55 : vector<32x32xf32> to vector<4x8x32xf32>
    %57 = vector.extract_strided_slice %54 {offsets = [0, 32], sizes = [32, 32], strides = [1, 1]} : vector<32x384xf32> to vector<32x32xf32>
    %58 = vector.shape_cast %57 : vector<32x32xf32> to vector<4x8x32xf32>
    %59 = vector.extract_strided_slice %54 {offsets = [0, 64], sizes = [32, 32], strides = [1, 1]} : vector<32x384xf32> to vector<32x32xf32>
    %60 = vector.shape_cast %59 : vector<32x32xf32> to vector<4x8x32xf32>
    %61 = vector.extract_strided_slice %54 {offsets = [0, 96], sizes = [32, 32], strides = [1, 1]} : vector<32x384xf32> to vector<32x32xf32>
    %62 = vector.shape_cast %61 : vector<32x32xf32> to vector<4x8x32xf32>
    %63 = tpu.concatenate %56, %58, %60, %62 in 0 : vector<4x8x32xf32>, vector<4x8x32xf32>, vector<4x8x32xf32>, vector<4x8x32xf32> -> vector<16x8x32xf32>
    %64 = arith.truncf %63 : vector<16x8x32xf32> to vector<16x8x32xbf16>
    %65 = vector.extract_strided_slice %54 {offsets = [0, 128], sizes = [32, 32], strides = [1, 1]} : vector<32x384xf32> to vector<32x32xf32>
    %66 = vector.shape_cast %65 : vector<32x32xf32> to vector<4x8x32xf32>
    %67 = vector.extract_strided_slice %54 {offsets = [0, 160], sizes = [32, 32], strides = [1, 1]} : vector<32x384xf32> to vector<32x32xf32>
    %68 = vector.shape_cast %67 : vector<32x32xf32> to vector<4x8x32xf32>
    %69 = vector.extract_strided_slice %54 {offsets = [0, 192], sizes = [32, 32], strides = [1, 1]} : vector<32x384xf32> to vector<32x32xf32>
    %70 = vector.shape_cast %69 : vector<32x32xf32> to vector<4x8x32xf32>
    %71 = vector.extract_strided_slice %54 {offsets = [0, 224], sizes = [32, 32], strides = [1, 1]} : vector<32x384xf32> to vector<32x32xf32>
    %72 = vector.shape_cast %71 : vector<32x32xf32> to vector<4x8x32xf32>
    %73 = tpu.concatenate %66, %68, %70, %72 in 0 : vector<4x8x32xf32>, vector<4x8x32xf32>, vector<4x8x32xf32>, vector<4x8x32xf32> -> vector<16x8x32xf32>
    %74 = arith.truncf %73 : vector<16x8x32xf32> to vector<16x8x32xbf16>
    %75 = vector.extract_strided_slice %54 {offsets = [0, 256], sizes = [32, 32], strides = [1, 1]} : vector<32x384xf32> to vector<32x32xf32>
    %76 = vector.shape_cast %75 : vector<32x32xf32> to vector<4x8x32xf32>
    %77 = vector.extract_strided_slice %54 {offsets = [0, 288], sizes = [32, 32], strides = [1, 1]} : vector<32x384xf32> to vector<32x32xf32>
    %78 = vector.shape_cast %77 : vector<32x32xf32> to vector<4x8x32xf32>
    %79 = vector.extract_strided_slice %54 {offsets = [0, 320], sizes = [32, 32], strides = [1, 1]} : vector<32x384xf32> to vector<32x32xf32>
    %80 = vector.shape_cast %79 : vector<32x32xf32> to vector<4x8x32xf32>
    %81 = vector.extract_strided_slice %54 {offsets = [0, 352], sizes = [32, 32], strides = [1, 1]} : vector<32x384xf32> to vector<32x32xf32>
    %82 = vector.shape_cast %81 : vector<32x32xf32> to vector<4x8x32xf32>
    %83 = tpu.concatenate %76, %78, %80, %82 in 0 : vector<4x8x32xf32>, vector<4x8x32xf32>, vector<4x8x32xf32>, vector<4x8x32xf32> -> vector<16x8x32xf32>
    %84 = arith.truncf %83 : vector<16x8x32xf32> to vector<16x8x32xbf16>
    "tpu.trace_start"() <{level = 10 : i32, message = "nqd,nkd->nqk"}> : () -> ()
    %cst_45 = arith.constant dense<0.000000e+00> : vector<16x8x8xf32>
    %85 = tpu.matmul %64, %74, %cst_45 {dimension_numbers = #tpu.dot_dimension_numbers<[2], [2], [1], [1], [0, 0, 0, 1, 1, 1], [0], [0]>} : vector<16x8x32xbf16>, vector<16x8x32xbf16>, vector<16x8x8xf32> -> vector<16x8x8xf32>
    "tpu.trace_stop"() : () -> ()
    %86 = vector.shape_cast %4 : vector<8x8xf32> to vector<1x8x8xf32>
    %87 = vector.broadcast %86 : vector<1x8x8xf32> to vector<16x8x8xf32>
    %88 = arith.addf %85, %87 : vector<16x8x8xf32>
    %cst_46 = arith.constant dense<0xFF800000> : vector<16x8xf32>
    %89 = vector.multi_reduction <maximumf>, %88, %cst_46 [2] : vector<16x8x8xf32> to vector<16x8xf32>
    %90 = vector.shape_cast %89 : vector<16x8xf32> to vector<16x8x1xf32>
    %91 = vector.broadcast %90 : vector<16x8x1xf32> to vector<16x8x8xf32>
    %92 = arith.subf %88, %91 : vector<16x8x8xf32>
    %93 = math.exp %92 : vector<16x8x8xf32>
    %cst_47 = arith.constant dense<0.000000e+00> : vector<16x8xf32>
    %94 = vector.multi_reduction <add>, %93, %cst_47 [2] : vector<16x8x8xf32> to vector<16x8xf32>
    %95 = vector.shape_cast %94 : vector<16x8xf32> to vector<16x8x1xf32>
    %96 = vector.broadcast %95 : vector<16x8x1xf32> to vector<16x8x8xf32>
    %97 = arith.divf %93, %96 : vector<16x8x8xf32>
    %98 = arith.truncf %97 : vector<16x8x8xf32> to vector<16x8x8xbf16>
    "tpu.trace_start"() <{level = 10 : i32, message = "nqk,nkd->nqd"}> : () -> ()
    %cst_48 = arith.constant dense<0.000000e+00> : vector<16x8x32xf32>
    %99 = tpu.matmul %98, %84, %cst_48 {dimension_numbers = #tpu.dot_dimension_numbers<[2], [1], [1], [2], [0, 0, 0, 1, 1, 2], [0], [0]>} : vector<16x8x8xbf16>, vector<16x8x32xbf16>, vector<16x8x32xf32> -> vector<16x8x32xf32>
    "tpu.trace_stop"() : () -> ()
    %100 = vector.extract_strided_slice %99 {offsets = [0, 0, 0], sizes = [4, 8, 32], strides = [1, 1, 1]} : vector<16x8x32xf32> to vector<4x8x32xf32>
    %101 = vector.shape_cast %100 : vector<4x8x32xf32> to vector<32x32xf32>
    %102 = vector.extract_strided_slice %99 {offsets = [4, 0, 0], sizes = [4, 8, 32], strides = [1, 1, 1]} : vector<16x8x32xf32> to vector<4x8x32xf32>
    %103 = vector.shape_cast %102 : vector<4x8x32xf32> to vector<32x32xf32>
    %104 = vector.extract_strided_slice %99 {offsets = [8, 0, 0], sizes = [4, 8, 32], strides = [1, 1, 1]} : vector<16x8x32xf32> to vector<4x8x32xf32>
    %105 = vector.shape_cast %104 : vector<4x8x32xf32> to vector<32x32xf32>
    %106 = vector.extract_strided_slice %99 {offsets = [12, 0, 0], sizes = [4, 8, 32], strides = [1, 1, 1]} : vector<16x8x32xf32> to vector<4x8x32xf32>
    %107 = vector.shape_cast %106 : vector<4x8x32xf32> to vector<32x32xf32>
    %108 = tpu.concatenate %101, %103, %105, %107 in 1 : vector<32x32xf32>, vector<32x32xf32>, vector<32x32xf32>, vector<32x32xf32> -> vector<32x128xf32>
    %109 = arith.truncf %108 : vector<32x128xf32> to vector<32x128xbf16>
    %cst_49 = arith.constant dense<0.000000e+00> : vector<32x128xf32>
    %110 = tpu.matmul %109, %10, %cst_49 {dimension_numbers = #tpu.dot_dimension_numbers<[1], [0], [0], [1], [0, 0, 1, 1], [], []>} : vector<32x128xbf16>, vector<128x128xbf16>, vector<32x128xf32> -> vector<32x128xf32>
    %111 = arith.addf %3, %110 : vector<32x128xf32>
    %112 = vector.broadcast %12 : vector<1x128xf32> to vector<32x128xf32>
    %113 = arith.addf %111, %112 : vector<32x128xf32>
    %cst_50 = arith.constant dense<0.000000e+00> : vector<32xf32>
    %114 = vector.multi_reduction <add>, %113, %cst_50 [1] : vector<32x128xf32> to vector<32xf32>
    %115 = vector.shape_cast %114 : vector<32xf32> to vector<32x1xf32>
    %cst_51 = arith.constant 1.280000e+02 : f32
    %116 = vector.broadcast %cst_51 : f32 to vector<32x1xf32>
    %117 = arith.divf %115, %116 : vector<32x1xf32>
    %118 = arith.mulf %113, %113 : vector<32x128xf32>
    %cst_52 = arith.constant dense<0.000000e+00> : vector<32xf32>
    %119 = vector.multi_reduction <add>, %118, %cst_52 [1] : vector<32x128xf32> to vector<32xf32>
    %120 = vector.shape_cast %119 : vector<32xf32> to vector<32x1xf32>
    %cst_53 = arith.constant 1.280000e+02 : f32
    %121 = vector.broadcast %cst_53 : f32 to vector<32x1xf32>
    %122 = arith.divf %120, %121 : vector<32x1xf32>
    %123 = arith.mulf %117, %117 : vector<32x1xf32>
    %124 = arith.subf %122, %123 : vector<32x1xf32>
    %125 = vector.broadcast %117 : vector<32x1xf32> to vector<32x128xf32>
    %126 = arith.subf %113, %125 : vector<32x128xf32>
    %cst_54 = arith.constant 9.99999974E-6 : f32
    %127 = vector.broadcast %cst_54 : f32 to vector<32x1xf32>
    %128 = arith.addf %124, %127 : vector<32x1xf32>
    %129 = math.rsqrt %128 : vector<32x1xf32>
    %130 = vector.broadcast %129 : vector<32x1xf32> to vector<32x128xf32>
    %131 = arith.mulf %126, %130 : vector<32x128xf32>
    %132 = vector.broadcast %18 : vector<1x128xf32> to vector<32x128xf32>
    %133 = arith.mulf %131, %132 : vector<32x128xf32>
    %134 = vector.broadcast %20 : vector<1x128xf32> to vector<32x128xf32>
    %135 = arith.addf %133, %134 : vector<32x128xf32>
    %136 = arith.truncf %135 : vector<32x128xf32> to vector<32x128xbf16>
    %cst_55 = arith.constant dense<0.000000e+00> : vector<32x512xf32>
    %137 = tpu.matmul %136, %22, %cst_55 {dimension_numbers = #tpu.dot_dimension_numbers<[1], [0], [0], [1], [0, 0, 1, 1], [], []>} : vector<32x128xbf16>, vector<128x512xbf16>, vector<32x512xf32> -> vector<32x512xf32>
    %138 = vector.broadcast %24 : vector<1x512xf32> to vector<32x512xf32>
    %139 = arith.addf %137, %138 : vector<32x512xf32>
    %140 = arith.mulf %139, %139 : vector<32x512xf32>
    %141 = arith.mulf %139, %140 : vector<32x512xf32>
    %cst_56 = arith.constant 4.471500e-02 : f32
    %142 = vector.broadcast %cst_56 : f32 to vector<32x512xf32>
    %143 = arith.mulf %142, %141 : vector<32x512xf32>
    %144 = arith.addf %139, %143 : vector<32x512xf32>
    %cst_57 = arith.constant 0.797884583 : f32
    %145 = vector.broadcast %cst_57 : f32 to vector<32x512xf32>
    %146 = arith.mulf %145, %144 : vector<32x512xf32>
    %147 = math.tanh %146 : vector<32x512xf32>
    %cst_58 = arith.constant 1.000000e+00 : f32
    %148 = vector.broadcast %cst_58 : f32 to vector<32x512xf32>
    %149 = arith.addf %148, %147 : vector<32x512xf32>
    %cst_59 = arith.constant 5.000000e-01 : f32
    %150 = vector.broadcast %cst_59 : f32 to vector<32x512xf32>
    %151 = arith.mulf %150, %149 : vector<32x512xf32>
    %152 = arith.mulf %139, %151 : vector<32x512xf32>
    %153 = arith.truncf %152 : vector<32x512xf32> to vector<32x512xbf16>
    %cst_60 = arith.constant dense<0.000000e+00> : vector<32x128xf32>
    %154 = tpu.matmul %153, %26, %cst_60 {dimension_numbers = #tpu.dot_dimension_numbers<[1], [0], [0], [1], [0, 0, 1, 1], [], []>} : vector<32x512xbf16>, vector<512x128xbf16>, vector<32x128xf32> -> vector<32x128xf32>
    %155 = arith.addf %113, %154 : vector<32x128xf32>
    %156 = vector.broadcast %28 : vector<1x128xf32> to vector<32x128xf32>
    %157 = arith.addf %155, %156 : vector<32x128xf32>
    %c0_61 = arith.constant 0 : index
    %c0_62 = arith.constant 0 : index
    %158 = vector.load %arg21[%c0_61, %c0_62] : memref<32x128xf32, #tpu.memory_space<vmem>>, vector<32x128xf32>
    tpu.vector_store %arg21[%c0_61, %c0_62], %157 {strides = array<i32>} : memref<32x128xf32, #tpu.memory_space<vmem>>, vector<32x128xf32>,
    %c1_i32 = arith.constant 1 : i32
    %159 = arith.cmpi eq, %arg0, %c1_i32 : i32
    %160 = arith.extui %159 : i1 to i32
    %c0_i32_63 = arith.constant 0 : i32
    %161 = arith.cmpi ne, %160, %c0_i32_63 : i32
    scf.if %161 {
      %c0_64 = arith.constant 0 : index
      %c0_65 = arith.constant 0 : index
      %162 = vector.load %arg15[%c0_64, %c0_65] : memref<1x128xf32, #tpu.memory_space<vmem>>, vector<1x128xf32>
      %c0_66 = arith.constant 0 : index
      %c0_67 = arith.constant 0 : index
      %163 = vector.load %arg16[%c0_66, %c0_67] : memref<1x128xf32, #tpu.memory_space<vmem>>, vector<1x128xf32>
      %cst_68 = arith.constant dense<0.000000e+00> : vector<32xf32>
      %164 = vector.multi_reduction <add>, %157, %cst_68 [1] : vector<32x128xf32> to vector<32xf32>
      %165 = vector.shape_cast %164 : vector<32xf32> to vector<32x1xf32>
      %cst_69 = arith.constant 1.280000e+02 : f32
      %166 = vector.broadcast %cst_69 : f32 to vector<32x1xf32>
      %167 = arith.divf %165, %166 : vector<32x1xf32>
      %168 = arith.mulf %157, %157 : vector<32x128xf32>
      %cst_70 = arith.constant dense<0.000000e+00> : vector<32xf32>
      %169 = vector.multi_reduction <add>, %168, %cst_70 [1] : vector<32x128xf32> to vector<32xf32>
      %170 = vector.shape_cast %169 : vector<32xf32> to vector<32x1xf32>
      %cst_71 = arith.constant 1.280000e+02 : f32
      %171 = vector.broadcast %cst_71 : f32 to vector<32x1xf32>
      %172 = arith.divf %170, %171 : vector<32x1xf32>
      %173 = arith.mulf %167, %167 : vector<32x1xf32>
      %174 = arith.subf %172, %173 : vector<32x1xf32>
      %175 = vector.broadcast %167 : vector<32x1xf32> to vector<32x128xf32>
      %176 = arith.subf %157, %175 : vector<32x128xf32>
      %cst_72 = arith.constant 9.99999974E-6 : f32
      %177 = vector.broadcast %cst_72 : f32 to vector<32x1xf32>
      %178 = arith.addf %174, %177 : vector<32x1xf32>
      %179 = math.rsqrt %178 : vector<32x1xf32>
      %180 = vector.broadcast %179 : vector<32x1xf32> to vector<32x128xf32>
      %181 = arith.mulf %176, %180 : vector<32x128xf32>
      %182 = vector.broadcast %162 : vector<1x128xf32> to vector<32x128xf32>
      %183 = arith.mulf %181, %182 : vector<32x128xf32>
      %184 = vector.broadcast %163 : vector<1x128xf32> to vector<32x128xf32>
      %185 = arith.addf %183, %184 : vector<32x128xf32>
      %c0_73 = arith.constant 0 : index
      %c0_74 = arith.constant 0 : index
      %186 = vector.load %arg19[%c0_73, %c0_74] : memref<32x128xf32, #tpu.memory_space<vmem>>, vector<32x128xf32>
      tpu.vector_store %arg19[%c0_73, %c0_74], %185 {strides = array<i32>} : memref<32x128xf32, #tpu.memory_space<vmem>>, vector<32x128xf32>,
      %c0_75 = arith.constant 0 : index
      %c0_76 = arith.constant 0 : index
      %187 = vector.load %arg18[%c0_75, %c0_76] : memref<4x32xbf16, #tpu.memory_space<vmem>>, vector<4x32xbf16>
      %188 = arith.truncf %185 : vector<32x128xf32> to vector<32x128xbf16>
      %cst_77 = arith.constant dense<0.000000e+00> : vector<4x128xf32>
      %189 = tpu.matmul %187, %188, %cst_77 {dimension_numbers = #tpu.dot_dimension_numbers<[1], [0], [0], [1], [0, 0, 1, 1], [], []>} : vector<4x32xbf16>, vector<32x128xbf16>, vector<4x128xf32> -> vector<4x128xf32>
      %c0_78 = arith.constant 0 : index
      %c0_79 = arith.constant 0 : index
      %190 = vector.load %arg17[%c0_78, %c0_79] : memref<128x128xbf16, #tpu.memory_space<vmem>>, vector<128x128xbf16>
      %191 = arith.truncf %189 : vector<4x128xf32> to vector<4x128xbf16>
      %cst_80 = arith.constant dense<0.000000e+00> : vector<4x128xf32>
      %192 = tpu.matmul %191, %190, %cst_80 {dimension_numbers = #tpu.dot_dimension_numbers<[1], [0], [0], [1], [0, 0, 1, 1], [], []>} : vector<4x128xbf16>, vector<128x128xbf16>, vector<4x128xf32> -> vector<4x128xf32>
      %193 = arith.mulf %192, %192 : vector<4x128xf32>
      %cst_81 = arith.constant dense<0.000000e+00> : vector<4xf32>
      %194 = vector.multi_reduction <add>, %193, %cst_81 [1] : vector<4x128xf32> to vector<4xf32>
      %195 = vector.shape_cast %194 : vector<4xf32> to vector<4x1xf32>
      %cst_82 = arith.constant 9.99999996E-13 : f32
      %196 = vector.broadcast %cst_82 : f32 to vector<4x1xf32>
      %197 = arith.addf %195, %196 : vector<4x1xf32>
      %198 = math.rsqrt %197 : vector<4x1xf32>
      %199 = vector.broadcast %198 : vector<4x1xf32> to vector<4x128xf32>
      %200 = arith.mulf %192, %199 : vector<4x128xf32>
      %c0_83 = arith.constant 0 : index
      %c0_84 = arith.constant 0 : index
      %201 = vector.load %arg20[%c0_83, %c0_84] : memref<4x128xf32, #tpu.memory_space<vmem>>, vector<4x128xf32>
      tpu.vector_store %arg20[%c0_83, %c0_84], %200 {strides = array<i32>} : memref<4x128xf32, #tpu.memory_space<vmem>>, vector<4x128xf32>,
    } else {
    }
    return
  }
  func.func @transform_0(%arg0: i32) -> (i32, i32) {
    %c0_i32 = arith.constant 0 : i32
    %c0_i32_0 = arith.constant 0 : i32
    %c0_i32_1 = arith.constant 0 : i32
    return %c0_i32, %c0_i32_0 : i32, i32
  }
  func.func @transform_1(%arg0: i32) -> (i32, i32) {
    %c0_i32 = arith.constant 0 : i32
    %c0_i32_0 = arith.constant 0 : i32
    %c0_i32_1 = arith.constant 0 : i32
    return %c0_i32, %c0_i32_0 : i32, i32
  }
  func.func @transform_2(%arg0: i32) -> (i32, i32, i32) {
    %c0_i32 = arith.constant 0 : i32
    %c0_i32_0 = arith.constant 0 : i32
    %c0_i32_1 = arith.constant 0 : i32
    return %arg0, %c0_i32, %c0_i32_0 : i32, i32, i32
  }
  func.func @transform_3(%arg0: i32) -> (i32, i32, i32) {
    %c0_i32 = arith.constant 0 : i32
    %c0_i32_0 = arith.constant 0 : i32
    %c0_i32_1 = arith.constant 0 : i32
    return %arg0, %c0_i32, %c0_i32_0 : i32, i32, i32
  }
  func.func @transform_4(%arg0: i32) -> (i32, i32, i32) {
    %c0_i32 = arith.constant 0 : i32
    %c0_i32_0 = arith.constant 0 : i32
    %c0_i32_1 = arith.constant 0 : i32
    return %arg0, %c0_i32, %c0_i32_0 : i32, i32, i32
  }
  func.func @transform_5(%arg0: i32) -> (i32, i32, i32) {
    %c0_i32 = arith.constant 0 : i32
    %c0_i32_0 = arith.constant 0 : i32
    %c0_i32_1 = arith.constant 0 : i32
    return %arg0, %c0_i32, %c0_i32_0 : i32, i32, i32
  }
  func.func @transform_6(%arg0: i32) -> (i32, i32, i32) {
    %c0_i32 = arith.constant 0 : i32
    %c0_i32_0 = arith.constant 0 : i32
    %c0_i32_1 = arith.constant 0 : i32
    return %arg0, %c0_i32, %c0_i32_0 : i32, i32, i32
  }
  func.func @transform_7(%arg0: i32) -> (i32, i32, i32) {
    %c0_i32 = arith.constant 0 : i32
    %c0_i32_0 = arith.constant 0 : i32
    %c0_i32_1 = arith.constant 0 : i32
    return %arg0, %c0_i32, %c0_i32_0 : i32, i32, i32
  }
  func.func @transform_8(%arg0: i32) -> (i32, i32, i32) {
    %c0_i32 = arith.constant 0 : i32
    %c0_i32_0 = arith.constant 0 : i32
    %c0_i32_1 = arith.constant 0 : i32
    return %arg0, %c0_i32, %c0_i32_0 : i32, i32, i32
  }
  func.func @transform_9(%arg0: i32) -> (i32, i32, i32) {
    %c0_i32 = arith.constant 0 : i32
    %c0_i32_0 = arith.constant 0 : i32
    %c0_i32_1 = arith.constant 0 : i32
    return %arg0, %c0_i32, %c0_i32_0 : i32, i32, i32
  }
  func.func @transform_10(%arg0: i32) -> (i32, i32, i32) {
    %c0_i32 = arith.constant 0 : i32
    %c0_i32_0 = arith.constant 0 : i32
    %c0_i32_1 = arith.constant 0 : i32
    return %arg0, %c0_i32, %c0_i32_0 : i32, i32, i32
  }
  func.func @transform_11(%arg0: i32) -> (i32, i32, i32) {
    %c0_i32 = arith.constant 0 : i32
    %c0_i32_0 = arith.constant 0 : i32
    %c0_i32_1 = arith.constant 0 : i32
    return %arg0, %c0_i32, %c0_i32_0 : i32, i32, i32
  }
  func.func @transform_12(%arg0: i32) -> (i32, i32, i32) {
    %c0_i32 = arith.constant 0 : i32
    %c0_i32_0 = arith.constant 0 : i32
    %c0_i32_1 = arith.constant 0 : i32
    return %arg0, %c0_i32, %c0_i32_0 : i32, i32, i32
  }
  func.func @transform_13(%arg0: i32) -> (i32, i32, i32) {
    %c0_i32 = arith.constant 0 : i32
    %c0_i32_0 = arith.constant 0 : i32
    %c0_i32_1 = arith.constant 0 : i32
    return %arg0, %c0_i32, %c0_i32_0 : i32, i32, i32
  }
  func.func @transform_14(%arg0: i32) -> (i32, i32) {
    %c0_i32 = arith.constant 0 : i32
    %c0_i32_0 = arith.constant 0 : i32
    %c0_i32_1 = arith.constant 0 : i32
    return %c0_i32, %c0_i32_0 : i32, i32
  }
  func.func @transform_15(%arg0: i32) -> (i32, i32) {
    %c0_i32 = arith.constant 0 : i32
    %c0_i32_0 = arith.constant 0 : i32
    %c0_i32_1 = arith.constant 0 : i32
    return %c0_i32, %c0_i32_0 : i32, i32
  }
  func.func @transform_16(%arg0: i32) -> (i32, i32) {
    %c0_i32 = arith.constant 0 : i32
    %c0_i32_0 = arith.constant 0 : i32
    %c0_i32_1 = arith.constant 0 : i32
    return %c0_i32, %c0_i32_0 : i32, i32
  }
  func.func @transform_17(%arg0: i32) -> (i32, i32) {
    %c0_i32 = arith.constant 0 : i32
    %c0_i32_0 = arith.constant 0 : i32
    %c0_i32_1 = arith.constant 0 : i32
    return %c0_i32, %c0_i32_0 : i32, i32
  }
  func.func @transform_18(%arg0: i32) -> (i32, i32) {
    %c0_i32 = arith.constant 0 : i32
    %c0_i32_0 = arith.constant 0 : i32
    %c0_i32_1 = arith.constant 0 : i32
    return %c0_i32, %c0_i32_0 : i32, i32
  }
  func.func @transform_19(%arg0: i32) -> (i32, i32) {
    %c0_i32 = arith.constant 0 : i32
    %c0_i32_0 = arith.constant 0 : i32
    %c0_i32_1 = arith.constant 0 : i32
    return %c0_i32, %c0_i32_0 : i32, i32
  }
}

</mosaic_0001>

<llo_original>
// kernel: tpu_custom_call.1
$region0: #{tpu_custom_call.1}
  #allocation0 [shape = 'u32[]', space=smem, size = 0x4, offset = 0x4, fixed_abs, tag = 'smem constant byte address 0x4 - core index']
  #allocation1 [shape = 'u32[144,128]{1,0:T(1,128)}', space=vmem, size = 0x12000, scoped, tag = 'internal scratch']
  #allocation2 [shape = 'f32[32,128]{1,0:T(8,128)}', space=vmem, size = 0x4000, scoped, tag = 'scratch operand']
  %s0 = inlined_call_operand.hbm [shape: f32[32,128], index: 0, kind: input, shape index: {}]
  %s1 = inlined_call_operand.hbm [shape: f32[8,8], index: 1, kind: input, shape index: {}]
  %s2 = inlined_call_operand.hbm [shape: bf16[2,128,384], index: 2, kind: input, shape index: {}]
  %s3 = inlined_call_operand.vmem [shape: f32[2,1,384], index: 3, kind: input, shape index: {}]
  %s4 = inlined_call_operand.hbm [shape: bf16[2,128,128], index: 4, kind: input, shape index: {}]
  %s5 = inlined_call_operand.vmem [shape: f32[2,1,128], index: 5, kind: input, shape index: {}]
  %s6 = inlined_call_operand.vmem [shape: f32[2,1,128], index: 6, kind: input, shape index: {}]
  %s7 = inlined_call_operand.vmem [shape: f32[2,1,128], index: 7, kind: input, shape index: {}]
  %s8 = inlined_call_operand.vmem [shape: f32[2,1,128], index: 8, kind: input, shape index: {}]
  %s9 = inlined_call_operand.vmem [shape: f32[2,1,128], index: 9, kind: input, shape index: {}]
  %s10 = inlined_call_operand.hbm [shape: bf16[2,128,512], index: 10, kind: input, shape index: {}]
  %s11 = inlined_call_operand.vmem [shape: f32[2,1,512], index: 11, kind: input, shape index: {}]
  %s12 = inlined_call_operand.hbm [shape: bf16[2,512,128], index: 12, kind: input, shape index: {}]
  %s13 = inlined_call_operand.vmem [shape: f32[2,1,128], index: 13, kind: input, shape index: {}]
  %s14 = inlined_call_operand.vmem [shape: f32[1,128], index: 14, kind: input, shape index: {}]
  %s15 = inlined_call_operand.vmem [shape: f32[1,128], index: 15, kind: input, shape index: {}]
  %s16 = inlined_call_operand.hbm [shape: bf16[128,128], index: 16, kind: input, shape index: {}]
  %s17 = inlined_call_operand.vmem [shape: bf16[4,32], index: 17, kind: input, shape index: {}]
  %s18 = inlined_call_operand.hbm [shape: f32[32,128], index: 18, kind: output, shape index: {0}]
  %s19 = inlined_call_operand.hbm [shape: f32[4,128], index: 19, kind: output, shape index: {1}]
  %20 = xla_tuple %s18, %s19
  %s21 = sld [smem:[#allocation0]]
  $region149: #{tpu_custom_call.1} parent=0
    _
  %s23 = ssub.s32 1, %s21
  %s24 = scalar_select 0, %s23, %s21
  $region1: #{tpu_custom_call.1} parent=0
    #allocation3 [shape = 'u8[16384]{0}', space=vmem, size = 0x4000, scoped, tag = 'input window, operand 0, single buffered']
    #allocation4 [shape = 's32[2]{0}', space=sflag, size = 0x8, scoped, tag = 'scoped memory for tpu_custom_call.1']
    #allocation5 [shape = 's32[2]{0}', space=sflag, size = 0x8, scoped, tag = 'scoped memory for tpu_custom_call.1']
    #allocation6 [shape = 'u8[4096]{0}', space=vmem, size = 0x1000, scoped, tag = 'input window, operand 1, single buffered']
    #allocation7 [shape = 's32[1]{0}', space=sflag, size = 0x4, scoped, tag = 'scoped memory for tpu_custom_call.1']
    #allocation8 [shape = 'u8[196608]{0}', space=vmem, size = 0x30000, scoped, tag = 'input window, operand 2']
    #allocation9 [shape = 'u8[65536]{0}', space=vmem, size = 0x10000, scoped, tag = 'input window, operand 4']
    #allocation10 [shape = 'u8[262144]{0}', space=vmem, size = 0x40000, scoped, tag = 'input window, operand 10']
    #allocation11 [shape = 'u8[262144]{0}', space=vmem, size = 0x40000, scoped, tag = 'input window, operand 12']
    #allocation12 [shape = 'u8[32768]{0}', space=vmem, size = 0x8000, scoped, tag = 'input window, operand 16, single buffered']
    #allocation13 [shape = 'u8[16384]{0}', space=vmem, size = 0x4000, scoped, tag = 'output window, operand 0, single buffered']
    #allocation14 [shape = 'u8[2048]{0}', space=vmem, size = 0x800, scoped, tag = 'output window, operand 1, single buffered']
    #allocation15 [shape = 's32[1]{0}', space=sflag, size = 0x4, scoped, tag = 'scoped memory for tpu_custom_call.1']
    %25 = vsyncpa [#allocation4], 0
    %26 = vsyncpa [#allocation7], 0
    %27 = vsyncpa [#allocation5], 0
    %28 = vsyncpa [#allocation15], 0
    loop: start=0, step=1, limit=4
    $region2: #{tpu_custom_call.1} parent=1 // loop_pre_header
      _
    $region3: #{tpu_custom_call.1} parent=1 // loop_header
      %s30 = sphi 0, %s34
      %p31 = scmp.ge.s32.totalorder %s30, 4
      %s38 = sphi 0, %s38
      %s40 = sphi 0, %s38
      %s41 = sphi 0, %s40
      %s55 = sphi 0, %s41
      %s59 = sphi 0, %s59
      %s61 = sphi 0, %s59
      %s62 = sphi 0, %s61
      %s76 = sphi 0, %s62
      %s82 = sphi 0, %s84
      %s85 = sphi 0, %s82
      %s86 = sphi 0, %s85
      %s102 = sphi 0, %s86
      %s108 = sphi 0, %s110
      %s111 = sphi 0, %s108
      %s112 = sphi 0, %s111
      %s128 = sphi 0, %s112
      %s134 = sphi 0, %s136
      %s137 = sphi 0, %s134
      %s138 = sphi 0, %s137
      %s154 = sphi 0, %s138
      %s160 = sphi 0, %s162
      %s163 = sphi 0, %s160
      %s164 = sphi 0, %s163
      %s180 = sphi 0, %s164
      %s186 = sphi 0, %s188
      %s189 = sphi 0, %s186
      %s190 = sphi 0, %s189
      %s206 = sphi 0, %s190
      %s212 = sphi 0, %s214
      %s215 = sphi 0, %s212
      %s216 = sphi 0, %s215
      %s232 = sphi 0, %s216
      %s238 = sphi 0, %s240
      %s241 = sphi 0, %s238
      %s242 = sphi 0, %s241
      %s258 = sphi 0, %s242
      %s264 = sphi 0, %s266
      %s267 = sphi 0, %s264
      %s268 = sphi 0, %s267
      %s284 = sphi 0, %s268
      %s290 = sphi 0, %s292
      %s293 = sphi 0, %s290
      %s294 = sphi 0, %s293
      %s310 = sphi 0, %s294
      %s316 = sphi 0, %s318
      %s319 = sphi 0, %s316
      %s320 = sphi 0, %s319
      %s336 = sphi 0, %s320
      %s342 = sphi 0, %s344
      %s345 = sphi 0, %s342
      %s346 = sphi 0, %s345
      %s362 = sphi 0, %s346
      %s368 = sphi 0, %s370
      %s371 = sphi 0, %s368
      %s372 = sphi 0, %s371
      %s388 = sphi 0, %s372
      %s392 = sphi 0, %s392
      %s394 = sphi 0, %s392
      %s395 = sphi 0, %s394
      %s409 = sphi 0, %s395
      %s413 = sphi 0, %s413
      %s415 = sphi 0, %s413
      %s416 = sphi 0, %s415
      %s430 = sphi 0, %s416
      %s434 = sphi 0, %s434
      %s436 = sphi 0, %s434
      %s437 = sphi 0, %s436
      %s451 = sphi 0, %s437
      %s455 = sphi 0, %s455
      %s457 = sphi 0, %s455
      %s458 = sphi 0, %s457
      %s472 = sphi 0, %s458
      %s476 = sphi 0, %s476
      %s478 = sphi 0, %s476
      %s479 = sphi 0, %s478
      %s493 = sphi 0, %s479
      %s497 = sphi 0, %s497
      %s499 = sphi 0, %s497
      %s500 = sphi 0, %s499
      %s514 = sphi 0, %s500
    $region4: #{tpu_custom_call.1} parent=1 // loop_header_branch
      %33 = sbr.rel (%p31) target = $region8
    $region5: #{tpu_custom_call.1} parent=1 // loop_body
      %s35 = ssub.s32 %s30, 1
      %s36 = ssub.s32 %s30, 2
      %s37 = sadd.s32 %s30, 1
      %s39 = sadd.s32 %s38, 1
      %p42 = scmp.eq.s32.totalorder %s30, 1
      %p43 = scmp.ne.s32.totalorder %s38, %s40
      %p44 = scmp.eq.s32.totalorder %s30, 0
      %p45 = por %p43, %p44
      %p46 = scmp.ne.s32.totalorder %s38, %s40
      %p47 = scmp.eq.s32.totalorder %s35, 1
      %p48 = por %p46, %p47
      %p49 = scmp.ne.s32.totalorder %s40, %s41
      %p50 = scmp.eq.s32.totalorder %s35, 0
      %p51 = por %p49, %p50
      %p52 = scmp.ne.s32.totalorder %s40, %s41
      %p53 = scmp.eq.s32.totalorder %s36, 1
      %p54 = por %p52, %p53
      %p56 = scmp.ne.s32.totalorder %s41, %s55
      %p57 = scmp.eq.s32.totalorder %s36, 0
      %p58 = por %p56, %p57
      %s60 = sadd.s32 %s59, 1
      %p63 = scmp.eq.s32.totalorder %s30, 1
      %p64 = scmp.ne.s32.totalorder %s59, %s61
      %p65 = scmp.eq.s32.totalorder %s30, 0
      %p66 = por %p64, %p65
      %p67 = scmp.ne.s32.totalorder %s59, %s61
      %p68 = scmp.eq.s32.totalorder %s35, 1
      %p69 = por %p67, %p68
      %p70 = scmp.ne.s32.totalorder %s61, %s62
      %p71 = scmp.eq.s32.totalorder %s35, 0
      %p72 = por %p70, %p71
      %p73 = scmp.ne.s32.totalorder %s61, %s62
      %p74 = scmp.eq.s32.totalorder %s36, 1
      %p75 = por %p73, %p74
      %p77 = scmp.ne.s32.totalorder %s62, %s76
      %p78 = scmp.eq.s32.totalorder %s36, 0
      %p79 = por %p77, %p78
      %s80 = ssub.s32 %s30, %s37
      %p81 = scmp.eq.s32.totalorder %s80, 0
      %s83 = sadd.s32 %s82, 1
      %s84 = scalar_select %p81, %s82, %s83
      %p87 = pneg %p81
      %p88 = scmp.eq.s32.totalorder %s30, 1
      %p89 = por %p87, %p88
      %p90 = scmp.ne.s32.totalorder %s82, %s85
      %p91 = scmp.eq.s32.totalorder %s30, 0
      %p92 = por %p90, %p91
      %p93 = scmp.ne.s32.totalorder %s82, %s85
      %p94 = scmp.eq.s32.totalorder %s35, 1
      %p95 = por %p93, %p94
      %p96 = scmp.ne.s32.totalorder %s85, %s86
      %p97 = scmp.eq.s32.totalorder %s35, 0
      %p98 = por %p96, %p97
      %p99 = scmp.ne.s32.totalorder %s85, %s86
      %p100 = scmp.eq.s32.totalorder %s36, 1
      %p101 = por %p99, %p100
      %p103 = scmp.ne.s32.totalorder %s86, %s102
      %p104 = scmp.eq.s32.totalorder %s36, 0
      %p105 = por %p103, %p104
      %s106 = ssub.s32 %s30, %s37
      %p107 = scmp.eq.s32.totalorder %s106, 0
      %s109 = sadd.s32 %s108, 1
      %s110 = scalar_select %p107, %s108, %s109
      %p113 = pneg %p107
      %p114 = scmp.eq.s32.totalorder %s30, 1
      %p115 = por %p113, %p114
      %p116 = scmp.ne.s32.totalorder %s108, %s111
      %p117 = scmp.eq.s32.totalorder %s30, 0
      %p118 = por %p116, %p117
      %p119 = scmp.ne.s32.totalorder %s108, %s111
      %p120 = scmp.eq.s32.totalorder %s35, 1
      %p121 = por %p119, %p120
      %p122 = scmp.ne.s32.totalorder %s111, %s112
      %p123 = scmp.eq.s32.totalorder %s35, 0
      %p124 = por %p122, %p123
      %p125 = scmp.ne.s32.totalorder %s111, %s112
      %p126 = scmp.eq.s32.totalorder %s36, 1
      %p127 = por %p125, %p126
      %p129 = scmp.ne.s32.totalorder %s112, %s128
      %p130 = scmp.eq.s32.totalorder %s36, 0
      %p131 = por %p129, %p130
      %s132 = ssub.s32 %s30, %s37
      %p133 = scmp.eq.s32.totalorder %s132, 0
      %s135 = sadd.s32 %s134, 1
      %s136 = scalar_select %p133, %s134, %s135
      %p139 = pneg %p133
      %p140 = scmp.eq.s32.totalorder %s30, 1
      %p141 = por %p139, %p140
      %p142 = scmp.ne.s32.totalorder %s134, %s137
      %p143 = scmp.eq.s32.totalorder %s30, 0
      %p144 = por %p142, %p143
      %p145 = scmp.ne.s32.totalorder %s134, %s137
      %p146 = scmp.eq.s32.totalorder %s35, 1
      %p147 = por %p145, %p146
      %p148 = scmp.ne.s32.totalorder %s137, %s138
      %p149 = scmp.eq.s32.totalorder %s35, 0
      %p150 = por %p148, %p149
      %p151 = scmp.ne.s32.totalorder %s137, %s138
      %p152 = scmp.eq.s32.totalorder %s36, 1
      %p153 = por %p151, %p152
      %p155 = scmp.ne.s32.totalorder %s138, %s154
      %p156 = scmp.eq.s32.totalorder %s36, 0
      %p157 = por %p155, %p156
      %s158 = ssub.s32 %s30, %s37
      %p159 = scmp.eq.s32.totalorder %s158, 0
      %s161 = sadd.s32 %s160, 1
      %s162 = scalar_select %p159, %s160, %s161
      %p165 = pneg %p159
      %p166 = scmp.eq.s32.totalorder %s30, 1
      %p167 = por %p165, %p166
      %p168 = scmp.ne.s32.totalorder %s160, %s163
      %p169 = scmp.eq.s32.totalorder %s30, 0
      %p170 = por %p168, %p169
      %p171 = scmp.ne.s32.totalorder %s160, %s163
      %p172 = scmp.eq.s32.totalorder %s35, 1
      %p173 = por %p171, %p172
      %p174 = scmp.ne.s32.totalorder %s163, %s164
      %p175 = scmp.eq.s32.totalorder %s35, 0
      %p176 = por %p174, %p175
      %p177 = scmp.ne.s32.totalorder %s163, %s164
      %p178 = scmp.eq.s32.totalorder %s36, 1
      %p179 = por %p177, %p178
      %p181 = scmp.ne.s32.totalorder %s164, %s180
      %p182 = scmp.eq.s32.totalorder %s36, 0
      %p183 = por %p181, %p182
      %s184 = ssub.s32 %s30, %s37
      %p185 = scmp.eq.s32.totalorder %s184, 0
      %s187 = sadd.s32 %s186, 1
      %s188 = scalar_select %p185, %s186, %s187
      %p191 = pneg %p185
      %p192 = scmp.eq.s32.totalorder %s30, 1
      %p193 = por %p191, %p192
      %p194 = scmp.ne.s32.totalorder %s186, %s189
      %p195 = scmp.eq.s32.totalorder %s30, 0
      %p196 = por %p194, %p195
      %p197 = scmp.ne.s32.totalorder %s186, %s189
      %p198 = scmp.eq.s32.totalorder %s35, 1
      %p199 = por %p197, %p198
      %p200 = scmp.ne.s32.totalorder %s189, %s190
      %p201 = scmp.eq.s32.totalorder %s35, 0
      %p202 = por %p200, %p201
      %p203 = scmp.ne.s32.totalorder %s189, %s190
      %p204 = scmp.eq.s32.totalorder %s36, 1
      %p205 = por %p203, %p204
      %p207 = scmp.ne.s32.totalorder %s190, %s206
      %p208 = scmp.eq.s32.totalorder %s36, 0
      %p209 = por %p207, %p208
      %s210 = ssub.s32 %s30, %s37
      %p211 = scmp.eq.s32.totalorder %s210, 0
      %s213 = sadd.s32 %s212, 1
      %s214 = scalar_select %p211, %s212, %s213
      %p217 = pneg %p211
      %p218 = scmp.eq.s32.totalorder %s30, 1
      %p219 = por %p217, %p218
      %p220 = scmp.ne.s32.totalorder %s212, %s215
      %p221 = scmp.eq.s32.totalorder %s30, 0
      %p222 = por %p220, %p221
      %p223 = scmp.ne.s32.totalorder %s212, %s215
      %p224 = scmp.eq.s32.totalorder %s35, 1
      %p225 = por %p223, %p224
      %p226 = scmp.ne.s32.totalorder %s215, %s216
      %p227 = scmp.eq.s32.totalorder %s35, 0
      %p228 = por %p226, %p227
      %p229 = scmp.ne.s32.totalorder %s215, %s216
      %p230 = scmp.eq.s32.totalorder %s36, 1
      %p231 = por %p229, %p230
      %p233 = scmp.ne.s32.totalorder %s216, %s232
      %p234 = scmp.eq.s32.totalorder %s36, 0
      %p235 = por %p233, %p234
      %s236 = ssub.s32 %s30, %s37
      %p237 = scmp.eq.s32.totalorder %s236, 0
      %s239 = sadd.s32 %s238, 1
      %s240 = scalar_select %p237, %s238, %s239
      %p243 = pneg %p237
      %p244 = scmp.eq.s32.totalorder %s30, 1
      %p245 = por %p243, %p244
      %p246 = scmp.ne.s32.totalorder %s238, %s241
      %p247 = scmp.eq.s32.totalorder %s30, 0
      %p248 = por %p246, %p247
      %p249 = scmp.ne.s32.totalorder %s238, %s241
      %p250 = scmp.eq.s32.totalorder %s35, 1
      %p251 = por %p249, %p250
      %p252 = scmp.ne.s32.totalorder %s241, %s242
      %p253 = scmp.eq.s32.totalorder %s35, 0
      %p254 = por %p252, %p253
      %p255 = scmp.ne.s32.totalorder %s241, %s242
      %p256 = scmp.eq.s32.totalorder %s36, 1
      %p257 = por %p255, %p256
      %p259 = scmp.ne.s32.totalorder %s242, %s258
      %p260 = scmp.eq.s32.totalorder %s36, 0
      %p261 = por %p259, %p260
      %s262 = ssub.s32 %s30, %s37
      %p263 = scmp.eq.s32.totalorder %s262, 0
      %s265 = sadd.s32 %s264, 1
      %s266 = scalar_select %p263, %s264, %s265
      %p269 = pneg %p263
      %p270 = scmp.eq.s32.totalorder %s30, 1
      %p271 = por %p269, %p270
      %p272 = scmp.ne.s32.totalorder %s264, %s267
      %p273 = scmp.eq.s32.totalorder %s30, 0
      %p274 = por %p272, %p273
      %p275 = scmp.ne.s32.totalorder %s264, %s267
      %p276 = scmp.eq.s32.totalorder %s35, 1
      %p277 = por %p275, %p276
      %p278 = scmp.ne.s32.totalorder %s267, %s268
      %p279 = scmp.eq.s32.totalorder %s35, 0
      %p280 = por %p278, %p279
      %p281 = scmp.ne.s32.totalorder %s267, %s268
      %p282 = scmp.eq.s32.totalorder %s36, 1
      %p283 = por %p281, %p282
      %p285 = scmp.ne.s32.totalorder %s268, %s284
      %p286 = scmp.eq.s32.totalorder %s36, 0
      %p287 = por %p285, %p286
      %s288 = ssub.s32 %s30, %s37
      %p289 = scmp.eq.s32.totalorder %s288, 0
      %s291 = sadd.s32 %s290, 1
      %s292 = scalar_select %p289, %s290, %s291
      %p295 = pneg %p289
      %p296 = scmp.eq.s32.totalorder %s30, 1
      %p297 = por %p295, %p296
      %p298 = scmp.ne.s32.totalorder %s290, %s293
      %p299 = scmp.eq.s32.totalorder %s30, 0
      %p300 = por %p298, %p299
      %p301 = scmp.ne.s32.totalorder %s290, %s293
      %p302 = scmp.eq.s32.totalorder %s35, 1
      %p303 = por %p301, %p302
      %p304 = scmp.ne.s32.totalorder %s293, %s294
      %p305 = scmp.eq.s32.totalorder %s35, 0
      %p306 = por %p304, %p305
      %p307 = scmp.ne.s32.totalorder %s293, %s294
      %p308 = scmp.eq.s32.totalorder %s36, 1
      %p309 = por %p307, %p308
      %p311 = scmp.ne.s32.totalorder %s294, %s310
      %p312 = scmp.eq.s32.totalorder %s36, 0
      %p313 = por %p311, %p312
      %s314 = ssub.s32 %s30, %s37
      %p315 = scmp.eq.s32.totalorder %s314, 0
      %s317 = sadd.s32 %s316, 1
      %s318 = scalar_select %p315, %s316, %s317
      %p321 = pneg %p315
      %p322 = scmp.eq.s32.totalorder %s30, 1
      %p323 = por %p321, %p322
      %p324 = scmp.ne.s32.totalorder %s316, %s319
      %p325 = scmp.eq.s32.totalorder %s30, 0
      %p326 = por %p324, %p325
      %p327 = scmp.ne.s32.totalorder %s316, %s319
      %p328 = scmp.eq.s32.totalorder %s35, 1
      %p329 = por %p327, %p328
      %p330 = scmp.ne.s32.totalorder %s319, %s320
      %p331 = scmp.eq.s32.totalorder %s35, 0
      %p332 = por %p330, %p331
      %p333 = scmp.ne.s32.totalorder %s319, %s320
      %p334 = scmp.eq.s32.totalorder %s36, 1
      %p335 = por %p333, %p334
      %p337 = scmp.ne.s32.totalorder %s320, %s336
      %p338 = scmp.eq.s32.totalorder %s36, 0
      %p339 = por %p337, %p338
      %s340 = ssub.s32 %s30, %s37
      %p341 = scmp.eq.s32.totalorder %s340, 0
      %s343 = sadd.s32 %s342, 1
      %s344 = scalar_select %p341, %s342, %s343
      %p347 = pneg %p341
      %p348 = scmp.eq.s32.totalorder %s30, 1
      %p349 = por %p347, %p348
      %p350 = scmp.ne.s32.totalorder %s342, %s345
      %p351 = scmp.eq.s32.totalorder %s30, 0
      %p352 = por %p350, %p351
      %p353 = scmp.ne.s32.totalorder %s342, %s345
      %p354 = scmp.eq.s32.totalorder %s35, 1
      %p355 = por %p353, %p354
      %p356 = scmp.ne.s32.totalorder %s345, %s346
      %p357 = scmp.eq.s32.totalorder %s35, 0
      %p358 = por %p356, %p357
      %p359 = scmp.ne.s32.totalorder %s345, %s346
      %p360 = scmp.eq.s32.totalorder %s36, 1
      %p361 = por %p359, %p360
      %p363 = scmp.ne.s32.totalorder %s346, %s362
      %p364 = scmp.eq.s32.totalorder %s36, 0
      %p365 = por %p363, %p364
      %s366 = ssub.s32 %s30, %s37
      %p367 = scmp.eq.s32.totalorder %s366, 0
      %s369 = sadd.s32 %s368, 1
      %s370 = scalar_select %p367, %s368, %s369
      %p373 = pneg %p367
      %p374 = scmp.eq.s32.totalorder %s30, 1
      %p375 = por %p373, %p374
      %p376 = scmp.ne.s32.totalorder %s368, %s371
      %p377 = scmp.eq.s32.totalorder %s30, 0
      %p378 = por %p376, %p377
      %p379 = scmp.ne.s32.totalorder %s368, %s371
      %p380 = scmp.eq.s32.totalorder %s35, 1
      %p381 = por %p379, %p380
      %p382 = scmp.ne.s32.totalorder %s371, %s372
      %p383 = scmp.eq.s32.totalorder %s35, 0
      %p384 = por %p382, %p383
      %p385 = scmp.ne.s32.totalorder %s371, %s372
      %p386 = scmp.eq.s32.totalorder %s36, 1
      %p387 = por %p385, %p386
      %p389 = scmp.ne.s32.totalorder %s372, %s388
      %p390 = scmp.eq.s32.totalorder %s36, 0
      %p391 = por %p389, %p390
      %s393 = sadd.s32 %s392, 1
      %p396 = scmp.eq.s32.totalorder %s30, 1
      %p397 = scmp.ne.s32.totalorder %s392, %s394
      %p398 = scmp.eq.s32.totalorder %s30, 0
      %p399 = por %p397, %p398
      %p400 = scmp.ne.s32.totalorder %s392, %s394
      %p401 = scmp.eq.s32.totalorder %s35, 1
      %p402 = por %p400, %p401
      %p403 = scmp.ne.s32.totalorder %s394, %s395
      %p404 = scmp.eq.s32.totalorder %s35, 0
      %p405 = por %p403, %p404
      %p406 = scmp.ne.s32.totalorder %s394, %s395
      %p407 = scmp.eq.s32.totalorder %s36, 1
      %p408 = por %p406, %p407
      %p410 = scmp.ne.s32.totalorder %s395, %s409
      %p411 = scmp.eq.s32.totalorder %s36, 0
      %p412 = por %p410, %p411
      %s414 = sadd.s32 %s413, 1
      %p417 = scmp.eq.s32.totalorder %s30, 1
      %p418 = scmp.ne.s32.totalorder %s413, %s415
      %p419 = scmp.eq.s32.totalorder %s30, 0
      %p420 = por %p418, %p419
      %p421 = scmp.ne.s32.totalorder %s413, %s415
      %p422 = scmp.eq.s32.totalorder %s35, 1
      %p423 = por %p421, %p422
      %p424 = scmp.ne.s32.totalorder %s415, %s416
      %p425 = scmp.eq.s32.totalorder %s35, 0
      %p426 = por %p424, %p425
      %p427 = scmp.ne.s32.totalorder %s415, %s416
      %p428 = scmp.eq.s32.totalorder %s36, 1
      %p429 = por %p427, %p428
      %p431 = scmp.ne.s32.totalorder %s416, %s430
      %p432 = scmp.eq.s32.totalorder %s36, 0
      %p433 = por %p431, %p432
      %s435 = sadd.s32 %s434, 1
      %p438 = scmp.eq.s32.totalorder %s30, 1
      %p439 = scmp.ne.s32.totalorder %s434, %s436
      %p440 = scmp.eq.s32.totalorder %s30, 0
      %p441 = por %p439, %p440
      %p442 = scmp.ne.s32.totalorder %s434, %s436
      %p443 = scmp.eq.s32.totalorder %s35, 1
      %p444 = por %p442, %p443
      %p445 = scmp.ne.s32.totalorder %s436, %s437
      %p446 = scmp.eq.s32.totalorder %s35, 0
      %p447 = por %p445, %p446
      %p448 = scmp.ne.s32.totalorder %s436, %s437
      %p449 = scmp.eq.s32.totalorder %s36, 1
      %p450 = por %p448, %p449
      %p452 = scmp.ne.s32.totalorder %s437, %s451
      %p453 = scmp.eq.s32.totalorder %s36, 0
      %p454 = por %p452, %p453
      %s456 = sadd.s32 %s455, 1
      %p459 = scmp.eq.s32.totalorder %s30, 1
      %p460 = scmp.ne.s32.totalorder %s455, %s457
      %p461 = scmp.eq.s32.totalorder %s30, 0
      %p462 = por %p460, %p461
      %p463 = scmp.ne.s32.totalorder %s455, %s457
      %p464 = scmp.eq.s32.totalorder %s35, 1
      %p465 = por %p463, %p464
      %p466 = scmp.ne.s32.totalorder %s457, %s458
      %p467 = scmp.eq.s32.totalorder %s35, 0
      %p468 = por %p466, %p467
      %p469 = scmp.ne.s32.totalorder %s457, %s458
      %p470 = scmp.eq.s32.totalorder %s36, 1
      %p471 = por %p469, %p470
      %p473 = scmp.ne.s32.totalorder %s458, %s472
      %p474 = scmp.eq.s32.totalorder %s36, 0
      %p475 = por %p473, %p474
      %s477 = sadd.s32 %s476, 1
      %p480 = scmp.eq.s32.totalorder %s30, 1
      %p481 = scmp.ne.s32.totalorder %s476, %s478
      %p482 = scmp.eq.s32.totalorder %s30, 0
      %p483 = por %p481, %p482
      %p484 = scmp.ne.s32.totalorder %s476, %s478
      %p485 = scmp.eq.s32.totalorder %s35, 1
      %p486 = por %p484, %p485
      %p487 = scmp.ne.s32.totalorder %s478, %s479
      %p488 = scmp.eq.s32.totalorder %s35, 0
      %p489 = por %p487, %p488
      %p490 = scmp.ne.s32.totalorder %s478, %s479
      %p491 = scmp.eq.s32.totalorder %s36, 1
      %p492 = por %p490, %p491
      %p494 = scmp.ne.s32.totalorder %s479, %s493
      %p495 = scmp.eq.s32.totalorder %s36, 0
      %p496 = por %p494, %p495
      %s498 = sadd.s32 %s497, 1
      %p501 = scmp.eq.s32.totalorder %s30, 1
      %p502 = scmp.ne.s32.totalorder %s497, %s499
      %p503 = scmp.eq.s32.totalorder %s30, 0
      %p504 = por %p502, %p503
      %p505 = scmp.ne.s32.totalorder %s497, %s499
      %p506 = scmp.eq.s32.totalorder %s35, 1
      %p507 = por %p505, %p506
      %p508 = scmp.ne.s32.totalorder %s499, %s500
      %p509 = scmp.eq.s32.totalorder %s35, 0
      %p510 = por %p508, %p509
      %p511 = scmp.ne.s32.totalorder %s499, %s500
      %p512 = scmp.eq.s32.totalorder %s36, 1
      %p513 = por %p511, %p512
      %p515 = scmp.ne.s32.totalorder %s500, %s514
      %p516 = scmp.eq.s32.totalorder %s36, 0
      %p517 = por %p515, %p516
      %p518 = scmp.le.s32.totalorder 1, %s30
      %p519 = scmp.lt.s32.totalorder %s30, 3
      %p520 = pnand %p518, %p519
      %p521 = pneg %p520
      // Predicated region
      $region9: #{tpu_custom_call.1} parent=5 // pred_check
        _
      $region10: #{tpu_custom_call.1} parent=5 // pred_check_branch
        %523 = sbr.rel (%p520) target = $region12
      $region11: #{tpu_custom_call.1} parent=5 // pred_region
        %s524 = ssub.s32 %s30, 1
        // Predicated region
        $region13: #{tpu_custom_call.1} parent=11 // pred_check
          %p525 = pneg %p51
        $region14: #{tpu_custom_call.1} parent=11 // pred_check_branch
          %527 = sbr.rel (%p525) target = $region16
        $region15: #{tpu_custom_call.1} parent=11 // pred_region
          %s529 = ssub.s32 512, 512
          %530 = vsyncadd [#allocation4], %s529
          %s531 = sshll.u32 [#allocation3], 4
          %s532 = int_to_ptr.vmem [resolvable:$true] %s531
          %537 = dma.hbm_to_vmem [thread:$0]  %s0, 512, %s532, [#allocation4], 128, 128, 8
        $region16: #{tpu_custom_call.1} parent=11 // pred_fallthru
          _
        // Predicated region
        $region17: #{tpu_custom_call.1} parent=11 // pred_check
          %p538 = pneg %p72
        $region18: #{tpu_custom_call.1} parent=11 // pred_check_branch
          %540 = sbr.rel (%p538) target = $region20
        $region19: #{tpu_custom_call.1} parent=11 // pred_region
          %s542 = ssub.s32 128, 128
          %543 = vsyncadd [#allocation7], %s542
          %s545 = sshll.u32 [#allocation6], 4
          %s546 = int_to_ptr.vmem [resolvable:$true] %s545
          %548 = dma.hbm_to_vmem [thread:$0]  %s1, 128, %s546, [#allocation7]
        $region20: #{tpu_custom_call.1} parent=11 // pred_fallthru
          _
        // Predicated region
        $region21: #{tpu_custom_call.1} parent=11 // pred_check
          %p549 = pneg %p405
        $region22: #{tpu_custom_call.1} parent=11 // pred_check_branch
          %551 = sbr.rel (%p549) target = $region24
        $region23: #{tpu_custom_call.1} parent=11 // pred_region
          _
        $region24: #{tpu_custom_call.1} parent=11 // pred_fallthru
          _
        // Predicated region
        $region25: #{tpu_custom_call.1} parent=11 // pred_check
          %p552 = pneg %p426
        $region26: #{tpu_custom_call.1} parent=11 // pred_check_branch
          %554 = sbr.rel (%p552) target = $region28
        $region27: #{tpu_custom_call.1} parent=11 // pred_region
          _
        $region28: #{tpu_custom_call.1} parent=11 // pred_fallthru
          _
        // Predicated region
        $region29: #{tpu_custom_call.1} parent=11 // pred_check
          %p555 = pneg %p447
        $region30: #{tpu_custom_call.1} parent=11 // pred_check_branch
          %557 = sbr.rel (%p555) target = $region32
        $region31: #{tpu_custom_call.1} parent=11 // pred_region
          %s559 = ssub.s32 1024, 1024
          %560 = vsyncadd [#allocation7], %s559
          %s561 = sshll.u32 [#allocation12], 4
          %s562 = int_to_ptr.vmem [resolvable:$true] %s561
          %567 = dma.hbm_to_vmem [thread:$0]  %s16, 1024, %s562, [#allocation7], 64, 64, 4
        $region32: #{tpu_custom_call.1} parent=11 // pred_fallthru
          _
        // Predicated region
        $region33: #{tpu_custom_call.1} parent=11 // pred_check
          %p568 = pneg %p468
        $region34: #{tpu_custom_call.1} parent=11 // pred_check_branch
          %570 = sbr.rel (%p568) target = $region36
        $region35: #{tpu_custom_call.1} parent=11 // pred_region
          _
        $region36: #{tpu_custom_call.1} parent=11 // pred_fallthru
          _
      $region12: #{tpu_custom_call.1} parent=5 // pred_fallthru
        _
      %p571 = scmp.lt.s32.totalorder %s30, 2
      // Predicated region
      $region37: #{tpu_custom_call.1} parent=5 // pred_check
        %p572 = pneg %p571
      $region38: #{tpu_custom_call.1} parent=5 // pred_check_branch
        %574 = sbr.rel (%p572) target = $region40
      $region39: #{tpu_custom_call.1} parent=5 // pred_region
        // Predicated region
        $region41: #{tpu_custom_call.1} parent=39 // pred_check
          %p575 = pneg %p92
        $region42: #{tpu_custom_call.1} parent=39 // pred_check_branch
          %577 = sbr.rel (%p575) target = $region44
        $region43: #{tpu_custom_call.1} parent=39 // pred_region
          %s578 = sand.u32 %s30, 1
          %s579 = scalar_lea.sflag [#allocation4], %s578
          %s580 = sand.u32 %s82, 1
          %s581 = smul.addr %s580, 192
          %s582 = scalar_lea.vmem [#allocation8], %s581
          %s584 = ssub.s32 3072, 3072
          %585 = vsyncadd %s579, %s584
          %s586 = smul.addr %s30, 48
          %s587 = smul.addr %s586, 64
          %s588 = scalar_lea.hbm %s2, %s587
          %s589 = sshll.u32 %s582, 4
          %s590 = int_to_ptr.vmem [resolvable:$true] %s589
          %595 = dma.hbm_to_vmem [thread:$0]  %s588, 3072, %s590, %s579, 192, 192, 12
        $region44: #{tpu_custom_call.1} parent=39 // pred_fallthru
          _
        // Predicated region
        $region45: #{tpu_custom_call.1} parent=39 // pred_check
          %p596 = pneg %p118
        $region46: #{tpu_custom_call.1} parent=39 // pred_check_branch
          %598 = sbr.rel (%p596) target = $region48
        $region47: #{tpu_custom_call.1} parent=39 // pred_region
          %p599 = scmp.lt.s32.totalorder %s30, 1
          %s600 = scalar_select %p599, %s30, 1
          %s601 = smul.addr %s600, 3
          %s602 = scalar_lea.vmem %s3, %s601
        $region48: #{tpu_custom_call.1} parent=39 // pred_fallthru
          _
        // Predicated region
        $region49: #{tpu_custom_call.1} parent=39 // pred_check
          %p603 = pneg %p144
        $region50: #{tpu_custom_call.1} parent=39 // pred_check_branch
          %605 = sbr.rel (%p603) target = $region52
        $region51: #{tpu_custom_call.1} parent=39 // pred_region
          %s606 = sand.u32 %s30, 1
          %s607 = scalar_lea.sflag [#allocation4], %s606
          %s608 = sand.u32 %s134, 1
          %s609 = smul.addr %s608, 64
          %s610 = scalar_lea.vmem [#allocation9], %s609
          %s612 = ssub.s32 1024, 1024
          %613 = vsyncadd %s607, %s612
          %s614 = smul.addr %s30, 16
          %s615 = smul.addr %s614, 64
          %s616 = scalar_lea.hbm %s4, %s615
          %s617 = sshll.u32 %s610, 4
          %s618 = int_to_ptr.vmem [resolvable:$true] %s617
          %623 = dma.hbm_to_vmem [thread:$0]  %s616, 1024, %s618, %s607, 64, 64, 4
        $region52: #{tpu_custom_call.1} parent=39 // pred_fallthru
          _
        // Predicated region
        $region53: #{tpu_custom_call.1} parent=39 // pred_check
          %p624 = pneg %p170
        $region54: #{tpu_custom_call.1} parent=39 // pred_check_branch
          %626 = sbr.rel (%p624) target = $region56
        $region55: #{tpu_custom_call.1} parent=39 // pred_region
          %p627 = scmp.lt.s32.totalorder %s30, 1
          %s628 = scalar_select %p627, %s30, 1
          %s629 = scalar_lea.vmem %s5, %s628
        $region56: #{tpu_custom_call.1} parent=39 // pred_fallthru
          _
        // Predicated region
        $region57: #{tpu_custom_call.1} parent=39 // pred_check
          %p630 = pneg %p196
        $region58: #{tpu_custom_call.1} parent=39 // pred_check_branch
          %632 = sbr.rel (%p630) target = $region60
        $region59: #{tpu_custom_call.1} parent=39 // pred_region
          %p633 = scmp.lt.s32.totalorder %s30, 1
          %s634 = scalar_select %p633, %s30, 1
          %s635 = scalar_lea.vmem %s6, %s634
        $region60: #{tpu_custom_call.1} parent=39 // pred_fallthru
          _
        // Predicated region
        $region61: #{tpu_custom_call.1} parent=39 // pred_check
          %p636 = pneg %p222
        $region62: #{tpu_custom_call.1} parent=39 // pred_check_branch
          %638 = sbr.rel (%p636) target = $region64
        $region63: #{tpu_custom_call.1} parent=39 // pred_region
          %p639 = scmp.lt.s32.totalorder %s30, 1
          %s640 = scalar_select %p639, %s30, 1
          %s641 = scalar_lea.vmem %s7, %s640
        $region64: #{tpu_custom_call.1} parent=39 // pred_fallthru
          _
        // Predicated region
        $region65: #{tpu_custom_call.1} parent=39 // pred_check
          %p642 = pneg %p248
        $region66: #{tpu_custom_call.1} parent=39 // pred_check_branch
          %644 = sbr.rel (%p642) target = $region68
        $region67: #{tpu_custom_call.1} parent=39 // pred_region
          %p645 = scmp.lt.s32.totalorder %s30, 1
          %s646 = scalar_select %p645, %s30, 1
          %s647 = scalar_lea.vmem %s8, %s646
        $region68: #{tpu_custom_call.1} parent=39 // pred_fallthru
          _
        // Predicated region
        $region69: #{tpu_custom_call.1} parent=39 // pred_check
          %p648 = pneg %p274
        $region70: #{tpu_custom_call.1} parent=39 // pred_check_branch
          %650 = sbr.rel (%p648) target = $region72
        $region71: #{tpu_custom_call.1} parent=39 // pred_region
          %p651 = scmp.lt.s32.totalorder %s30, 1
          %s652 = scalar_select %p651, %s30, 1
          %s653 = scalar_lea.vmem %s9, %s652
        $region72: #{tpu_custom_call.1} parent=39 // pred_fallthru
          _
        // Predicated region
        $region73: #{tpu_custom_call.1} parent=39 // pred_check
          %p654 = pneg %p300
        $region74: #{tpu_custom_call.1} parent=39 // pred_check_branch
          %656 = sbr.rel (%p654) target = $region76
        $region75: #{tpu_custom_call.1} parent=39 // pred_region
          %s657 = sand.u32 %s30, 1
          %s658 = scalar_lea.sflag [#allocation4], %s657
          %s659 = sand.u32 %s290, 1
          %s660 = smul.addr %s659, 256
          %s661 = scalar_lea.vmem [#allocation10], %s660
          %s663 = ssub.s32 4096, 4096
          %664 = vsyncadd %s658, %s663
          %s665 = smul.addr %s30, 64
          %s666 = smul.addr %s665, 64
          %s667 = scalar_lea.hbm %s10, %s666
          %s668 = sshll.u32 %s661, 4
          %s669 = int_to_ptr.vmem [resolvable:$true] %s668
          %674 = dma.hbm_to_vmem [thread:$0]  %s667, 4096, %s669, %s658, 256, 256, 16
        $region76: #{tpu_custom_call.1} parent=39 // pred_fallthru
          _
        // Predicated region
        $region77: #{tpu_custom_call.1} parent=39 // pred_check
          %p675 = pneg %p326
        $region78: #{tpu_custom_call.1} parent=39 // pred_check_branch
          %677 = sbr.rel (%p675) target = $region80
        $region79: #{tpu_custom_call.1} parent=39 // pred_region
          %p678 = scmp.lt.s32.totalorder %s30, 1
          %s679 = scalar_select %p678, %s30, 1
          %s680 = smul.addr %s679, 4
          %s681 = scalar_lea.vmem %s11, %s680
        $region80: #{tpu_custom_call.1} parent=39 // pred_fallthru
          _
        // Predicated region
        $region81: #{tpu_custom_call.1} parent=39 // pred_check
          %p682 = pneg %p352
        $region82: #{tpu_custom_call.1} parent=39 // pred_check_branch
          %684 = sbr.rel (%p682) target = $region84
        $region83: #{tpu_custom_call.1} parent=39 // pred_region
          %s685 = sand.u32 %s30, 1
          %s686 = scalar_lea.sflag [#allocation4], %s685
          %s687 = sand.u32 %s342, 1
          %s688 = smul.addr %s687, 256
          %s689 = scalar_lea.vmem [#allocation11], %s688
          %s691 = ssub.s32 4096, 4096
          %692 = vsyncadd %s686, %s691
          %s693 = smul.addr %s30, 64
          %s694 = smul.addr %s693, 64
          %s695 = scalar_lea.hbm %s12, %s694
          %s696 = sshll.u32 %s689, 4
          %s697 = int_to_ptr.vmem [resolvable:$true] %s696
          %702 = dma.hbm_to_vmem [thread:$0]  %s695, 4096, %s697, %s686, 64, 64, 4
        $region84: #{tpu_custom_call.1} parent=39 // pred_fallthru
          _
        // Predicated region
        $region85: #{tpu_custom_call.1} parent=39 // pred_check
          %p703 = pneg %p378
        $region86: #{tpu_custom_call.1} parent=39 // pred_check_branch
          %705 = sbr.rel (%p703) target = $region88
        $region87: #{tpu_custom_call.1} parent=39 // pred_region
          %p706 = scmp.lt.s32.totalorder %s30, 1
          %s707 = scalar_select %p706, %s30, 1
          %s708 = scalar_lea.vmem %s13, %s707
        $region88: #{tpu_custom_call.1} parent=39 // pred_fallthru
          _
      $region40: #{tpu_custom_call.1} parent=5 // pred_fallthru
        _
      %p709 = scmp.le.s32.totalorder 1, %s30
      %p710 = scmp.lt.s32.totalorder %s30, 3
      %p711 = pnand %p709, %p710
      %p712 = pneg %p711
      // Predicated region
      $region89: #{tpu_custom_call.1} parent=5 // pred_check
        _
      $region90: #{tpu_custom_call.1} parent=5 // pred_check_branch
        %714 = sbr.rel (%p711) target = $region92
      $region91: #{tpu_custom_call.1} parent=5 // pred_region
        %s715 = ssub.s32 %s30, 1
        // Predicated region
        $region93: #{tpu_custom_call.1} parent=91 // pred_check
          %p716 = pneg %p51
        $region94: #{tpu_custom_call.1} parent=91 // pred_check_branch
          %718 = sbr.rel (%p716) target = $region96
        $region95: #{tpu_custom_call.1} parent=91 // pred_region
          %719 = dma.done [#allocation4], 512
        $region96: #{tpu_custom_call.1} parent=91 // pred_fallthru
          _
        // Predicated region
        $region97: #{tpu_custom_call.1} parent=91 // pred_check
          %p720 = pneg %p72
        $region98: #{tpu_custom_call.1} parent=91 // pred_check_branch
          %722 = sbr.rel (%p720) target = $region100
        $region99: #{tpu_custom_call.1} parent=91 // pred_region
          %723 = dma.done [#allocation7], 128
        $region100: #{tpu_custom_call.1} parent=91 // pred_fallthru
          _
        %s724 = sand.u32 %s35, 1
        %s725 = scalar_lea.sflag [#allocation4], %s724
        %s726 = sand.u32 %s85, 1
        %s727 = smul.addr %s726, 192
        %s728 = scalar_lea.vmem [#allocation8], %s727
        // Predicated region
        $region101: #{tpu_custom_call.1} parent=91 // pred_check
          %p729 = pneg %p98
        $region102: #{tpu_custom_call.1} parent=91 // pred_check_branch
          %731 = sbr.rel (%p729) target = $region104
        $region103: #{tpu_custom_call.1} parent=91 // pred_region
          %732 = dma.done %s725, 3072
        $region104: #{tpu_custom_call.1} parent=91 // pred_fallthru
          _
        %s733 = sand.u32 %s35, 1
        %s734 = scalar_lea.sflag [#allocation4], %s733
        %s735 = sand.u32 %s137, 1
        %s736 = smul.addr %s735, 64
        %s737 = scalar_lea.vmem [#allocation9], %s736
        // Predicated region
        $region105: #{tpu_custom_call.1} parent=91 // pred_check
          %p738 = pneg %p150
        $region106: #{tpu_custom_call.1} parent=91 // pred_check_branch
          %740 = sbr.rel (%p738) target = $region108
        $region107: #{tpu_custom_call.1} parent=91 // pred_region
          %741 = dma.done %s734, 1024
        $region108: #{tpu_custom_call.1} parent=91 // pred_fallthru
          _
        %s742 = sand.u32 %s35, 1
        %s743 = scalar_lea.sflag [#allocation4], %s742
        %s744 = sand.u32 %s293, 1
        %s745 = smul.addr %s744, 256
        %s746 = scalar_lea.vmem [#allocation10], %s745
        // Predicated region
        $region109: #{tpu_custom_call.1} parent=91 // pred_check
          %p747 = pneg %p306
        $region110: #{tpu_custom_call.1} parent=91 // pred_check_branch
          %749 = sbr.rel (%p747) target = $region112
        $region111: #{tpu_custom_call.1} parent=91 // pred_region
          %750 = dma.done %s743, 4096
        $region112: #{tpu_custom_call.1} parent=91 // pred_fallthru
          _
        %s751 = sand.u32 %s35, 1
        %s752 = scalar_lea.sflag [#allocation4], %s751
        %s753 = sand.u32 %s345, 1
        %s754 = smul.addr %s753, 256
        %s755 = scalar_lea.vmem [#allocation11], %s754
        // Predicated region
        $region113: #{tpu_custom_call.1} parent=91 // pred_check
          %p756 = pneg %p358
        $region114: #{tpu_custom_call.1} parent=91 // pred_check_branch
          %758 = sbr.rel (%p756) target = $region116
        $region115: #{tpu_custom_call.1} parent=91 // pred_region
          %759 = dma.done %s752, 4096
        $region116: #{tpu_custom_call.1} parent=91 // pred_fallthru
          _
        // Predicated region
        $region117: #{tpu_custom_call.1} parent=91 // pred_check
          %p760 = pneg %p447
        $region118: #{tpu_custom_call.1} parent=91 // pred_check_branch
          %762 = sbr.rel (%p760) target = $region120
        $region119: #{tpu_custom_call.1} parent=91 // pred_region
          %763 = dma.done [#allocation7], 1024
        $region120: #{tpu_custom_call.1} parent=91 // pred_fallthru
          _
        %p764 = pneg %p51
        %p765 = pneg %p48
        %p766 = pneg %p72
        %p767 = pneg %p69
        %s768 = sand.u32 %s35, 1
        %s769 = scalar_lea.sflag [#allocation4], %s768
        %s770 = sand.u32 %s85, 1
        %s771 = smul.addr %s770, 192
        %s772 = scalar_lea.vmem [#allocation8], %s771
        %p773 = pneg %p98
        %p774 = pneg %p95
        %p775 = scmp.lt.s32.totalorder %s35, 1
        %s776 = scalar_select %p775, %s35, 1
        %s777 = smul.addr %s776, 3
        %s778 = scalar_lea.vmem %s3, %s777
        %p779 = pneg %p124
        %p780 = pneg %p121
        %s781 = sand.u32 %s35, 1
        %s782 = scalar_lea.sflag [#allocation4], %s781
        %s783 = sand.u32 %s137, 1
        %s784 = smul.addr %s783, 64
        %s785 = scalar_lea.vmem [#allocation9], %s784
        %p786 = pneg %p150
        %p787 = pneg %p147
        %p788 = scmp.lt.s32.totalorder %s35, 1
        %s789 = scalar_select %p788, %s35, 1
        %s790 = scalar_lea.vmem %s5, %s789
        %p791 = pneg %p176
        %p792 = pneg %p173
        %p793 = scmp.lt.s32.totalorder %s35, 1
        %s794 = scalar_select %p793, %s35, 1
        %s795 = scalar_lea.vmem %s6, %s794
        %p796 = pneg %p202
        %p797 = pneg %p199
        %p798 = scmp.lt.s32.totalorder %s35, 1
        %s799 = scalar_select %p798, %s35, 1
        %s800 = scalar_lea.vmem %s7, %s799
        %p801 = pneg %p228
        %p802 = pneg %p225
        %p803 = scmp.lt.s32.totalorder %s35, 1
        %s804 = scalar_select %p803, %s35, 1
        %s805 = scalar_lea.vmem %s8, %s804
        %p806 = pneg %p254
        %p807 = pneg %p251
        %p808 = scmp.lt.s32.totalorder %s35, 1
        %s809 = scalar_select %p808, %s35, 1
        %s810 = scalar_lea.vmem %s9, %s809
        %p811 = pneg %p280
        %p812 = pneg %p277
        %s813 = sand.u32 %s35, 1
        %s814 = scalar_lea.sflag [#allocation4], %s813
        %s815 = sand.u32 %s293, 1
        %s816 = smul.addr %s815, 256
        %s817 = scalar_lea.vmem [#allocation10], %s816
        %p818 = pneg %p306
        %p819 = pneg %p303
        %p820 = scmp.lt.s32.totalorder %s35, 1
        %s821 = scalar_select %p820, %s35, 1
        %s822 = smul.addr %s821, 4
        %s823 = scalar_lea.vmem %s11, %s822
        %p824 = pneg %p332
        %p825 = pneg %p329
        %s826 = sand.u32 %s35, 1
        %s827 = scalar_lea.sflag [#allocation4], %s826
        %s828 = sand.u32 %s345, 1
        %s829 = smul.addr %s828, 256
        %s830 = scalar_lea.vmem [#allocation11], %s829
        %p831 = pneg %p358
        %p832 = pneg %p355
        %p833 = scmp.lt.s32.totalorder %s35, 1
        %s834 = scalar_select %p833, %s35, 1
        %s835 = scalar_lea.vmem %s13, %s834
        %p836 = pneg %p384
        %p837 = pneg %p381
        %p838 = pneg %p405
        %p839 = pneg %p402
        %p840 = pneg %p426
        %p841 = pneg %p423
        %p842 = pneg %p447
        %p843 = pneg %p444
        %p844 = pneg %p468
        %p845 = pneg %p465
        %p846 = pneg %p489
        %p847 = pneg %p486
        %p848 = pneg %p510
        %p849 = pneg %p507
        %p850 = scmp.lt.s32.totalorder %s35, 1
        %s851 = scalar_select %p850, %s35, 1
        %s852 = smul.addr %s851, 3
        %s853 = scalar_lea.vmem %s3, %s852
        %p854 = scmp.lt.s32.totalorder %s35, 1
        %s855 = scalar_select %p854, %s35, 1
        %s856 = scalar_lea.vmem %s5, %s855
        %p857 = scmp.lt.s32.totalorder %s35, 1
        %s858 = scalar_select %p857, %s35, 1
        %s859 = scalar_lea.vmem %s6, %s858
        %p860 = scmp.lt.s32.totalorder %s35, 1
        %s861 = scalar_select %p860, %s35, 1
        %s862 = scalar_lea.vmem %s7, %s861
        %p863 = scmp.lt.s32.totalorder %s35, 1
        %s864 = scalar_select %p863, %s35, 1
        %s865 = scalar_lea.vmem %s8, %s864
        %p866 = scmp.lt.s32.totalorder %s35, 1
        %s867 = scalar_select %p866, %s35, 1
        %s868 = scalar_lea.vmem %s9, %s867
        %p869 = scmp.lt.s32.totalorder %s35, 1
        %s870 = scalar_select %p869, %s35, 1
        %s871 = smul.addr %s870, 4
        %s872 = scalar_lea.vmem %s11, %s871
        %p873 = scmp.lt.s32.totalorder %s35, 1
        %s874 = scalar_select %p873, %s35, 1
        %s875 = scalar_lea.vmem %s13, %s874
        %p877 = scmp.eq.s32.totalorder %s35, 0
        // Predicated region
        $region121: #{tpu_custom_call.1} parent=91 // pred_check
          %p878 = pneg %p877
        $region122: #{tpu_custom_call.1} parent=91 // pred_check_branch
          %880 = sbr.rel (%p878) target = $region124
        $region123: #{tpu_custom_call.1} parent=91 // pred_region
          %v881 = vld [vmem:[#allocation3] sm:$0xff]
          %v882 = vld [vmem:[#allocation3 + $0x8] sm:$0xff]
          %v883 = vld [vmem:[#allocation3 + $0x10] sm:$0xff]
          %v884 = vld [vmem:[#allocation3 + $0x18] sm:$0xff]
          %885 = vst [vmem:[#allocation2] sm:$0xff] %v881
          %886 = vst [vmem:[#allocation2 + $0x8] sm:$0xff] %v882
          %887 = vst [vmem:[#allocation2 + $0x10] sm:$0xff] %v883
          %888 = vst [vmem:[#allocation2 + $0x18] sm:$0xff] %v884
        $region124: #{tpu_custom_call.1} parent=91 // pred_fallthru
          _
        %v889 = vld [vmem:[#allocation2] sm:$0xff]
        %v890 = vld [vmem:[#allocation2 + $0x8] sm:$0xff]
        %v891 = vld [vmem:[#allocation2 + $0x10] sm:$0xff]
        %v892 = vld [vmem:[#allocation2 + $0x18] sm:$0xff]
        %v893 = vld [vmem:[#allocation6] sm:$0xff]
        %v894 = vld [vmem:[%s728] sm:$0xff]
        %v895 = vld [vmem:[%s728 + $0x8] sm:$0xf]
        %v896 = vld [vmem:[%s728 + $0xc] sm:$0xff]
        %v897 = vld [vmem:[%s728 + $0x14] sm:$0xf]
        %v898 = vld [vmem:[%s728 + $0x18] sm:$0xff]
        %v899 = vld [vmem:[%s728 + $0x20] sm:$0xf]
        %v900 = vld [vmem:[%s728 + $0x24] sm:$0xff]
        %v901 = vld [vmem:[%s728 + $0x2c] sm:$0xf]
        %v902 = vld [vmem:[%s728 + $0x30] sm:$0xff]
        %v903 = vld [vmem:[%s728 + $0x38] sm:$0xf]
        %v904 = vld [vmem:[%s728 + $0x3c] sm:$0xff]
        %v905 = vld [vmem:[%s728 + $0x44] sm:$0xf]
        %v906 = vld [vmem:[%s728 + $0x48] sm:$0xff]
        %v907 = vld [vmem:[%s728 + $0x50] sm:$0xf]
        %v908 = vld [vmem:[%s728 + $0x54] sm:$0xff]
        %v909 = vld [vmem:[%s728 + $0x5c] sm:$0xf]
        %v910 = vld [vmem:[%s728 + $0x60] sm:$0xff]
        %v911 = vld [vmem:[%s728 + $0x68] sm:$0xf]
        %v912 = vld [vmem:[%s728 + $0x6c] sm:$0xff]
        %v913 = vld [vmem:[%s728 + $0x74] sm:$0xf]
        %v914 = vld [vmem:[%s728 + $0x78] sm:$0xff]
        %v915 = vld [vmem:[%s728 + $0x80] sm:$0xf]
        %v916 = vld [vmem:[%s728 + $0x84] sm:$0xff]
        %v917 = vld [vmem:[%s728 + $0x8c] sm:$0xf]
        %v918 = vld [vmem:[%s728 + $0x90] sm:$0xff]
        %v919 = vld [vmem:[%s728 + $0x98] sm:$0xf]
        %v920 = vld [vmem:[%s728 + $0x9c] sm:$0xff]
        %v921 = vld [vmem:[%s728 + $0xa4] sm:$0xf]
        %v922 = vld [vmem:[%s728 + $0xa8] sm:$0xff]
        %v923 = vld [vmem:[%s728 + $0xb0] sm:$0xf]
        %v924 = vld [vmem:[%s728 + $0xb4] sm:$0xff]
        %v925 = vld [vmem:[%s728 + $0xbc] sm:$0xf]
        %v926 = vld [vmem:[%s853] sm:$0x7]
        %v927 = vld [vmem:[%s737] sm:$0xf]
        %v928 = vld [vmem:[%s737 + $0x4] sm:$0xf]
        %v929 = vld [vmem:[%s737 + $0x8] sm:$0xf]
        %v930 = vld [vmem:[%s737 + $0xc] sm:$0xf]
        %v931 = vld [vmem:[%s737 + $0x10] sm:$0xf]
        %v932 = vld [vmem:[%s737 + $0x14] sm:$0xf]
        %v933 = vld [vmem:[%s737 + $0x18] sm:$0xf]
        %v934 = vld [vmem:[%s737 + $0x1c] sm:$0xf]
        %v935 = vld [vmem:[%s737 + $0x20] sm:$0xf]
        %v936 = vld [vmem:[%s737 + $0x24] sm:$0xf]
        %v937 = vld [vmem:[%s737 + $0x28] sm:$0xf]
        %v938 = vld [vmem:[%s737 + $0x2c] sm:$0xf]
        %v939 = vld [vmem:[%s737 + $0x30] sm:$0xf]
        %v940 = vld [vmem:[%s737 + $0x34] sm:$0xf]
        %v941 = vld [vmem:[%s737 + $0x38] sm:$0xf]
        %v942 = vld [vmem:[%s737 + $0x3c] sm:$0xf]
        %v943 = vld [vmem:[%s856] sm:$0x1]
        %v944 = vld [vmem:[%s859] sm:$0x1]
        %v945 = vld [vmem:[%s862] sm:$0x1]
        %v946 = vld [vmem:[%s865] sm:$0x1]
        %v947 = vld [vmem:[%s868] sm:$0x1]
        %v948 = vld [vmem:[%s746] sm:$0xff]
        %v949 = vld [vmem:[%s746 + $0x8] sm:$0xff]
        %v950 = vld [vmem:[%s746 + $0x10] sm:$0xff]
        %v951 = vld [vmem:[%s746 + $0x18] sm:$0xff]
        %v952 = vld [vmem:[%s746 + $0x20] sm:$0xff]
        %v953 = vld [vmem:[%s746 + $0x28] sm:$0xff]
        %v954 = vld [vmem:[%s746 + $0x30] sm:$0xff]
        %v955 = vld [vmem:[%s746 + $0x38] sm:$0xff]
        %v956 = vld [vmem:[%s746 + $0x40] sm:$0xff]
        %v957 = vld [vmem:[%s746 + $0x48] sm:$0xff]
        %v958 = vld [vmem:[%s746 + $0x50] sm:$0xff]
        %v959 = vld [vmem:[%s746 + $0x58] sm:$0xff]
        %v960 = vld [vmem:[%s746 + $0x60] sm:$0xff]
        %v961 = vld [vmem:[%s746 + $0x68] sm:$0xff]
        %v962 = vld [vmem:[%s746 + $0x70] sm:$0xff]
        %v963 = vld [vmem:[%s746 + $0x78] sm:$0xff]
        %v964 = vld [vmem:[%s746 + $0x80] sm:$0xff]
        %v965 = vld [vmem:[%s746 + $0x88] sm:$0xff]
        %v966 = vld [vmem:[%s746 + $0x90] sm:$0xff]
        %v967 = vld [vmem:[%s746 + $0x98] sm:$0xff]
        %v968 = vld [vmem:[%s746 + $0xa0] sm:$0xff]
        %v969 = vld [vmem:[%s746 + $0xa8] sm:$0xff]
        %v970 = vld [vmem:[%s746 + $0xb0] sm:$0xff]
        %v971 = vld [vmem:[%s746 + $0xb8] sm:$0xff]
        %v972 = vld [vmem:[%s746 + $0xc0] sm:$0xff]
        %v973 = vld [vmem:[%s746 + $0xc8] sm:$0xff]
        %v974 = vld [vmem:[%s746 + $0xd0] sm:$0xff]
        %v975 = vld [vmem:[%s746 + $0xd8] sm:$0xff]
        %v976 = vld [vmem:[%s746 + $0xe0] sm:$0xff]
        %v977 = vld [vmem:[%s746 + $0xe8] sm:$0xff]
        %v978 = vld [vmem:[%s746 + $0xf0] sm:$0xff]
        %v979 = vld [vmem:[%s746 + $0xf8] sm:$0xff]
        %v980 = vld [vmem:[%s872] sm:$0xf]
        %v981 = vld [vmem:[%s755] sm:$0xf]
        %v982 = vld [vmem:[%s755 + $0x4] sm:$0xf]
        %v983 = vld [vmem:[%s755 + $0x8] sm:$0xf]
        %v984 = vld [vmem:[%s755 + $0xc] sm:$0xf]
        %v985 = vld [vmem:[%s755 + $0x10] sm:$0xf]
        %v986 = vld [vmem:[%s755 + $0x14] sm:$0xf]
        %v987 = vld [vmem:[%s755 + $0x18] sm:$0xf]
        %v988 = vld [vmem:[%s755 + $0x1c] sm:$0xf]
        %v989 = vld [vmem:[%s755 + $0x20] sm:$0xf]
        %v990 = vld [vmem:[%s755 + $0x24] sm:$0xf]
        %v991 = vld [vmem:[%s755 + $0x28] sm:$0xf]
        %v992 = vld [vmem:[%s755 + $0x2c] sm:$0xf]
        %v993 = vld [vmem:[%s755 + $0x30] sm:$0xf]
        %v994 = vld [vmem:[%s755 + $0x34] sm:$0xf]
        %v995 = vld [vmem:[%s755 + $0x38] sm:$0xf]
        %v996 = vld [vmem:[%s755 + $0x3c] sm:$0xf]
        %v997 = vld [vmem:[%s755 + $0x40] sm:$0xf]
        %v998 = vld [vmem:[%s755 + $0x44] sm:$0xf]
        %v999 = vld [vmem:[%s755 + $0x48] sm:$0xf]
        %v1000 = vld [vmem:[%s755 + $0x4c] sm:$0xf]
        %v1001 = vld [vmem:[%s755 + $0x50] sm:$0xf]
        %v1002 = vld [vmem:[%s755 + $0x54] sm:$0xf]
        %v1003 = vld [vmem:[%s755 + $0x58] sm:$0xf]
        %v1004 = vld [vmem:[%s755 + $0x5c] sm:$0xf]
        %v1005 = vld [vmem:[%s755 + $0x60] sm:$0xf]
        %v1006 = vld [vmem:[%s755 + $0x64] sm:$0xf]
        %v1007 = vld [vmem:[%s755 + $0x68] sm:$0xf]
        %v1008 = vld [vmem:[%s755 + $0x6c] sm:$0xf]
        %v1009 = vld [vmem:[%s755 + $0x70] sm:$0xf]
        %v1010 = vld [vmem:[%s755 + $0x74] sm:$0xf]
        %v1011 = vld [vmem:[%s755 + $0x78] sm:$0xf]
        %v1012 = vld [vmem:[%s755 + $0x7c] sm:$0xf]
        %v1013 = vld [vmem:[%s755 + $0x80] sm:$0xf]
        %v1014 = vld [vmem:[%s755 + $0x84] sm:$0xf]
        %v1015 = vld [vmem:[%s755 + $0x88] sm:$0xf]
        %v1016 = vld [vmem:[%s755 + $0x8c] sm:$0xf]
        %v1017 = vld [vmem:[%s755 + $0x90] sm:$0xf]
        %v1018 = vld [vmem:[%s755 + $0x94] sm:$0xf]
        %v1019 = vld [vmem:[%s755 + $0x98] sm:$0xf]
        %v1020 = vld [vmem:[%s755 + $0x9c] sm:$0xf]
        %v1021 = vld [vmem:[%s755 + $0xa0] sm:$0xf]
        %v1022 = vld [vmem:[%s755 + $0xa4] sm:$0xf]
        %v1023 = vld [vmem:[%s755 + $0xa8] sm:$0xf]
        %v1024 = vld [vmem:[%s755 + $0xac] sm:$0xf]
        %v1025 = vld [vmem:[%s755 + $0xb0] sm:$0xf]
        %v1026 = vld [vmem:[%s755 + $0xb4] sm:$0xf]
        %v1027 = vld [vmem:[%s755 + $0xb8] sm:$0xf]
        %v1028 = vld [vmem:[%s755 + $0xbc] sm:$0xf]
        %v1029 = vld [vmem:[%s755 + $0xc0] sm:$0xf]
        %v1030 = vld [vmem:[%s755 + $0xc4] sm:$0xf]
        %v1031 = vld [vmem:[%s755 + $0xc8] sm:$0xf]
        %v1032 = vld [vmem:[%s755 + $0xcc] sm:$0xf]
        %v1033 = vld [vmem:[%s755 + $0xd0] sm:$0xf]
        %v1034 = vld [vmem:[%s755 + $0xd4] sm:$0xf]
        %v1035 = vld [vmem:[%s755 + $0xd8] sm:$0xf]
        %v1036 = vld [vmem:[%s755 + $0xdc] sm:$0xf]
        %v1037 = vld [vmem:[%s755 + $0xe0] sm:$0xf]
        %v1038 = vld [vmem:[%s755 + $0xe4] sm:$0xf]
        %v1039 = vld [vmem:[%s755 + $0xe8] sm:$0xf]
        %v1040 = vld [vmem:[%s755 + $0xec] sm:$0xf]
        %v1041 = vld [vmem:[%s755 + $0xf0] sm:$0xf]
        %v1042 = vld [vmem:[%s755 + $0xf4] sm:$0xf]
        %v1043 = vld [vmem:[%s755 + $0xf8] sm:$0xf]
        %v1044 = vld [vmem:[%s755 + $0xfc] sm:$0xf]
        %v1045 = vld [vmem:[%s875] sm:$0x1]
        %1046 = vadd.xlane.f32.xlu0 %v889
        %v1047 = vpop.xlane.xlu0 %1046
        %1048 = vadd.xlane.f32.xlu0 %v890
        %v1049 = vpop.xlane.xlu0 %1048
        %1050 = vadd.xlane.f32.xlu0 %v891
        %v1051 = vpop.xlane.xlu0 %1050
        %1052 = vadd.xlane.f32.xlu0 %v892
        %v1053 = vpop.xlane.xlu0 %1052
        %v1054 = vrcp.pop 128.0
        %v1055 = vmul.f32 %v1047, %v1054
        %v1056 = vmul.f32 %v1049, %v1054
        %v1057 = vmul.f32 %v1051, %v1054
        %v1058 = vmul.f32 %v1053, %v1054
        %v1059 = vmul.f32 %v889, %v889
        %v1060 = vmul.f32 %v890, %v890
        %v1061 = vmul.f32 %v891, %v891
        %v1062 = vmul.f32 %v892, %v892
        %1063 = vadd.xlane.f32.xlu0 %v1059
        %v1064 = vpop.xlane.xlu0 %1063
        %1065 = vadd.xlane.f32.xlu0 %v1060
        %v1066 = vpop.xlane.xlu0 %1065
        %1067 = vadd.xlane.f32.xlu0 %v1061
        %v1068 = vpop.xlane.xlu0 %1067
        %1069 = vadd.xlane.f32.xlu0 %v1062
        %v1070 = vpop.xlane.xlu0 %1069
        %v1071 = vmul.f32 %v1064, %v1054
        %v1072 = vmul.f32 %v1066, %v1054
        %v1073 = vmul.f32 %v1068, %v1054
        %v1074 = vmul.f32 %v1070, %v1054
        %v1075 = vmul.f32 %v1055, %v1055
        %v1076 = vmul.f32 %v1056, %v1056
        %v1077 = vmul.f32 %v1057, %v1057
        %v1078 = vmul.f32 %v1058, %v1058
        %v1079 = vsub.f32 %v1071, %v1075
        %v1080 = vsub.f32 %v1072, %v1076
        %v1081 = vsub.f32 %v1073, %v1077
        %v1082 = vsub.f32 %v1074, %v1078
        %v1083 = vsub.f32 %v889, %v1055
        %v1084 = vsub.f32 %v890, %v1056
        %v1085 = vsub.f32 %v891, %v1057
        %v1086 = vsub.f32 %v892, %v1058
        %v1087 = vadd.f32 %v1079, 1e-05
        %v1088 = vadd.f32 %v1080, 1e-05
        %v1089 = vadd.f32 %v1081, 1e-05
        %v1090 = vadd.f32 %v1082, 1e-05
        %v1091 = vrsqrt.pop %v1087
        %v1092 = vrsqrt.pop %v1088
        %v1093 = vrsqrt.pop %v1089
        %v1094 = vrsqrt.pop %v1090
        %v1095 = vmul.f32 %v1083, %v1091
        %v1096 = vmul.f32 %v1084, %v1092
        %v1097 = vmul.f32 %v1085, %v1093
        %v1098 = vmul.f32 %v1086, %v1094
        %v1100 = vlaneseq
        %v1101 = vshrl.u32 %v1100, 7
        %v1102 = vsub.s32 0, %v1101
        %v1103 = vrot.slane %v944, %v1102
        %v1105 = vmul.f32 %v1095, %v1103
        %v1106 = vmul.f32 %v1096, %v1103
        %v1107 = vmul.f32 %v1097, %v1103
        %v1108 = vmul.f32 %v1098, %v1103
        %v1110 = vlaneseq
        %v1111 = vshrl.u32 %v1110, 7
        %v1112 = vsub.s32 0, %v1111
        %v1113 = vrot.slane %v945, %v1112
        %v1115 = vadd.f32 %v1105, %v1113
        %v1116 = vadd.f32 %v1106, %v1113
        %v1117 = vadd.f32 %v1107, %v1113
        %v1118 = vadd.f32 %v1108, %v1113
        %v1119 = vpack.c.bf16 %v1116, %v1115
        %v1120 = vpack.c.bf16 %v1118, %v1117
        %v1122 = vlaneseq
        %v1123 = vshrl.u32 %v1122, 7
        %v1124 = vsub.s32 0, %v1123
        %v1125 = vrot.slane %v926, %v1124
        %v1126 = vlaneseq
        %v1127 = vshrl.u32 %v1126, 7
        %v1128 = vsub.s32 1, %v1127
        %v1129 = vrot.slane %v926, %v1128
        %v1130 = vlaneseq
        %v1131 = vshrl.u32 %v1130, 7
        %v1132 = vsub.s32 2, %v1131
        %v1133 = vrot.slane %v926, %v1132
        %v1169 = vunpack.c.l.b16 %v894
        %v1170 = vunpack.c.h.b16 %v894
        %v1171 = vunpack.c.l.b16 %v895
        %v1172 = vunpack.c.l.b16 %v896
        %v1173 = vunpack.c.h.b16 %v896
        %v1174 = vunpack.c.l.b16 %v897
        %v1175 = vunpack.c.l.b16 %v898
        %v1176 = vunpack.c.h.b16 %v898
        %v1177 = vunpack.c.l.b16 %v899
        %v1178 = vunpack.c.l.b16 %v900
        %v1179 = vunpack.c.h.b16 %v900
        %v1180 = vunpack.c.l.b16 %v901
        %v1181 = vunpack.c.l.b16 %v902
        %v1182 = vunpack.c.h.b16 %v902
        %v1183 = vunpack.c.l.b16 %v903
        %v1184 = vunpack.c.l.b16 %v904
        %v1185 = vunpack.c.h.b16 %v904
        %v1186 = vunpack.c.l.b16 %v905
        %v1187 = vunpack.c.l.b16 %v906
        %v1188 = vunpack.c.h.b16 %v906
        %v1189 = vunpack.c.l.b16 %v907
        %v1190 = vunpack.c.l.b16 %v908
        %v1191 = vunpack.c.h.b16 %v908
        %v1192 = vunpack.c.l.b16 %v909
        %v1193 = vunpack.c.l.b16 %v910
        %v1194 = vunpack.c.h.b16 %v910
        %v1195 = vunpack.c.l.b16 %v911
        %v1196 = vunpack.c.l.b16 %v912
        %v1197 = vunpack.c.h.b16 %v912
        %v1198 = vunpack.c.l.b16 %v913
        %v1199 = vunpack.c.l.b16 %v914
        %v1200 = vunpack.c.h.b16 %v914
        %v1201 = vunpack.c.l.b16 %v915
        %v1202 = vunpack.c.l.b16 %v916
        %v1203 = vunpack.c.h.b16 %v916
        %v1204 = vunpack.c.l.b16 %v917
        %v1205 = vunpack.c.l.b16 %v918
        %v1206 = vunpack.c.h.b16 %v918
        %v1207 = vunpack.c.l.b16 %v919
        %v1208 = vunpack.c.l.b16 %v920
        %v1209 = vunpack.c.h.b16 %v920
        %v1210 = vunpack.c.l.b16 %v921
        %v1211 = vunpack.c.l.b16 %v922
        %v1212 = vunpack.c.h.b16 %v922
        %v1213 = vunpack.c.l.b16 %v923
        %v1214 = vunpack.c.l.b16 %v924
        %v1215 = vunpack.c.h.b16 %v924
        %v1216 = vunpack.c.l.b16 %v925
        %v1217 = vpack.c.b16 %v1172, %v1169
        %v1218 = vpack.c.b16 %v1173, %v1170
        %v1219 = vpack.c.b16 %v1174, %v1171
        %v1220 = vpack.c.b16 %v1178, %v1175
        %v1221 = vpack.c.b16 %v1179, %v1176
        %v1222 = vpack.c.b16 %v1180, %v1177
        %v1223 = vpack.c.b16 %v1184, %v1181
        %v1224 = vpack.c.b16 %v1185, %v1182
        %v1225 = vpack.c.b16 %v1186, %v1183
        %v1226 = vpack.c.b16 %v1190, %v1187
        %v1227 = vpack.c.b16 %v1191, %v1188
        %v1228 = vpack.c.b16 %v1192, %v1189
        %v1229 = vpack.c.b16 %v1196, %v1193
        %v1230 = vpack.c.b16 %v1197, %v1194
        %v1231 = vpack.c.b16 %v1198, %v1195
        %v1232 = vpack.c.b16 %v1202, %v1199
        %v1233 = vpack.c.b16 %v1203, %v1200
        %v1234 = vpack.c.b16 %v1204, %v1201
        %v1235 = vpack.c.b16 %v1208, %v1205
        %v1236 = vpack.c.b16 %v1209, %v1206
        %v1237 = vpack.c.b16 %v1210, %v1207
        %v1238 = vpack.c.b16 %v1214, %v1211
        %v1239 = vpack.c.b16 %v1215, %v1212
        %v1240 = vpack.c.b16 %v1216, %v1213
        %1265 = vmatprep.subr.bf16.mxu0 %v1218
        %1266 = vmatpush1.bf16.msra.mxu0 %v1217
        %1267 = vmatprep.subr.bf16.mxu0 %v1221
        %1268 = vmatpush1.bf16.msra.mxu0 %v1220
        %1269 = vmatprep.subr.bf16.mxu0 %v1224
        %1270 = vmatpush1.bf16.msra.mxu0 %v1223
        %1271 = vmatprep.subr.bf16.mxu0 %v1227
        %1272 = vmatpush1.bf16.msra.mxu0 %v1226
        %1273 = vmatprep.subr.bf16.mxu0 %v1230
        %1274 = vmatpush1.bf16.msra.mxu0 %v1229
        %1275 = vmatprep.subr.bf16.mxu0 %v1233
        %1276 = vmatpush1.bf16.msra.mxu0 %v1232
        %1277 = vmatprep.subr.bf16.mxu0 %v1236
        %1278 = vmatpush1.bf16.msra.mxu0 %v1235
        %1279 = vmatprep.subr.bf16.mxu0 %v1239
        %1280 = vmatpush1.bf16.msra.mxu0 %v1238
        %1281 = vmatprep.subr.bf16.mxu0 0
        %1282 = vmatpush1.bf16.msra.mxu0 0
        %1283 = vmatprep.subr.bf16.mxu0 0
        %1284 = vmatpush1.bf16.msra.mxu0 0
        %1285 = vmatprep.subr.bf16.mxu0 0
        %1286 = vmatpush1.bf16.msra.mxu0 0
        %1287 = vmatprep.subr.bf16.mxu0 0
        %1288 = vmatpush1.bf16.msra.mxu0 0
        %1289 = vmatprep.subr.bf16.mxu0 0
        %1290 = vmatpush1.bf16.msra.mxu0 0
        %1291 = vmatprep.subr.bf16.mxu0 0
        %1292 = vmatpush1.bf16.msra.mxu0 0
        %1293 = vmatprep.subr.bf16.mxu0 0
        %1294 = vmatpush1.bf16.msra.mxu0 0
        %1295 = vmatprep.subr.bf16.mxu0 0
        %1296 = vmatpush1.bf16.msra.mxu0 0
        %1297 = vmatprep.mubr.bf16.mxu0 0
        %1298 = vmatmul.mubr.bf16.gmra.mrb[0].mxu0 %v1119
        %v1299 = vpop.f32.mrb[0].mxu0
        %v1300 = vadd.f32 %v1125, %v1299
        %v1301 = vpop.f32.mrb[0].mxu0
        %v1302 = vadd.f32 %v1129, %v1301
        %v1303 = vpop.f32.mrb[0].mxu0
        %v1304 = vadd.f32 %v1125, %v1303
        %v1305 = vpop.f32.mrb[0].mxu0
        %v1306 = vadd.f32 %v1129, %v1305
        %1307 = vmatprep.mubr.bf16.mxu0 0
        %1308 = vmatmul.mubr.bf16.gmra.mrb[0].mxu0 %v1120
        %v1309 = vpop.f32.mrb[0].mxu0
        %v1310 = vadd.f32 %v1125, %v1309
        %v1311 = vpop.f32.mrb[0].mxu0
        %v1312 = vadd.f32 %v1129, %v1311
        %v1313 = vpop.f32.mrb[0].mxu0
        %v1314 = vadd.f32 %v1125, %v1313
        %v1315 = vpop.f32.mrb[0].mxu0
        %v1316 = vadd.f32 %v1129, %v1315
        %1317 = vdwg.mxu0
        %1318 = vmatprep.subr.bf16.mxu0 0
        %1319 = vmatpush1.bf16.msra.mxu0 %v1219
        %1320 = vmatprep.subr.bf16.mxu0 0
        %1321 = vmatpush1.bf16.msra.mxu0 %v1222
        %1322 = vmatprep.subr.bf16.mxu0 0
        %1323 = vmatpush1.bf16.msra.mxu0 %v1225
        %1324 = vmatprep.subr.bf16.mxu0 0
        %1325 = vmatpush1.bf16.msra.mxu0 %v1228
        %1326 = vmatprep.subr.bf16.mxu0 0
        %1327 = vmatpush1.bf16.msra.mxu0 %v1231
        %1328 = vmatprep.subr.bf16.mxu0 0
        %1329 = vmatpush1.bf16.msra.mxu0 %v1234
        %1330 = vmatprep.subr.bf16.mxu0 0
        %1331 = vmatpush1.bf16.msra.mxu0 %v1237
        %1332 = vmatprep.subr.bf16.mxu0 0
        %1333 = vmatpush1.bf16.msra.mxu0 %v1240
        %1334 = vmatprep.subr.bf16.mxu0 0
        %1335 = vmatpush1.bf16.msra.mxu0 0
        %1336 = vmatprep.subr.bf16.mxu0 0
        %1337 = vmatpush1.bf16.msra.mxu0 0
        %1338 = vmatprep.subr.bf16.mxu0 0
        %1339 = vmatpush1.bf16.msra.mxu0 0
        %1340 = vmatprep.subr.bf16.mxu0 0
        %1341 = vmatpush1.bf16.msra.mxu0 0
        %1342 = vmatprep.subr.bf16.mxu0 0
        %1343 = vmatpush1.bf16.msra.mxu0 0
        %1344 = vmatprep.subr.bf16.mxu0 0
        %1345 = vmatpush1.bf16.msra.mxu0 0
        %1346 = vmatprep.subr.bf16.mxu0 0
        %1347 = vmatpush1.bf16.msra.mxu0 0
        %1348 = vmatprep.subr.bf16.mxu0 0
        %1349 = vmatpush1.bf16.msra.mxu0 0
        %1350 = vmatprep.mubr.bf16.mxu0 0
        %1351 = vmatmul.mubr.bf16.gmra.mrb[0].mxu0 %v1119
        %v1352 = vpop.f32.mrb[0].mxu0
        %v1353 = vadd.f32 %v1133, %v1352
        %v1354 = vpop.f32.mrb[0].mxu0
        %v1355 = vpop.f32.mrb[0].mxu0
        %v1356 = vadd.f32 %v1133, %v1355
        %v1357 = vpop.f32.mrb[0].mxu0
        %1358 = vmatprep.mubr.bf16.mxu0 0
        %1359 = vmatmul.mubr.bf16.gmra.mrb[0].mxu0 %v1120
        %v1360 = vpop.f32.mrb[0].mxu0
        %v1361 = vadd.f32 %v1133, %v1360
        %v1362 = vpop.f32.mrb[0].mxu0
        %v1363 = vpop.f32.mrb[0].mxu0
        %v1364 = vadd.f32 %v1133, %v1363
        %v1365 = vpop.f32.mrb[0].mxu0
        %1366 = vdwg.mxu0
        %1371 = vrot.lane.b32.xlu0 %v1300, 96
        %v1372 = vpop.permute.xlu0 %1371
        %1373 = vrot.lane.b32.xlu0 %v1304, 96
        %v1374 = vpop.permute.xlu0 %1373
        %1375 = vrot.lane.b32.xlu0 %v1310, 96
        %v1376 = vpop.permute.xlu0 %1375
        %1377 = vrot.lane.b32.xlu0 %v1314, 96
        %v1378 = vpop.permute.xlu0 %1377
        %1383 = vrot.lane.b32.xlu0 %v1300, 64
        %v1384 = vpop.permute.xlu0 %1383
        %1385 = vrot.lane.b32.xlu0 %v1304, 64
        %v1386 = vpop.permute.xlu0 %1385
        %1387 = vrot.lane.b32.xlu0 %v1310, 64
        %v1388 = vpop.permute.xlu0 %1387
        %1389 = vrot.lane.b32.xlu0 %v1314, 64
        %v1390 = vpop.permute.xlu0 %1389
        %1395 = vrot.lane.b32.xlu0 %v1300, 32
        %v1396 = vpop.permute.xlu0 %1395
        %1397 = vrot.lane.b32.xlu0 %v1304, 32
        %v1398 = vpop.permute.xlu0 %1397
        %1399 = vrot.lane.b32.xlu0 %v1310, 32
        %v1400 = vpop.permute.xlu0 %1399
        %1401 = vrot.lane.b32.xlu0 %v1314, 32
        %v1402 = vpop.permute.xlu0 %1401
        %v1407 = vpack.c.bf16 %v1300, %v1300
        %v1408 = vpack.c.bf16 %v1304, %v1304
        %v1409 = vpack.c.bf16 %v1310, %v1310
        %v1410 = vpack.c.bf16 %v1314, %v1314
        %v1411 = vpack.c.bf16 %v1372, %v1372
        %v1412 = vpack.c.bf16 %v1374, %v1374
        %v1413 = vpack.c.bf16 %v1376, %v1376
        %v1414 = vpack.c.bf16 %v1378, %v1378
        %v1415 = vpack.c.bf16 %v1384, %v1384
        %v1416 = vpack.c.bf16 %v1386, %v1386
        %v1417 = vpack.c.bf16 %v1388, %v1388
        %v1418 = vpack.c.bf16 %v1390, %v1390
        %v1419 = vpack.c.bf16 %v1396, %v1396
        %v1420 = vpack.c.bf16 %v1398, %v1398
        %v1421 = vpack.c.bf16 %v1400, %v1400
        %v1422 = vpack.c.bf16 %v1402, %v1402
        %1427 = vrot.lane.b32.xlu0 %v1302, 96
        %v1428 = vpop.permute.xlu0 %1427
        %1429 = vrot.lane.b32.xlu0 %v1306, 96
        %v1430 = vpop.permute.xlu0 %1429
        %1431 = vrot.lane.b32.xlu0 %v1312, 96
        %v1432 = vpop.permute.xlu0 %1431
        %1433 = vrot.lane.b32.xlu0 %v1316, 96
        %v1434 = vpop.permute.xlu0 %1433
        %1439 = vrot.lane.b32.xlu0 %v1302, 64
        %v1440 = vpop.permute.xlu0 %1439
        %1441 = vrot.lane.b32.xlu0 %v1306, 64
        %v1442 = vpop.permute.xlu0 %1441
        %1443 = vrot.lane.b32.xlu0 %v1312, 64
        %v1444 = vpop.permute.xlu0 %1443
        %1445 = vrot.lane.b32.xlu0 %v1316, 64
        %v1446 = vpop.permute.xlu0 %1445
        %1451 = vrot.lane.b32.xlu0 %v1302, 32
        %v1452 = vpop.permute.xlu0 %1451
        %1453 = vrot.lane.b32.xlu0 %v1306, 32
        %v1454 = vpop.permute.xlu0 %1453
        %1455 = vrot.lane.b32.xlu0 %v1312, 32
        %v1456 = vpop.permute.xlu0 %1455
        %1457 = vrot.lane.b32.xlu0 %v1316, 32
        %v1458 = vpop.permute.xlu0 %1457
        %v1463 = vpack.c.bf16 %v1302, %v1302
        %v1464 = vpack.c.bf16 %v1306, %v1306
        %v1465 = vpack.c.bf16 %v1312, %v1312
        %v1466 = vpack.c.bf16 %v1316, %v1316
        %v1467 = vpack.c.bf16 %v1428, %v1428
        %v1468 = vpack.c.bf16 %v1430, %v1430
        %v1469 = vpack.c.bf16 %v1432, %v1432
        %v1470 = vpack.c.bf16 %v1434, %v1434
        %v1471 = vpack.c.bf16 %v1440, %v1440
        %v1472 = vpack.c.bf16 %v1442, %v1442
        %v1473 = vpack.c.bf16 %v1444, %v1444
        %v1474 = vpack.c.bf16 %v1446, %v1446
        %v1475 = vpack.c.bf16 %v1452, %v1452
        %v1476 = vpack.c.bf16 %v1454, %v1454
        %v1477 = vpack.c.bf16 %v1456, %v1456
        %v1478 = vpack.c.bf16 %v1458, %v1458
        %1483 = vrot.lane.b32.xlu0 %v1353, 96
        %v1484 = vpop.permute.xlu0 %1483
        %1485 = vrot.lane.b32.xlu0 %v1356, 96
        %v1486 = vpop.permute.xlu0 %1485
        %1487 = vrot.lane.b32.xlu0 %v1361, 96
        %v1488 = vpop.permute.xlu0 %1487
        %1489 = vrot.lane.b32.xlu0 %v1364, 96
        %v1490 = vpop.permute.xlu0 %1489
        %1495 = vrot.lane.b32.xlu0 %v1353, 64
        %v1496 = vpop.permute.xlu0 %1495
        %1497 = vrot.lane.b32.xlu0 %v1356, 64
        %v1498 = vpop.permute.xlu0 %1497
        %1499 = vrot.lane.b32.xlu0 %v1361, 64
        %v1500 = vpop.permute.xlu0 %1499
        %1501 = vrot.lane.b32.xlu0 %v1364, 64
        %v1502 = vpop.permute.xlu0 %1501
        %1507 = vrot.lane.b32.xlu0 %v1353, 32
        %v1508 = vpop.permute.xlu0 %1507
        %1509 = vrot.lane.b32.xlu0 %v1356, 32
        %v1510 = vpop.permute.xlu0 %1509
        %1511 = vrot.lane.b32.xlu0 %v1361, 32
        %v1512 = vpop.permute.xlu0 %1511
        %1513 = vrot.lane.b32.xlu0 %v1364, 32
        %v1514 = vpop.permute.xlu0 %1513
        %v1519 = vpack.c.bf16 %v1353, %v1353
        %v1520 = vpack.c.bf16 %v1356, %v1356
        %v1521 = vpack.c.bf16 %v1361, %v1361
        %v1522 = vpack.c.bf16 %v1364, %v1364
        %v1523 = vpack.c.bf16 %v1484, %v1484
        %v1524 = vpack.c.bf16 %v1486, %v1486
        %v1525 = vpack.c.bf16 %v1488, %v1488
        %v1526 = vpack.c.bf16 %v1490, %v1490
        %v1527 = vpack.c.bf16 %v1496, %v1496
        %v1528 = vpack.c.bf16 %v1498, %v1498
        %v1529 = vpack.c.bf16 %v1500, %v1500
        %v1530 = vpack.c.bf16 %v1502, %v1502
        %v1531 = vpack.c.bf16 %v1508, %v1508
        %v1532 = vpack.c.bf16 %v1510, %v1510
        %v1533 = vpack.c.bf16 %v1512, %v1512
        %v1534 = vpack.c.bf16 %v1514, %v1514
        %vm1535 = vcmask 261120
        %v1537 = vsel %vm1535, %v1407, 0
        %v1540 = vsel %vm1535, %v1463, 0
        %1542 = vmatprep.subr.bf16.mxu0 0
        %1543 = vmatpush1.bf16.xpose.msra.mxu0 %v1540
        %1544 = vmatprep.subr.bf16.mxu0 0
        %1545 = vmatpush1.bf16.xpose.msra.mxu0 0
        %1546 = vmatprep.subr.bf16.mxu0 0
        %1547 = vmatpush1.bf16.xpose.msra.mxu0 0
        %1548 = vmatprep.subr.bf16.mxu0 0
        %1549 = vmatpush1.bf16.xpose.msra.mxu0 0
        %1550 = vmatprep.subr.bf16.mxu0 0
        %1551 = vmatpush1.bf16.xpose.msra.mxu0 0
        %1552 = vmatprep.subr.bf16.mxu0 0
        %1553 = vmatpush1.bf16.xpose.msra.mxu0 0
        %1554 = vmatprep.subr.bf16.mxu0 0
        %1555 = vmatpush1.bf16.xpose.msra.mxu0 0
        %1556 = vmatprep.subr.bf16.mxu0 0
        %1557 = vmatpush1.bf16.xpose.msra.mxu0 0
        %1558 = vmatprep.subr.bf16.mxu0 0
        %1559 = vmatpush1.bf16.xpose.msra.mxu0 0
        %1560 = vmatprep.subr.bf16.mxu0 0
        %1561 = vmatpush1.bf16.xpose.msra.mxu0 0
        %1562 = vmatprep.subr.bf16.mxu0 0
        %1563 = vmatpush1.bf16.xpose.msra.mxu0 0
        %1564 = vmatprep.subr.bf16.mxu0 0
        %1565 = vmatpush1.bf16.xpose.msra.mxu0 0
        %1566 = vmatprep.subr.bf16.mxu0 0
        %1567 = vmatpush1.bf16.xpose.msra.mxu0 0
        %1568 = vmatprep.subr.bf16.mxu0 0
        %1569 = vmatpush1.bf16.xpose.msra.mxu0 0
        %1570 = vmatprep.subr.bf16.mxu0 0
        %1571 = vmatpush1.bf16.xpose.msra.mxu0 0
        %1572 = vmatprep.subr.bf16.mxu0 0
        %1573 = vmatpush1.bf16.xpose.msra.mxu0 0
        %1574 = vmatprep.mubr.bf16.mxu0 0
        %1575 = vmatmul.mubr.bf16.gmra.mrb[0].mxu0 %v1537
        %v1576 = vpop.f32.mrb[0].mxu0
        %v1577 = vadd.f32 %v893, %v1576
        %v1578 = vpop.f32.mrb[0].mxu0
        %v1579 = vpop.f32.mrb[0].mxu0
        %v1580 = vpop.f32.mrb[0].mxu0
        %1581 = vdwg.mxu0
        %v1583 = vsel %vm1535, %v1408, 0
        %v1586 = vsel %vm1535, %v1464, 0
        %1588 = vmatprep.subr.bf16.mxu0 0
        %1589 = vmatpush1.bf16.xpose.msra.mxu0 %v1586
        %1590 = vmatprep.subr.bf16.mxu0 0
        %1591 = vmatpush1.bf16.xpose.msra.mxu0 0
        %1592 = vmatprep.subr.bf16.mxu0 0
        %1593 = vmatpush1.bf16.xpose.msra.mxu0 0
        %1594 = vmatprep.subr.bf16.mxu0 0
        %1595 = vmatpush1.bf16.xpose.msra.mxu0 0
        %1596 = vmatprep.subr.bf16.mxu0 0
        %1597 = vmatpush1.bf16.xpose.msra.mxu0 0
        %1598 = vmatprep.subr.bf16.mxu0 0
        %1599 = vmatpush1.bf16.xpose.msra.mxu0 0
        %1600 = vmatprep.subr.bf16.mxu0 0
        %1601 = vmatpush1.bf16.xpose.msra.mxu0 0
        %1602 = vmatprep.subr.bf16.mxu0 0
        %1603 = vmatpush1.bf16.xpose.msra.mxu0 0
        %1604 = vmatprep.subr.bf16.mxu0 0
        %1605 = vmatpush1.bf16.xpose.msra.mxu0 0
        %1606 = vmatprep.subr.bf16.mxu0 0
        %1607 = vmatpush1.bf16.xpose.msra.mxu0 0
        %1608 = vmatprep.subr.bf16.mxu0 0
        %1609 = vmatpush1.bf16.xpose.msra.mxu0 0
        %1610 = vmatprep.subr.bf16.mxu0 0
        %1611 = vmatpush1.bf16.xpose.msra.mxu0 0
        %1612 = vmatprep.subr.bf16.mxu0 0
        %1613 = vmatpush1.bf16.xpose.msra.mxu0 0
        %1614 = vmatprep.subr.bf16.mxu0 0
        %1615 = vmatpush1.bf16.xpose.msra.mxu0 0
        %1616 = vmatprep.subr.bf16.mxu0 0
        %1617 = vmatpush1.bf16.xpose.msra.mxu0 0
        %1618 = vmatprep.subr.bf16.mxu0 0
        %1619 = vmatpush1.bf16.xpose.msra.mxu0 0
        %1620 = vmatprep.mubr.bf16.mxu0 0
        %1621 = vmatmul.mubr.bf16.gmra.mrb[0].mxu0 %v1583
        %v1622 = vpop.f32.mrb[0].mxu0
        %v1623 = vadd.f32 %v893, %v1622
        %v1624 = vpop.f32.mrb[0].mxu0
        %v1625 = vpop.f32.mrb[0].mxu0
        %v1626 = vpop.f32.mrb[0].mxu0
        %1627 = vdwg.mxu0
        %v1629 = vsel %vm1535, %v1409, 0
        %v1632 = vsel %vm1535, %v1465, 0
        %1634 = vmatprep.subr.bf16.mxu0 0
        %1635 = vmatpush1.bf16.xpose.msra.mxu0 %v1632
        %1636 = vmatprep.subr.bf16.mxu0 0
        %1637 = vmatpush1.bf16.xpose.msra.mxu0 0
        %1638 = vmatprep.subr.bf16.mxu0 0
        %1639 = vmatpush1.bf16.xpose.msra.mxu0 0
        %1640 = vmatprep.subr.bf16.mxu0 0
        %1641 = vmatpush1.bf16.xpose.msra.mxu0 0
        %1642 = vmatprep.subr.bf16.mxu0 0
        %1643 = vmatpush1.bf16.xpose.msra.mxu0 0
        %1644 = vmatprep.subr.bf16.mxu0 0
        %1645 = vmatpush1.bf16.xpose.msra.mxu0 0
        %1646 = vmatprep.subr.bf16.mxu0 0
        %1647 = vmatpush1.bf16.xpose.msra.mxu0 0
        %1648 = vmatprep.subr.bf16.mxu0 0
        %1649 = vmatpush1.bf16.xpose.msra.mxu0 0
        %1650 = vmatprep.subr.bf16.mxu0 0
        %1651 = vmatpush1.bf16.xpose.msra.mxu0 0
        %1652 = vmatprep.subr.bf16.mxu0 0
        %1653 = vmatpush1.bf16.xpose.msra.mxu0 0
        %1654 = vmatprep.subr.bf16.mxu0 0
        %1655 = vmatpush1.bf16.xpose.msra.mxu0 0
        %1656 = vmatprep.subr.bf16.mxu0 0
        %1657 = vmatpush1.bf16.xpose.msra.mxu0 0
        %1658 = vmatprep.subr.bf16.mxu0 0
        %1659 = vmatpush1.bf16.xpose.msra.mxu0 0
        %1660 = vmatprep.subr.bf16.mxu0 0
        %1661 = vmatpush1.bf16.xpose.msra.mxu0 0
        %1662 = vmatprep.subr.bf16.mxu0 0
        %1663 = vmatpush1.bf16.xpose.msra.mxu0 0
        %1664 = vmatprep.subr.bf16.mxu0 0
        %1665 = vmatpush1.bf16.xpose.msra.mxu0 0
        %1666 = vmatprep.mubr.bf16.mxu0 0
        %1667 = vmatmul.mubr.bf16.gmra.mrb[0].mxu0 %v1629
        %v1668 = vpop.f32.mrb[0].mxu0
        %v1669 = vadd.f32 %v893, %v1668
        %v1670 = vpop.f32.mrb[0].mxu0
        %v1671 = vpop.f32.mrb[0].mxu0
        %v1672 = vpop.f32.mrb[0].mxu0
        %1673 = vdwg.mxu0
        %v1675 = vsel %vm1535, %v1410, 0
        %v1678 = vsel %vm1535, %v1466, 0
        %1680 = vmatprep.subr.bf16.mxu0 0
        %1681 = vmatpush1.bf16.xpose.msra.mxu0 %v1678
        %1682 = vmatprep.subr.bf16.mxu0 0
        %1683 = vmatpush1.bf16.xpose.msra.mxu0 0
        %1684 = vmatprep.subr.bf16.mxu0 0
        %1685 = vmatpush1.bf16.xpose.msra.mxu0 0
        %1686 = vmatprep.subr.bf16.mxu0 0
        %1687 = vmatpush1.bf16.xpose.msra.mxu0 0
        %1688 = vmatprep.subr.bf16.mxu0 0
        %1689 = vmatpush1.bf16.xpose.msra.mxu0 0
        %1690 = vmatprep.subr.bf16.mxu0 0
        %1691 = vmatpush1.bf16.xpose.msra.mxu0 0
        %1692 = vmatprep.subr.bf16.mxu0 0
        %1693 = vmatpush1.bf16.xpose.msra.mxu0 0
        %1694 = vmatprep.subr.bf16.mxu0 0
        %1695 = vmatpush1.bf16.xpose.msra.mxu0 0
        %1696 = vmatprep.subr.bf16.mxu0 0
        %1697 = vmatpush1.bf16.xpose.msra.mxu0 0
        %1698 = vmatprep.subr.bf16.mxu0 0
        %1699 = vmatpush1.bf16.xpose.msra.mxu0 0
        %1700 = vmatprep.subr.bf16.mxu0 0
        %1701 = vmatpush1.bf16.xpose.msra.mxu0 0
        %1702 = vmatprep.subr.bf16.mxu0 0
        %1703 = vmatpush1.bf16.xpose.msra.mxu0 0
        %1704 = vmatprep.subr.bf16.mxu0 0
        %1705 = vmatpush1.bf16.xpose.msra.mxu0 0
        %1706 = vmatprep.subr.bf16.mxu0 0
        %1707 = vmatpush1.bf16.xpose.msra.mxu0 0
        %1708 = vmatprep.subr.bf16.mxu0 0
        %1709 = vmatpush1.bf16.xpose.msra.mxu0 0
        %1710 = vmatprep.subr.bf16.mxu0 0
        %1711 = vmatpush1.bf16.xpose.msra.mxu0 0
        %1712 = vmatprep.mubr.bf16.mxu0 0
        %1713 = vmatmul.mubr.bf16.gmra.mrb[0].mxu0 %v1675
        %v1714 = vpop.f32.mrb[0].mxu0
        %v1715 = vadd.f32 %v893, %v1714
        %v1716 = vpop.f32.mrb[0].mxu0
        %v1717 = vpop.f32.mrb[0].mxu0
        %v1718 = vpop.f32.mrb[0].mxu0
        %1719 = vdwg.mxu0
        %v1721 = vsel %vm1535, %v1411, 0
        %v1724 = vsel %vm1535, %v1467, 0
        %1726 = vmatprep.subr.bf16.mxu0 0
        %1727 = vmatpush1.bf16.xpose.msra.mxu0 %v1724
        %1728 = vmatprep.subr.bf16.mxu0 0
        %1729 = vmatpush1.bf16.xpose.msra.mxu0 0
        %1730 = vmatprep.subr.bf16.mxu0 0
        %1731 = vmatpush1.bf16.xpose.msra.mxu0 0
        %1732 = vmatprep.subr.bf16.mxu0 0
        %1733 = vmatpush1.bf16.xpose.msra.mxu0 0
        %1734 = vmatprep.subr.bf16.mxu0 0
        %1735 = vmatpush1.bf16.xpose.msra.mxu0 0
        %1736 = vmatprep.subr.bf16.mxu0 0
        %1737 = vmatpush1.bf16.xpose.msra.mxu0 0
        %1738 = vmatprep.subr.bf16.mxu0 0
        %1739 = vmatpush1.bf16.xpose.msra.mxu0 0
        %1740 = vmatprep.subr.bf16.mxu0 0
        %1741 = vmatpush1.bf16.xpose.msra.mxu0 0
        %1742 = vmatprep.subr.bf16.mxu0 0
        %1743 = vmatpush1.bf16.xpose.msra.mxu0 0
        %1744 = vmatprep.subr.bf16.mxu0 0
        %1745 = vmatpush1.bf16.xpose.msra.mxu0 0
        %1746 = vmatprep.subr.bf16.mxu0 0
        %1747 = vmatpush1.bf16.xpose.msra.mxu0 0
        %1748 = vmatprep.subr.bf16.mxu0 0
        %1749 = vmatpush1.bf16.xpose.msra.mxu0 0
        %1750 = vmatprep.subr.bf16.mxu0 0
        %1751 = vmatpush1.bf16.xpose.msra.mxu0 0
        %1752 = vmatprep.subr.bf16.mxu0 0
        %1753 = vmatpush1.bf16.xpose.msra.mxu0 0
        %1754 = vmatprep.subr.bf16.mxu0 0
        %1755 = vmatpush1.bf16.xpose.msra.mxu0 0
        %1756 = vmatprep.subr.bf16.mxu0 0
        %1757 = vmatpush1.bf16.xpose.msra.mxu0 0
        %1758 = vmatprep.mubr.bf16.mxu0 0
        %1759 = vmatmul.mubr.bf16.gmra.mrb[0].mxu0 %v1721
        %v1760 = vpop.f32.mrb[0].mxu0
        %v1761 = vadd.f32 %v893, %v1760
        %v1762 = vpop.f32.mrb[0].mxu0
        %v1763 = vpop.f32.mrb[0].mxu0
        %v1764 = vpop.f32.mrb[0].mxu0
        %1765 = vdwg.mxu0
        %v1767 = vsel %vm1535, %v1412, 0
        %v1770 = vsel %vm1535, %v1468, 0
        %1772 = vmatprep.subr.bf16.mxu0 0
        %1773 = vmatpush1.bf16.xpose.msra.mxu0 %v1770
        %1774 = vmatprep.subr.bf16.mxu0 0
        %1775 = vmatpush1.bf16.xpose.msra.mxu0 0
        %1776 = vmatprep.subr.bf16.mxu0 0
        %1777 = vmatpush1.bf16.xpose.msra.mxu0 0
        %1778 = vmatprep.subr.bf16.mxu0 0
        %1779 = vmatpush1.bf16.xpose.msra.mxu0 0
        %1780 = vmatprep.subr.bf16.mxu0 0
        %1781 = vmatpush1.bf16.xpose.msra.mxu0 0
        %1782 = vmatprep.subr.bf16.mxu0 0
        %1783 = vmatpush1.bf16.xpose.msra.mxu0 0
        %1784 = vmatprep.subr.bf16.mxu0 0
        %1785 = vmatpush1.bf16.xpose.msra.mxu0 0
        %1786 = vmatprep.subr.bf16.mxu0 0
        %1787 = vmatpush1.bf16.xpose.msra.mxu0 0
        %1788 = vmatprep.subr.bf16.mxu0 0
        %1789 = vmatpush1.bf16.xpose.msra.mxu0 0
        %1790 = vmatprep.subr.bf16.mxu0 0
        %1791 = vmatpush1.bf16.xpose.msra.mxu0 0
        %1792 = vmatprep.subr.bf16.mxu0 0
        %1793 = vmatpush1.bf16.xpose.msra.mxu0 0
        %1794 = vmatprep.subr.bf16.mxu0 0
        %1795 = vmatpush1.bf16.xpose.msra.mxu0 0
        %1796 = vmatprep.subr.bf16.mxu0 0
        %1797 = vmatpush1.bf16.xpose.msra.mxu0 0
        %1798 = vmatprep.subr.bf16.mxu0 0
        %1799 = vmatpush1.bf16.xpose.msra.mxu0 0
        %1800 = vmatprep.subr.bf16.mxu0 0
        %1801 = vmatpush1.bf16.xpose.msra.mxu0 0
        %1802 = vmatprep.subr.bf16.mxu0 0
        %1803 = vmatpush1.bf16.xpose.msra.mxu0 0
        %1804 = vmatprep.mubr.bf16.mxu0 0
        %1805 = vmatmul.mubr.bf16.gmra.mrb[0].mxu0 %v1767
        %v1806 = vpop.f32.mrb[0].mxu0
        %v1807 = vadd.f32 %v893, %v1806
        %v1808 = vpop.f32.mrb[0].mxu0
        %v1809 = vpop.f32.mrb[0].mxu0
        %v1810 = vpop.f32.mrb[0].mxu0
        %1811 = vdwg.mxu0
        %v1813 = vsel %vm1535, %v1413, 0
        %v1816 = vsel %vm1535, %v1469, 0
        %1818 = vmatprep.subr.bf16.mxu0 0
        %1819 = vmatpush1.bf16.xpose.msra.mxu0 %v1816
        %1820 = vmatprep.subr.bf16.mxu0 0
        %1821 = vmatpush1.bf16.xpose.msra.mxu0 0
        %1822 = vmatprep.subr.bf16.mxu0 0
        %1823 = vmatpush1.bf16.xpose.msra.mxu0 0
        %1824 = vmatprep.subr.bf16.mxu0 0
        %1825 = vmatpush1.bf16.xpose.msra.mxu0 0
        %1826 = vmatprep.subr.bf16.mxu0 0
        %1827 = vmatpush1.bf16.xpose.msra.mxu0 0
        %1828 = vmatprep.subr.bf16.mxu0 0
        %1829 = vmatpush1.bf16.xpose.msra.mxu0 0
        %1830 = vmatprep.subr.bf16.mxu0 0
        %1831 = vmatpush1.bf16.xpose.msra.mxu0 0
        %1832 = vmatprep.subr.bf16.mxu0 0
        %1833 = vmatpush1.bf16.xpose.msra.mxu0 0
        %1834 = vmatprep.subr.bf16.mxu0 0
        %1835 = vmatpush1.bf16.xpose.msra.mxu0 0
        %1836 = vmatprep.subr.bf16.mxu0 0
        %1837 = vmatpush1.bf16.xpose.msra.mxu0 0
        %1838 = vmatprep.subr.bf16.mxu0 0
        %1839 = vmatpush1.bf16.xpose.msra.mxu0 0
        %1840 = vmatprep.subr.bf16.mxu0 0
        %1841 = vmatpush1.bf16.xpose.msra.mxu0 0
        %1842 = vmatprep.subr.bf16.mxu0 0
        %1843 = vmatpush1.bf16.xpose.msra.mxu0 0
        %1844 = vmatprep.subr.bf16.mxu0 0
        %1845 = vmatpush1.bf16.xpose.msra.mxu0 0
        %1846 = vmatprep.subr.bf16.mxu0 0
        %1847 = vmatpush1.bf16.xpose.msra.mxu0 0
        %1848 = vmatprep.subr.bf16.mxu0 0
        %1849 = vmatpush1.bf16.xpose.msra.mxu0 0
        %1850 = vmatprep.mubr.bf16.mxu0 0
        %1851 = vmatmul.mubr.bf16.gmra.mrb[0].mxu0 %v1813
        %v1852 = vpop.f32.mrb[0].mxu0
        %v1853 = vadd.f32 %v893, %v1852
        %v1854 = vpop.f32.mrb[0].mxu0
        %v1855 = vpop.f32.mrb[0].mxu0
        %v1856 = vpop.f32.mrb[0].mxu0
        %1857 = vdwg.mxu0
        %v1859 = vsel %vm1535, %v1414, 0
        %v1862 = vsel %vm1535, %v1470, 0
        %1864 = vmatprep.subr.bf16.mxu0 0
        %1865 = vmatpush1.bf16.xpose.msra.mxu0 %v1862
        %1866 = vmatprep.subr.bf16.mxu0 0
        %1867 = vmatpush1.bf16.xpose.msra.mxu0 0
        %1868 = vmatprep.subr.bf16.mxu0 0
        %1869 = vmatpush1.bf16.xpose.msra.mxu0 0
        %1870 = vmatprep.subr.bf16.mxu0 0
        %1871 = vmatpush1.bf16.xpose.msra.mxu0 0
        %1872 = vmatprep.subr.bf16.mxu0 0
        %1873 = vmatpush1.bf16.xpose.msra.mxu0 0
        %1874 = vmatprep.subr.bf16.mxu0 0
        %1875 = vmatpush1.bf16.xpose.msra.mxu0 0
        %1876 = vmatprep.subr.bf16.mxu0 0
        %1877 = vmatpush1.bf16.xpose.msra.mxu0 0
        %1878 = vmatprep.subr.bf16.mxu0 0
        %1879 = vmatpush1.bf16.xpose.msra.mxu0 0
        %1880 = vmatprep.subr.bf16.mxu0 0
        %1881 = vmatpush1.bf16.xpose.msra.mxu0 0
        %1882 = vmatprep.subr.bf16.mxu0 0
        %1883 = vmatpush1.bf16.xpose.msra.mxu0 0
        %1884 = vmatprep.subr.bf16.mxu0 0
        %1885 = vmatpush1.bf16.xpose.msra.mxu0 0
        %1886 = vmatprep.subr.bf16.mxu0 0
        %1887 = vmatpush1.bf16.xpose.msra.mxu0 0
        %1888 = vmatprep.subr.bf16.mxu0 0
        %1889 = vmatpush1.bf16.xpose.msra.mxu0 0
        %1890 = vmatprep.subr.bf16.mxu0 0
        %1891 = vmatpush1.bf16.xpose.msra.mxu0 0
        %1892 = vmatprep.subr.bf16.mxu0 0
        %1893 = vmatpush1.bf16.xpose.msra.mxu0 0
        %1894 = vmatprep.subr.bf16.mxu0 0
        %1895 = vmatpush1.bf16.xpose.msra.mxu0 0
        %1896 = vmatprep.mubr.bf16.mxu0 0
        %1897 = vmatmul.mubr.bf16.gmra.mrb[0].mxu0 %v1859
        %v1898 = vpop.f32.mrb[0].mxu0
        %v1899 = vadd.f32 %v893, %v1898
        %v1900 = vpop.f32.mrb[0].mxu0
        %v1901 = vpop.f32.mrb[0].mxu0
        %v1902 = vpop.f32.mrb[0].mxu0
        %1903 = vdwg.mxu0
        %v1905 = vsel %vm1535, %v1415, 0
        %v1908 = vsel %vm1535, %v1471, 0
        %1910 = vmatprep.subr.bf16.mxu0 0
        %1911 = vmatpush1.bf16.xpose.msra.mxu0 %v1908
        %1912 = vmatprep.subr.bf16.mxu0 0
        %1913 = vmatpush1.bf16.xpose.msra.mxu0 0
        %1914 = vmatprep.subr.bf16.mxu0 0
        %1915 = vmatpush1.bf16.xpose.msra.mxu0 0
        %1916 = vmatprep.subr.bf16.mxu0 0
        %1917 = vmatpush1.bf16.xpose.msra.mxu0 0
        %1918 = vmatprep.subr.bf16.mxu0 0
        %1919 = vmatpush1.bf16.xpose.msra.mxu0 0
        %1920 = vmatprep.subr.bf16.mxu0 0
        %1921 = vmatpush1.bf16.xpose.msra.mxu0 0
        %1922 = vmatprep.subr.bf16.mxu0 0
        %1923 = vmatpush1.bf16.xpose.msra.mxu0 0
        %1924 = vmatprep.subr.bf16.mxu0 0
        %1925 = vmatpush1.bf16.xpose.msra.mxu0 0
        %1926 = vmatprep.subr.bf16.mxu0 0
        %1927 = vmatpush1.bf16.xpose.msra.mxu0 0
        %1928 = vmatprep.subr.bf16.mxu0 0
        %1929 = vmatpush1.bf16.xpose.msra.mxu0 0
        %1930 = vmatprep.subr.bf16.mxu0 0
        %1931 = vmatpush1.bf16.xpose.msra.mxu0 0
        %1932 = vmatprep.subr.bf16.mxu0 0
        %1933 = vmatpush1.bf16.xpose.msra.mxu0 0
        %1934 = vmatprep.subr.bf16.mxu0 0
        %1935 = vmatpush1.bf16.xpose.msra.mxu0 0
        %1936 = vmatprep.subr.bf16.mxu0 0
        %1937 = vmatpush1.bf16.xpose.msra.mxu0 0
        %1938 = vmatprep.subr.bf16.mxu0 0
        %1939 = vmatpush1.bf16.xpose.msra.mxu0 0
        %1940 = vmatprep.subr.bf16.mxu0 0
        %1941 = vmatpush1.bf16.xpose.msra.mxu0 0
        %1942 = vmatprep.mubr.bf16.mxu0 0
        %1943 = vmatmul.mubr.bf16.gmra.mrb[0].mxu0 %v1905
        %v1944 = vpop.f32.mrb[0].mxu0
        %v1945 = vadd.f32 %v893, %v1944
        %v1946 = vpop.f32.mrb[0].mxu0
        %v1947 = vpop.f32.mrb[0].mxu0
        %v1948 = vpop.f32.mrb[0].mxu0
        %1949 = vdwg.mxu0
        %v1951 = vsel %vm1535, %v1416, 0
        %v1954 = vsel %vm1535, %v1472, 0
        %1956 = vmatprep.subr.bf16.mxu0 0
        %1957 = vmatpush1.bf16.xpose.msra.mxu0 %v1954
        %1958 = vmatprep.subr.bf16.mxu0 0
        %1959 = vmatpush1.bf16.xpose.msra.mxu0 0
        %1960 = vmatprep.subr.bf16.mxu0 0
        %1961 = vmatpush1.bf16.xpose.msra.mxu0 0
        %1962 = vmatprep.subr.bf16.mxu0 0
        %1963 = vmatpush1.bf16.xpose.msra.mxu0 0
        %1964 = vmatprep.subr.bf16.mxu0 0
        %1965 = vmatpush1.bf16.xpose.msra.mxu0 0
        %1966 = vmatprep.subr.bf16.mxu0 0
        %1967 = vmatpush1.bf16.xpose.msra.mxu0 0
        %1968 = vmatprep.subr.bf16.mxu0 0
        %1969 = vmatpush1.bf16.xpose.msra.mxu0 0
        %1970 = vmatprep.subr.bf16.mxu0 0
        %1971 = vmatpush1.bf16.xpose.msra.mxu0 0
        %1972 = vmatprep.subr.bf16.mxu0 0
        %1973 = vmatpush1.bf16.xpose.msra.mxu0 0
        %1974 = vmatprep.subr.bf16.mxu0 0
        %1975 = vmatpush1.bf16.xpose.msra.mxu0 0
        %1976 = vmatprep.subr.bf16.mxu0 0
        %1977 = vmatpush1.bf16.xpose.msra.mxu0 0
        %1978 = vmatprep.subr.bf16.mxu0 0
        %1979 = vmatpush1.bf16.xpose.msra.mxu0 0
        %1980 = vmatprep.subr.bf16.mxu0 0
        %1981 = vmatpush1.bf16.xpose.msra.mxu0 0
        %1982 = vmatprep.subr.bf16.mxu0 0
        %1983 = vmatpush1.bf16.xpose.msra.mxu0 0
        %1984 = vmatprep.subr.bf16.mxu0 0
        %1985 = vmatpush1.bf16.xpose.msra.mxu0 0
        %1986 = vmatprep.subr.bf16.mxu0 0
        %1987 = vmatpush1.bf16.xpose.msra.mxu0 0
        %1988 = vmatprep.mubr.bf16.mxu0 0
        %1989 = vmatmul.mubr.bf16.gmra.mrb[0].mxu0 %v1951
        %v1990 = vpop.f32.mrb[0].mxu0
        %v1991 = vadd.f32 %v893, %v1990
        %v1992 = vpop.f32.mrb[0].mxu0
        %v1993 = vpop.f32.mrb[0].mxu0
        %v1994 = vpop.f32.mrb[0].mxu0
        %1995 = vdwg.mxu0
        %v1997 = vsel %vm1535, %v1417, 0
        %v2000 = vsel %vm1535, %v1473, 0
        %2002 = vmatprep.subr.bf16.mxu0 0
        %2003 = vmatpush1.bf16.xpose.msra.mxu0 %v2000
        %2004 = vmatprep.subr.bf16.mxu0 0
        %2005 = vmatpush1.bf16.xpose.msra.mxu0 0
        %2006 = vmatprep.subr.bf16.mxu0 0
        %2007 = vmatpush1.bf16.xpose.msra.mxu0 0
        %2008 = vmatprep.subr.bf16.mxu0 0
        %2009 = vmatpush1.bf16.xpose.msra.mxu0 0
        %2010 = vmatprep.subr.bf16.mxu0 0
        %2011 = vmatpush1.bf16.xpose.msra.mxu0 0
        %2012 = vmatprep.subr.bf16.mxu0 0
        %2013 = vmatpush1.bf16.xpose.msra.mxu0 0
        %2014 = vmatprep.subr.bf16.mxu0 0
        %2015 = vmatpush1.bf16.xpose.msra.mxu0 0
        %2016 = vmatprep.subr.bf16.mxu0 0
        %2017 = vmatpush1.bf16.xpose.msra.mxu0 0
        %2018 = vmatprep.subr.bf16.mxu0 0
        %2019 = vmatpush1.bf16.xpose.msra.mxu0 0
        %2020 = vmatprep.subr.bf16.mxu0 0
        %2021 = vmatpush1.bf16.xpose.msra.mxu0 0
        %2022 = vmatprep.subr.bf16.mxu0 0
        %2023 = vmatpush1.bf16.xpose.msra.mxu0 0
        %2024 = vmatprep.subr.bf16.mxu0 0
        %2025 = vmatpush1.bf16.xpose.msra.mxu0 0
        %2026 = vmatprep.subr.bf16.mxu0 0
        %2027 = vmatpush1.bf16.xpose.msra.mxu0 0
        %2028 = vmatprep.subr.bf16.mxu0 0
        %2029 = vmatpush1.bf16.xpose.msra.mxu0 0
        %2030 = vmatprep.subr.bf16.mxu0 0
        %2031 = vmatpush1.bf16.xpose.msra.mxu0 0
        %2032 = vmatprep.subr.bf16.mxu0 0
        %2033 = vmatpush1.bf16.xpose.msra.mxu0 0
        %2034 = vmatprep.mubr.bf16.mxu0 0
        %2035 = vmatmul.mubr.bf16.gmra.mrb[0].mxu0 %v1997
        %v2036 = vpop.f32.mrb[0].mxu0
        %v2037 = vadd.f32 %v893, %v2036
        %v2038 = vpop.f32.mrb[0].mxu0
        %v2039 = vpop.f32.mrb[0].mxu0
        %v2040 = vpop.f32.mrb[0].mxu0
        %2041 = vdwg.mxu0
        %v2043 = vsel %vm1535, %v1418, 0
        %v2046 = vsel %vm1535, %v1474, 0
        %2048 = vmatprep.subr.bf16.mxu0 0
        %2049 = vmatpush1.bf16.xpose.msra.mxu0 %v2046
        %2050 = vmatprep.subr.bf16.mxu0 0
        %2051 = vmatpush1.bf16.xpose.msra.mxu0 0
        %2052 = vmatprep.subr.bf16.mxu0 0
        %2053 = vmatpush1.bf16.xpose.msra.mxu0 0
        %2054 = vmatprep.subr.bf16.mxu0 0
        %2055 = vmatpush1.bf16.xpose.msra.mxu0 0
        %2056 = vmatprep.subr.bf16.mxu0 0
        %2057 = vmatpush1.bf16.xpose.msra.mxu0 0
        %2058 = vmatprep.subr.bf16.mxu0 0
        %2059 = vmatpush1.bf16.xpose.msra.mxu0 0
        %2060 = vmatprep.subr.bf16.mxu0 0
        %2061 = vmatpush1.bf16.xpose.msra.mxu0 0
        %2062 = vmatprep.subr.bf16.mxu0 0
        %2063 = vmatpush1.bf16.xpose.msra.mxu0 0
        %2064 = vmatprep.subr.bf16.mxu0 0
        %2065 = vmatpush1.bf16.xpose.msra.mxu0 0
        %2066 = vmatprep.subr.bf16.mxu0 0
        %2067 = vmatpush1.bf16.xpose.msra.mxu0 0
        %2068 = vmatprep.subr.bf16.mxu0 0
        %2069 = vmatpush1.bf16.xpose.msra.mxu0 0
        %2070 = vmatprep.subr.bf16.mxu0 0
        %2071 = vmatpush1.bf16.xpose.msra.mxu0 0
        %2072 = vmatprep.subr.bf16.mxu0 0
        %2073 = vmatpush1.bf16.xpose.msra.mxu0 0
        %2074 = vmatprep.subr.bf16.mxu0 0
        %2075 = vmatpush1.bf16.xpose.msra.mxu0 0
        %2076 = vmatprep.subr.bf16.mxu0 0
        %2077 = vmatpush1.bf16.xpose.msra.mxu0 0
        %2078 = vmatprep.subr.bf16.mxu0 0
        %2079 = vmatpush1.bf16.xpose.msra.mxu0 0
        %2080 = vmatprep.mubr.bf16.mxu0 0
        %2081 = vmatmul.mubr.bf16.gmra.mrb[0].mxu0 %v2043
        %v2082 = vpop.f32.mrb[0].mxu0
        %v2083 = vadd.f32 %v893, %v2082
        %v2084 = vpop.f32.mrb[0].mxu0
        %v2085 = vpop.f32.mrb[0].mxu0
        %v2086 = vpop.f32.mrb[0].mxu0
        %2087 = vdwg.mxu0
        %v2089 = vsel %vm1535, %v1419, 0
        %v2092 = vsel %vm1535, %v1475, 0
        %2094 = vmatprep.subr.bf16.mxu0 0
        %2095 = vmatpush1.bf16.xpose.msra.mxu0 %v2092
        %2096 = vmatprep.subr.bf16.mxu0 0
        %2097 = vmatpush1.bf16.xpose.msra.mxu0 0
        %2098 = vmatprep.subr.bf16.mxu0 0
        %2099 = vmatpush1.bf16.xpose.msra.mxu0 0
        %2100 = vmatprep.subr.bf16.mxu0 0
        %2101 = vmatpush1.bf16.xpose.msra.mxu0 0
        %2102 = vmatprep.subr.bf16.mxu0 0
        %2103 = vmatpush1.bf16.xpose.msra.mxu0 0
        %2104 = vmatprep.subr.bf16.mxu0 0
        %2105 = vmatpush1.bf16.xpose.msra.mxu0 0
        %2106 = vmatprep.subr.bf16.mxu0 0
        %2107 = vmatpush1.bf16.xpose.msra.mxu0 0
        %2108 = vmatprep.subr.bf16.mxu0 0
        %2109 = vmatpush1.bf16.xpose.msra.mxu0 0
        %2110 = vmatprep.subr.bf16.mxu0 0
        %2111 = vmatpush1.bf16.xpose.msra.mxu0 0
        %2112 = vmatprep.subr.bf16.mxu0 0
        %2113 = vmatpush1.bf16.xpose.msra.mxu0 0
        %2114 = vmatprep.subr.bf16.mxu0 0
        %2115 = vmatpush1.bf16.xpose.msra.mxu0 0
        %2116 = vmatprep.subr.bf16.mxu0 0
        %2117 = vmatpush1.bf16.xpose.msra.mxu0 0
        %2118 = vmatprep.subr.bf16.mxu0 0
        %2119 = vmatpush1.bf16.xpose.msra.mxu0 0
        %2120 = vmatprep.subr.bf16.mxu0 0
        %2121 = vmatpush1.bf16.xpose.msra.mxu0 0
        %2122 = vmatprep.subr.bf16.mxu0 0
        %2123 = vmatpush1.bf16.xpose.msra.mxu0 0
        %2124 = vmatprep.subr.bf16.mxu0 0
        %2125 = vmatpush1.bf16.xpose.msra.mxu0 0
        %2126 = vmatprep.mubr.bf16.mxu0 0
        %2127 = vmatmul.mubr.bf16.gmra.mrb[0].mxu0 %v2089
        %v2128 = vpop.f32.mrb[0].mxu0
        %v2129 = vadd.f32 %v893, %v2128
        %v2130 = vpop.f32.mrb[0].mxu0
        %v2131 = vpop.f32.mrb[0].mxu0
        %v2132 = vpop.f32.mrb[0].mxu0
        %2133 = vdwg.mxu0
        %v2135 = vsel %vm1535, %v1420, 0
        %v2138 = vsel %vm1535, %v1476, 0
        %2140 = vmatprep.subr.bf16.mxu0 0
        %2141 = vmatpush1.bf16.xpose.msra.mxu0 %v2138
        %2142 = vmatprep.subr.bf16.mxu0 0
        %2143 = vmatpush1.bf16.xpose.msra.mxu0 0
        %2144 = vmatprep.subr.bf16.mxu0 0
        %2145 = vmatpush1.bf16.xpose.msra.mxu0 0
        %2146 = vmatprep.subr.bf16.mxu0 0
        %2147 = vmatpush1.bf16.xpose.msra.mxu0 0
        %2148 = vmatprep.subr.bf16.mxu0 0
        %2149 = vmatpush1.bf16.xpose.msra.mxu0 0
        %2150 = vmatprep.subr.bf16.mxu0 0
        %2151 = vmatpush1.bf16.xpose.msra.mxu0 0
        %2152 = vmatprep.subr.bf16.mxu0 0
        %2153 = vmatpush1.bf16.xpose.msra.mxu0 0
        %2154 = vmatprep.subr.bf16.mxu0 0
        %2155 = vmatpush1.bf16.xpose.msra.mxu0 0
        %2156 = vmatprep.subr.bf16.mxu0 0
        %2157 = vmatpush1.bf16.xpose.msra.mxu0 0
        %2158 = vmatprep.subr.bf16.mxu0 0
        %2159 = vmatpush1.bf16.xpose.msra.mxu0 0
        %2160 = vmatprep.subr.bf16.mxu0 0
        %2161 = vmatpush1.bf16.xpose.msra.mxu0 0
        %2162 = vmatprep.subr.bf16.mxu0 0
        %2163 = vmatpush1.bf16.xpose.msra.mxu0 0
        %2164 = vmatprep.subr.bf16.mxu0 0
        %2165 = vmatpush1.bf16.xpose.msra.mxu0 0
        %2166 = vmatprep.subr.bf16.mxu0 0
        %2167 = vmatpush1.bf16.xpose.msra.mxu0 0
        %2168 = vmatprep.subr.bf16.mxu0 0
        %2169 = vmatpush1.bf16.xpose.msra.mxu0 0
        %2170 = vmatprep.subr.bf16.mxu0 0
        %2171 = vmatpush1.bf16.xpose.msra.mxu0 0
        %2172 = vmatprep.mubr.bf16.mxu0 0
        %2173 = vmatmul.mubr.bf16.gmra.mrb[0].mxu0 %v2135
        %v2174 = vpop.f32.mrb[0].mxu0
        %v2175 = vadd.f32 %v893, %v2174
        %v2176 = vpop.f32.mrb[0].mxu0
        %v2177 = vpop.f32.mrb[0].mxu0
        %v2178 = vpop.f32.mrb[0].mxu0
        %2179 = vdwg.mxu0
        %v2181 = vsel %vm1535, %v1421, 0
        %v2184 = vsel %vm1535, %v1477, 0
        %2186 = vmatprep.subr.bf16.mxu0 0
        %2187 = vmatpush1.bf16.xpose.msra.mxu0 %v2184
        %2188 = vmatprep.subr.bf16.mxu0 0
        %2189 = vmatpush1.bf16.xpose.msra.mxu0 0
        %2190 = vmatprep.subr.bf16.mxu0 0
        %2191 = vmatpush1.bf16.xpose.msra.mxu0 0
        %2192 = vmatprep.subr.bf16.mxu0 0
        %2193 = vmatpush1.bf16.xpose.msra.mxu0 0
        %2194 = vmatprep.subr.bf16.mxu0 0
        %2195 = vmatpush1.bf16.xpose.msra.mxu0 0
        %2196 = vmatprep.subr.bf16.mxu0 0
        %2197 = vmatpush1.bf16.xpose.msra.mxu0 0
        %2198 = vmatprep.subr.bf16.mxu0 0
        %2199 = vmatpush1.bf16.xpose.msra.mxu0 0
        %2200 = vmatprep.subr.bf16.mxu0 0
        %2201 = vmatpush1.bf16.xpose.msra.mxu0 0
        %2202 = vmatprep.subr.bf16.mxu0 0
        %2203 = vmatpush1.bf16.xpose.msra.mxu0 0
        %2204 = vmatprep.subr.bf16.mxu0 0
        %2205 = vmatpush1.bf16.xpose.msra.mxu0 0
        %2206 = vmatprep.subr.bf16.mxu0 0
        %2207 = vmatpush1.bf16.xpose.msra.mxu0 0
        %2208 = vmatprep.subr.bf16.mxu0 0
        %2209 = vmatpush1.bf16.xpose.msra.mxu0 0
        %2210 = vmatprep.subr.bf16.mxu0 0
        %2211 = vmatpush1.bf16.xpose.msra.mxu0 0
        %2212 = vmatprep.subr.bf16.mxu0 0
        %2213 = vmatpush1.bf16.xpose.msra.mxu0 0
        %2214 = vmatprep.subr.bf16.mxu0 0
        %2215 = vmatpush1.bf16.xpose.msra.mxu0 0
        %2216 = vmatprep.subr.bf16.mxu0 0
        %2217 = vmatpush1.bf16.xpose.msra.mxu0 0
        %2218 = vmatprep.mubr.bf16.mxu0 0
        %2219 = vmatmul.mubr.bf16.gmra.mrb[0].mxu0 %v2181
        %v2220 = vpop.f32.mrb[0].mxu0
        %v2221 = vadd.f32 %v893, %v2220
        %v2222 = vpop.f32.mrb[0].mxu0
        %v2223 = vpop.f32.mrb[0].mxu0
        %v2224 = vpop.f32.mrb[0].mxu0
        %2225 = vdwg.mxu0
        %v2227 = vsel %vm1535, %v1422, 0
        %v2230 = vsel %vm1535, %v1478, 0
        %2232 = vmatprep.subr.bf16.mxu0 0
        %2233 = vmatpush1.bf16.xpose.msra.mxu0 %v2230
        %2234 = vmatprep.subr.bf16.mxu0 0
        %2235 = vmatpush1.bf16.xpose.msra.mxu0 0
        %2236 = vmatprep.subr.bf16.mxu0 0
        %2237 = vmatpush1.bf16.xpose.msra.mxu0 0
        %2238 = vmatprep.subr.bf16.mxu0 0
        %2239 = vmatpush1.bf16.xpose.msra.mxu0 0
        %2240 = vmatprep.subr.bf16.mxu0 0
        %2241 = vmatpush1.bf16.xpose.msra.mxu0 0
        %2242 = vmatprep.subr.bf16.mxu0 0
        %2243 = vmatpush1.bf16.xpose.msra.mxu0 0
        %2244 = vmatprep.subr.bf16.mxu0 0
        %2245 = vmatpush1.bf16.xpose.msra.mxu0 0
        %2246 = vmatprep.subr.bf16.mxu0 0
        %2247 = vmatpush1.bf16.xpose.msra.mxu0 0
        %2248 = vmatprep.subr.bf16.mxu0 0
        %2249 = vmatpush1.bf16.xpose.msra.mxu0 0
        %2250 = vmatprep.subr.bf16.mxu0 0
        %2251 = vmatpush1.bf16.xpose.msra.mxu0 0
        %2252 = vmatprep.subr.bf16.mxu0 0
        %2253 = vmatpush1.bf16.xpose.msra.mxu0 0
        %2254 = vmatprep.subr.bf16.mxu0 0
        %2255 = vmatpush1.bf16.xpose.msra.mxu0 0
        %2256 = vmatprep.subr.bf16.mxu0 0
        %2257 = vmatpush1.bf16.xpose.msra.mxu0 0
        %2258 = vmatprep.subr.bf16.mxu0 0
        %2259 = vmatpush1.bf16.xpose.msra.mxu0 0
        %2260 = vmatprep.subr.bf16.mxu0 0
        %2261 = vmatpush1.bf16.xpose.msra.mxu0 0
        %2262 = vmatprep.subr.bf16.mxu0 0
        %2263 = vmatpush1.bf16.xpose.msra.mxu0 0
        %2264 = vmatprep.mubr.bf16.mxu0 0
        %2265 = vmatmul.mubr.bf16.gmra.mrb[0].mxu0 %v2227
        %v2266 = vpop.f32.mrb[0].mxu0
        %v2267 = vadd.f32 %v893, %v2266
        %v2268 = vpop.f32.mrb[0].mxu0
        %v2269 = vpop.f32.mrb[0].mxu0
        %v2270 = vpop.f32.mrb[0].mxu0
        %2271 = vdwg.mxu0
        %vm2272 = vcmask 64512
        %v2273 = vsel %vm2272, %v1577, -inf
        %2274 = vmax.xlane.f32.xlu0 %v2273
        %v2275 = vpop.xlane.xlu0 %2274
        %v2276 = vsel %vm2272, %v1623, -inf
        %2277 = vmax.xlane.f32.xlu0 %v2276
        %v2278 = vpop.xlane.xlu0 %2277
        %v2279 = vsel %vm2272, %v1669, -inf
        %2280 = vmax.xlane.f32.xlu0 %v2279
        %v2281 = vpop.xlane.xlu0 %2280
        %v2282 = vsel %vm2272, %v1715, -inf
        %2283 = vmax.xlane.f32.xlu0 %v2282
        %v2284 = vpop.xlane.xlu0 %2283
        %v2285 = vsel %vm2272, %v1761, -inf
        %2286 = vmax.xlane.f32.xlu0 %v2285
        %v2287 = vpop.xlane.xlu0 %2286
        %v2288 = vsel %vm2272, %v1807, -inf
        %2289 = vmax.xlane.f32.xlu0 %v2288
        %v2290 = vpop.xlane.xlu0 %2289
        %v2291 = vsel %vm2272, %v1853, -inf
        %2292 = vmax.xlane.f32.xlu0 %v2291
        %v2293 = vpop.xlane.xlu0 %2292
        %v2294 = vsel %vm2272, %v1899, -inf
        %2295 = vmax.xlane.f32.xlu0 %v2294
        %v2296 = vpop.xlane.xlu0 %2295
        %v2297 = vsel %vm2272, %v1945, -inf
        %2298 = vmax.xlane.f32.xlu0 %v2297
        %v2299 = vpop.xlane.xlu0 %2298
        %v2300 = vsel %vm2272, %v1991, -inf
        %2301 = vmax.xlane.f32.xlu0 %v2300
        %v2302 = vpop.xlane.xlu0 %2301
        %v2303 = vsel %vm2272, %v2037, -inf
        %2304 = vmax.xlane.f32.xlu0 %v2303
        %v2305 = vpop.xlane.xlu0 %2304
        %v2306 = vsel %vm2272, %v2083, -inf
        %2307 = vmax.xlane.f32.xlu0 %v2306
        %v2308 = vpop.xlane.xlu0 %2307
        %v2309 = vsel %vm2272, %v2129, -inf
        %2310 = vmax.xlane.f32.xlu0 %v2309
        %v2311 = vpop.xlane.xlu0 %2310
        %v2312 = vsel %vm2272, %v2175, -inf
        %2313 = vmax.xlane.f32.xlu0 %v2312
        %v2314 = vpop.xlane.xlu0 %2313
        %v2315 = vsel %vm2272, %v2221, -inf
        %2316 = vmax.xlane.f32.xlu0 %v2315
        %v2317 = vpop.xlane.xlu0 %2316
        %v2318 = vsel %vm2272, %v2267, -inf
        %2319 = vmax.xlane.f32.xlu0 %v2318
        %v2320 = vpop.xlane.xlu0 %2319
        %v2321 = vsub.f32 %v1577, %v2275
        %v2322 = vsub.f32 %v1623, %v2278
        %v2323 = vsub.f32 %v1669, %v2281
        %v2324 = vsub.f32 %v1715, %v2284
        %v2325 = vsub.f32 %v1761, %v2287
        %v2326 = vsub.f32 %v1807, %v2290
        %v2327 = vsub.f32 %v1853, %v2293
        %v2328 = vsub.f32 %v1899, %v2296
        %v2329 = vsub.f32 %v1945, %v2299
        %v2330 = vsub.f32 %v1991, %v2302
        %v2331 = vsub.f32 %v2037, %v2305
        %v2332 = vsub.f32 %v2083, %v2308
        %v2333 = vsub.f32 %v2129, %v2311
        %v2334 = vsub.f32 %v2175, %v2314
        %v2335 = vsub.f32 %v2221, %v2317
        %v2336 = vsub.f32 %v2267, %v2320
        %v2337 = vmul.f32 %v2321, 1.442695
        %v2338 = vpow.pop %v2337
        %v2339 = vmul.f32 %v2322, 1.442695
        %v2340 = vpow.pop %v2339
        %v2341 = vmul.f32 %v2323, 1.442695
        %v2342 = vpow.pop %v2341
        %v2343 = vmul.f32 %v2324, 1.442695
        %v2344 = vpow.pop %v2343
        %v2345 = vmul.f32 %v2325, 1.442695
        %v2346 = vpow.pop %v2345
        %v2347 = vmul.f32 %v2326, 1.442695
        %v2348 = vpow.pop %v2347
        %v2349 = vmul.f32 %v2327, 1.442695
        %v2350 = vpow.pop %v2349
        %v2351 = vmul.f32 %v2328, 1.442695
        %v2352 = vpow.pop %v2351
        %v2353 = vmul.f32 %v2329, 1.442695
        %v2354 = vpow.pop %v2353
        %v2355 = vmul.f32 %v2330, 1.442695
        %v2356 = vpow.pop %v2355
        %v2357 = vmul.f32 %v2331, 1.442695
        %v2358 = vpow.pop %v2357
        %v2359 = vmul.f32 %v2332, 1.442695
        %v2360 = vpow.pop %v2359
        %v2361 = vmul.f32 %v2333, 1.442695
        %v2362 = vpow.pop %v2361
        %v2363 = vmul.f32 %v2334, 1.442695
        %v2364 = vpow.pop %v2363
        %v2365 = vmul.f32 %v2335, 1.442695
        %v2366 = vpow.pop %v2365
        %v2367 = vmul.f32 %v2336, 1.442695
        %v2368 = vpow.pop %v2367
        %v2369 = vsel %vm2272, %v2338, 0.0
        %2370 = vadd.xlane.f32.xlu0 %v2369
        %v2371 = vpop.xlane.xlu0 %2370
        %v2372 = vsel %vm2272, %v2340, 0.0
        %2373 = vadd.xlane.f32.xlu0 %v2372
        %v2374 = vpop.xlane.xlu0 %2373
        %v2375 = vsel %vm2272, %v2342, 0.0
        %2376 = vadd.xlane.f32.xlu0 %v2375
        %v2377 = vpop.xlane.xlu0 %2376
        %v2378 = vsel %vm2272, %v2344, 0.0
        %2379 = vadd.xlane.f32.xlu0 %v2378
        %v2380 = vpop.xlane.xlu0 %2379
        %v2381 = vsel %vm2272, %v2346, 0.0
        %2382 = vadd.xlane.f32.xlu0 %v2381
        %v2383 = vpop.xlane.xlu0 %2382
        %v2384 = vsel %vm2272, %v2348, 0.0
        %2385 = vadd.xlane.f32.xlu0 %v2384
        %v2386 = vpop.xlane.xlu0 %2385
        %v2387 = vsel %vm2272, %v2350, 0.0
        %2388 = vadd.xlane.f32.xlu0 %v2387
        %v2389 = vpop.xlane.xlu0 %2388
        %v2390 = vsel %vm2272, %v2352, 0.0
        %2391 = vadd.xlane.f32.xlu0 %v2390
        %v2392 = vpop.xlane.xlu0 %2391
        %v2393 = vsel %vm2272, %v2354, 0.0
        %2394 = vadd.xlane.f32.xlu0 %v2393
        %v2395 = vpop.xlane.xlu0 %2394
        %v2396 = vsel %vm2272, %v2356, 0.0
        %2397 = vadd.xlane.f32.xlu0 %v2396
        %v2398 = vpop.xlane.xlu0 %2397
        %v2399 = vsel %vm2272, %v2358, 0.0
        %2400 = vadd.xlane.f32.xlu0 %v2399
        %v2401 = vpop.xlane.xlu0 %2400
        %v2402 = vsel %vm2272, %v2360, 0.0
        %2403 = vadd.xlane.f32.xlu0 %v2402
        %v2404 = vpop.xlane.xlu0 %2403
        %v2405 = vsel %vm2272, %v2362, 0.0
        %2406 = vadd.xlane.f32.xlu0 %v2405
        %v2407 = vpop.xlane.xlu0 %2406
        %v2408 = vsel %vm2272, %v2364, 0.0
        %2409 = vadd.xlane.f32.xlu0 %v2408
        %v2410 = vpop.xlane.xlu0 %2409
        %v2411 = vsel %vm2272, %v2366, 0.0
        %2412 = vadd.xlane.f32.xlu0 %v2411
        %v2413 = vpop.xlane.xlu0 %2412
        %v2414 = vsel %vm2272, %v2368, 0.0
        %2415 = vadd.xlane.f32.xlu0 %v2414
        %v2416 = vpop.xlane.xlu0 %2415
        %v2417 = vrcp.pop %v2371
        %v2418 = vmul.f32 %v2338, %v2417
        %v2419 = vrcp.pop %v2374
        %v2420 = vmul.f32 %v2340, %v2419
        %v2421 = vrcp.pop %v2377
        %v2422 = vmul.f32 %v2342, %v2421
        %v2423 = vrcp.pop %v2380
        %v2424 = vmul.f32 %v2344, %v2423
        %v2425 = vrcp.pop %v2383
        %v2426 = vmul.f32 %v2346, %v2425
        %v2427 = vrcp.pop %v2386
        %v2428 = vmul.f32 %v2348, %v2427
        %v2429 = vrcp.pop %v2389
        %v2430 = vmul.f32 %v2350, %v2429
        %v2431 = vrcp.pop %v2392
        %v2432 = vmul.f32 %v2352, %v2431
        %v2433 = vrcp.pop %v2395
        %v2434 = vmul.f32 %v2354, %v2433
        %v2435 = vrcp.pop %v2398
        %v2436 = vmul.f32 %v2356, %v2435
        %v2437 = vrcp.pop %v2401
        %v2438 = vmul.f32 %v2358, %v2437
        %v2439 = vrcp.pop %v2404
        %v2440 = vmul.f32 %v2360, %v2439
        %v2441 = vrcp.pop %v2407
        %v2442 = vmul.f32 %v2362, %v2441
        %v2443 = vrcp.pop %v2410
        %v2444 = vmul.f32 %v2364, %v2443
        %v2445 = vrcp.pop %v2413
        %v2446 = vmul.f32 %v2366, %v2445
        %v2447 = vrcp.pop %v2416
        %v2448 = vmul.f32 %v2368, %v2447
        %v2449 = vpack.c.bf16 %v2418, %v2418
        %v2450 = vpack.c.bf16 %v2420, %v2420
        %v2451 = vpack.c.bf16 %v2422, %v2422
        %v2452 = vpack.c.bf16 %v2424, %v2424
        %v2453 = vpack.c.bf16 %v2426, %v2426
        %v2454 = vpack.c.bf16 %v2428, %v2428
        %v2455 = vpack.c.bf16 %v2430, %v2430
        %v2456 = vpack.c.bf16 %v2432, %v2432
        %v2457 = vpack.c.bf16 %v2434, %v2434
        %v2458 = vpack.c.bf16 %v2436, %v2436
        %v2459 = vpack.c.bf16 %v2438, %v2438
        %v2460 = vpack.c.bf16 %v2440, %v2440
        %v2461 = vpack.c.bf16 %v2442, %v2442
        %v2462 = vpack.c.bf16 %v2444, %v2444
        %v2463 = vpack.c.bf16 %v2446, %v2446
        %v2464 = vpack.c.bf16 %v2448, %v2448
        %v2466 = vsel %vm2272, %v2449, 0
        %vm2468 = vcmask 1043456
        %v2470 = vsel %vm2468, %v1519, 0
        %2472 = vmatprep.subr.bf16.mxu0 0
        %2473 = vmatpush1.bf16.msra.mxu0 %v2470
        %2474 = vmatprep.subr.bf16.mxu0 0
        %2475 = vmatpush1.bf16.msra.mxu0 0
        %2476 = vmatprep.subr.bf16.mxu0 0
        %2477 = vmatpush1.bf16.msra.mxu0 0
        %2478 = vmatprep.subr.bf16.mxu0 0
        %2479 = vmatpush1.bf16.msra.mxu0 0
        %2480 = vmatprep.subr.bf16.mxu0 0
        %2481 = vmatpush1.bf16.msra.mxu0 0
        %2482 = vmatprep.subr.bf16.mxu0 0
        %2483 = vmatpush1.bf16.msra.mxu0 0
        %2484 = vmatprep.subr.bf16.mxu0 0
        %2485 = vmatpush1.bf16.msra.mxu0 0
        %2486 = vmatprep.subr.bf16.mxu0 0
        %2487 = vmatpush1.bf16.msra.mxu0 0
        %2488 = vmatprep.subr.bf16.mxu0 0
        %2489 = vmatpush1.bf16.msra.mxu0 0
        %2490 = vmatprep.subr.bf16.mxu0 0
        %2491 = vmatpush1.bf16.msra.mxu0 0
        %2492 = vmatprep.subr.bf16.mxu0 0
        %2493 = vmatpush1.bf16.msra.mxu0 0
        %2494 = vmatprep.subr.bf16.mxu0 0
        %2495 = vmatpush1.bf16.msra.mxu0 0
        %2496 = vmatprep.subr.bf16.mxu0 0
        %2497 = vmatpush1.bf16.msra.mxu0 0
        %2498 = vmatprep.subr.bf16.mxu0 0
        %2499 = vmatpush1.bf16.msra.mxu0 0
        %2500 = vmatprep.subr.bf16.mxu0 0
        %2501 = vmatpush1.bf16.msra.mxu0 0
        %2502 = vmatprep.subr.bf16.mxu0 0
        %2503 = vmatpush1.bf16.msra.mxu0 0
        %2504 = vmatprep.mubr.bf16.mxu0 0
        %2505 = vmatmul.mubr.bf16.gmra.mrb[0].mxu0 %v2466
        %v2506 = vpop.f32.mrb[0].mxu0
        %v2507 = vadd.f32 0.0, %v2506
        %v2508 = vpop.f32.mrb[0].mxu0
        %v2509 = vpop.f32.mrb[0].mxu0
        %v2510 = vpop.f32.mrb[0].mxu0
        %2511 = vdwg.mxu0
        %v2513 = vsel %vm2272, %v2450, 0
        %v2516 = vsel %vm2468, %v1520, 0
        %2518 = vmatprep.subr.bf16.mxu0 0
        %2519 = vmatpush1.bf16.msra.mxu0 %v2516
        %2520 = vmatprep.subr.bf16.mxu0 0
        %2521 = vmatpush1.bf16.msra.mxu0 0
        %2522 = vmatprep.subr.bf16.mxu0 0
        %2523 = vmatpush1.bf16.msra.mxu0 0
        %2524 = vmatprep.subr.bf16.mxu0 0
        %2525 = vmatpush1.bf16.msra.mxu0 0
        %2526 = vmatprep.subr.bf16.mxu0 0
        %2527 = vmatpush1.bf16.msra.mxu0 0
        %2528 = vmatprep.subr.bf16.mxu0 0
        %2529 = vmatpush1.bf16.msra.mxu0 0
        %2530 = vmatprep.subr.bf16.mxu0 0
        %2531 = vmatpush1.bf16.msra.mxu0 0
        %2532 = vmatprep.subr.bf16.mxu0 0
        %2533 = vmatpush1.bf16.msra.mxu0 0
        %2534 = vmatprep.subr.bf16.mxu0 0
        %2535 = vmatpush1.bf16.msra.mxu0 0
        %2536 = vmatprep.subr.bf16.mxu0 0
        %2537 = vmatpush1.bf16.msra.mxu0 0
        %2538 = vmatprep.subr.bf16.mxu0 0
        %2539 = vmatpush1.bf16.msra.mxu0 0
        %2540 = vmatprep.subr.bf16.mxu0 0
        %2541 = vmatpush1.bf16.msra.mxu0 0
        %2542 = vmatprep.subr.bf16.mxu0 0
        %2543 = vmatpush1.bf16.msra.mxu0 0
        %2544 = vmatprep.subr.bf16.mxu0 0
        %2545 = vmatpush1.bf16.msra.mxu0 0
        %2546 = vmatprep.subr.bf16.mxu0 0
        %2547 = vmatpush1.bf16.msra.mxu0 0
        %2548 = vmatprep.subr.bf16.mxu0 0
        %2549 = vmatpush1.bf16.msra.mxu0 0
        %2550 = vmatprep.mubr.bf16.mxu0 0
        %2551 = vmatmul.mubr.bf16.gmra.mrb[0].mxu0 %v2513
        %v2552 = vpop.f32.mrb[0].mxu0
        %v2553 = vadd.f32 0.0, %v2552
        %v2554 = vpop.f32.mrb[0].mxu0
        %v2555 = vpop.f32.mrb[0].mxu0
        %v2556 = vpop.f32.mrb[0].mxu0
        %2557 = vdwg.mxu0
        %v2559 = vsel %vm2272, %v2451, 0
        %v2562 = vsel %vm2468, %v1521, 0
        %2564 = vmatprep.subr.bf16.mxu0 0
        %2565 = vmatpush1.bf16.msra.mxu0 %v2562
        %2566 = vmatprep.subr.bf16.mxu0 0
        %2567 = vmatpush1.bf16.msra.mxu0 0
        %2568 = vmatprep.subr.bf16.mxu0 0
        %2569 = vmatpush1.bf16.msra.mxu0 0
        %2570 = vmatprep.subr.bf16.mxu0 0
        %2571 = vmatpush1.bf16.msra.mxu0 0
        %2572 = vmatprep.subr.bf16.mxu0 0
        %2573 = vmatpush1.bf16.msra.mxu0 0
        %2574 = vmatprep.subr.bf16.mxu0 0
        %2575 = vmatpush1.bf16.msra.mxu0 0
        %2576 = vmatprep.subr.bf16.mxu0 0
        %2577 = vmatpush1.bf16.msra.mxu0 0
        %2578 = vmatprep.subr.bf16.mxu0 0
        %2579 = vmatpush1.bf16.msra.mxu0 0
        %2580 = vmatprep.subr.bf16.mxu0 0
        %2581 = vmatpush1.bf16.msra.mxu0 0
        %2582 = vmatprep.subr.bf16.mxu0 0
        %2583 = vmatpush1.bf16.msra.mxu0 0
        %2584 = vmatprep.subr.bf16.mxu0 0
        %2585 = vmatpush1.bf16.msra.mxu0 0
        %2586 = vmatprep.subr.bf16.mxu0 0
        %2587 = vmatpush1.bf16.msra.mxu0 0
        %2588 = vmatprep.subr.bf16.mxu0 0
        %2589 = vmatpush1.bf16.msra.mxu0 0
        %2590 = vmatprep.subr.bf16.mxu0 0
        %2591 = vmatpush1.bf16.msra.mxu0 0
        %2592 = vmatprep.subr.bf16.mxu0 0
        %2593 = vmatpush1.bf16.msra.mxu0 0
        %2594 = vmatprep.subr.bf16.mxu0 0
        %2595 = vmatpush1.bf16.msra.mxu0 0
        %2596 = vmatprep.mubr.bf16.mxu0 0
        %2597 = vmatmul.mubr.bf16.gmra.mrb[0].mxu0 %v2559
        %v2598 = vpop.f32.mrb[0].mxu0
        %v2599 = vadd.f32 0.0, %v2598
        %v2600 = vpop.f32.mrb[0].mxu0
        %v2601 = vpop.f32.mrb[0].mxu0
        %v2602 = vpop.f32.mrb[0].mxu0
        %2603 = vdwg.mxu0
        %v2605 = vsel %vm2272, %v2452, 0
        %v2608 = vsel %vm2468, %v1522, 0
        %2610 = vmatprep.subr.bf16.mxu0 0
        %2611 = vmatpush1.bf16.msra.mxu0 %v2608
        %2612 = vmatprep.subr.bf16.mxu0 0
        %2613 = vmatpush1.bf16.msra.mxu0 0
        %2614 = vmatprep.subr.bf16.mxu0 0
        %2615 = vmatpush1.bf16.msra.mxu0 0
        %2616 = vmatprep.subr.bf16.mxu0 0
        %2617 = vmatpush1.bf16.msra.mxu0 0
        %2618 = vmatprep.subr.bf16.mxu0 0
        %2619 = vmatpush1.bf16.msra.mxu0 0
        %2620 = vmatprep.subr.bf16.mxu0 0
        %2621 = vmatpush1.bf16.msra.mxu0 0
        %2622 = vmatprep.subr.bf16.mxu0 0
        %2623 = vmatpush1.bf16.msra.mxu0 0
        %2624 = vmatprep.subr.bf16.mxu0 0
        %2625 = vmatpush1.bf16.msra.mxu0 0
        %2626 = vmatprep.subr.bf16.mxu0 0
        %2627 = vmatpush1.bf16.msra.mxu0 0
        %2628 = vmatprep.subr.bf16.mxu0 0
        %2629 = vmatpush1.bf16.msra.mxu0 0
        %2630 = vmatprep.subr.bf16.mxu0 0
        %2631 = vmatpush1.bf16.msra.mxu0 0
        %2632 = vmatprep.subr.bf16.mxu0 0
        %2633 = vmatpush1.bf16.msra.mxu0 0
        %2634 = vmatprep.subr.bf16.mxu0 0
        %2635 = vmatpush1.bf16.msra.mxu0 0
        %2636 = vmatprep.subr.bf16.mxu0 0
        %2637 = vmatpush1.bf16.msra.mxu0 0
        %2638 = vmatprep.subr.bf16.mxu0 0
        %2639 = vmatpush1.bf16.msra.mxu0 0
        %2640 = vmatprep.subr.bf16.mxu0 0
        %2641 = vmatpush1.bf16.msra.mxu0 0
        %2642 = vmatprep.mubr.bf16.mxu0 0
        %2643 = vmatmul.mubr.bf16.gmra.mrb[0].mxu0 %v2605
        %v2644 = vpop.f32.mrb[0].mxu0
        %v2645 = vadd.f32 0.0, %v2644
        %v2646 = vpop.f32.mrb[0].mxu0
        %v2647 = vpop.f32.mrb[0].mxu0
        %v2648 = vpop.f32.mrb[0].mxu0
        %2649 = vdwg.mxu0
        %v2651 = vsel %vm2272, %v2453, 0
        %v2654 = vsel %vm2468, %v1523, 0
        %2656 = vmatprep.subr.bf16.mxu0 0
        %2657 = vmatpush1.bf16.msra.mxu0 %v2654
        %2658 = vmatprep.subr.bf16.mxu0 0
        %2659 = vmatpush1.bf16.msra.mxu0 0
        %2660 = vmatprep.subr.bf16.mxu0 0
        %2661 = vmatpush1.bf16.msra.mxu0 0
        %2662 = vmatprep.subr.bf16.mxu0 0
        %2663 = vmatpush1.bf16.msra.mxu0 0
        %2664 = vmatprep.subr.bf16.mxu0 0
        %2665 = vmatpush1.bf16.msra.mxu0 0
        %2666 = vmatprep.subr.bf16.mxu0 0
        %2667 = vmatpush1.bf16.msra.mxu0 0
        %2668 = vmatprep.subr.bf16.mxu0 0
        %2669 = vmatpush1.bf16.msra.mxu0 0
        %2670 = vmatprep.subr.bf16.mxu0 0
        %2671 = vmatpush1.bf16.msra.mxu0 0
        %2672 = vmatprep.subr.bf16.mxu0 0
        %2673 = vmatpush1.bf16.msra.mxu0 0
        %2674 = vmatprep.subr.bf16.mxu0 0
        %2675 = vmatpush1.bf16.msra.mxu0 0
        %2676 = vmatprep.subr.bf16.mxu0 0
        %2677 = vmatpush1.bf16.msra.mxu0 0
        %2678 = vmatprep.subr.bf16.mxu0 0
        %2679 = vmatpush1.bf16.msra.mxu0 0
        %2680 = vmatprep.subr.bf16.mxu0 0
        %2681 = vmatpush1.bf16.msra.mxu0 0
        %2682 = vmatprep.subr.bf16.mxu0 0
        %2683 = vmatpush1.bf16.msra.mxu0 0
        %2684 = vmatprep.subr.bf16.mxu0 0
        %2685 = vmatpush1.bf16.msra.mxu0 0
        %2686 = vmatprep.subr.bf16.mxu0 0
        %2687 = vmatpush1.bf16.msra.mxu0 0
        %2688 = vmatprep.mubr.bf16.mxu0 0
        %2689 = vmatmul.mubr.bf16.gmra.mrb[0].mxu0 %v2651
        %v2690 = vpop.f32.mrb[0].mxu0
        %v2691 = vadd.f32 0.0, %v2690
        %v2692 = vpop.f32.mrb[0].mxu0
        %v2693 = vpop.f32.mrb[0].mxu0
        %v2694 = vpop.f32.mrb[0].mxu0
        %2695 = vdwg.mxu0
        %v2697 = vsel %vm2272, %v2454, 0
        %v2700 = vsel %vm2468, %v1524, 0
        %2702 = vmatprep.subr.bf16.mxu0 0
        %2703 = vmatpush1.bf16.msra.mxu0 %v2700
        %2704 = vmatprep.subr.bf16.mxu0 0
        %2705 = vmatpush1.bf16.msra.mxu0 0
        %2706 = vmatprep.subr.bf16.mxu0 0
        %2707 = vmatpush1.bf16.msra.mxu0 0
        %2708 = vmatprep.subr.bf16.mxu0 0
        %2709 = vmatpush1.bf16.msra.mxu0 0
        %2710 = vmatprep.subr.bf16.mxu0 0
        %2711 = vmatpush1.bf16.msra.mxu0 0
        %2712 = vmatprep.subr.bf16.mxu0 0
        %2713 = vmatpush1.bf16.msra.mxu0 0
        %2714 = vmatprep.subr.bf16.mxu0 0
        %2715 = vmatpush1.bf16.msra.mxu0 0
        %2716 = vmatprep.subr.bf16.mxu0 0
        %2717 = vmatpush1.bf16.msra.mxu0 0
        %2718 = vmatprep.subr.bf16.mxu0 0
        %2719 = vmatpush1.bf16.msra.mxu0 0
        %2720 = vmatprep.subr.bf16.mxu0 0
        %2721 = vmatpush1.bf16.msra.mxu0 0
        %2722 = vmatprep.subr.bf16.mxu0 0
        %2723 = vmatpush1.bf16.msra.mxu0 0
        %2724 = vmatprep.subr.bf16.mxu0 0
        %2725 = vmatpush1.bf16.msra.mxu0 0
        %2726 = vmatprep.subr.bf16.mxu0 0
        %2727 = vmatpush1.bf16.msra.mxu0 0
        %2728 = vmatprep.subr.bf16.mxu0 0
        %2729 = vmatpush1.bf16.msra.mxu0 0
        %2730 = vmatprep.subr.bf16.mxu0 0
        %2731 = vmatpush1.bf16.msra.mxu0 0
        %2732 = vmatprep.subr.bf16.mxu0 0
        %2733 = vmatpush1.bf16.msra.mxu0 0
        %2734 = vmatprep.mubr.bf16.mxu0 0
        %2735 = vmatmul.mubr.bf16.gmra.mrb[0].mxu0 %v2697
        %v2736 = vpop.f32.mrb[0].mxu0
        %v2737 = vadd.f32 0.0, %v2736
        %v2738 = vpop.f32.mrb[0].mxu0
        %v2739 = vpop.f32.mrb[0].mxu0
        %v2740 = vpop.f32.mrb[0].mxu0
        %2741 = vdwg.mxu0
        %v2743 = vsel %vm2272, %v2455, 0
        %v2746 = vsel %vm2468, %v1525, 0
        %2748 = vmatprep.subr.bf16.mxu0 0
        %2749 = vmatpush1.bf16.msra.mxu0 %v2746
        %2750 = vmatprep.subr.bf16.mxu0 0
        %2751 = vmatpush1.bf16.msra.mxu0 0
        %2752 = vmatprep.subr.bf16.mxu0 0
        %2753 = vmatpush1.bf16.msra.mxu0 0
        %2754 = vmatprep.subr.bf16.mxu0 0
        %2755 = vmatpush1.bf16.msra.mxu0 0
        %2756 = vmatprep.subr.bf16.mxu0 0
        %2757 = vmatpush1.bf16.msra.mxu0 0
        %2758 = vmatprep.subr.bf16.mxu0 0
        %2759 = vmatpush1.bf16.msra.mxu0 0
        %2760 = vmatprep.subr.bf16.mxu0 0
        %2761 = vmatpush1.bf16.msra.mxu0 0
        %2762 = vmatprep.subr.bf16.mxu0 0
        %2763 = vmatpush1.bf16.msra.mxu0 0
        %2764 = vmatprep.subr.bf16.mxu0 0
        %2765 = vmatpush1.bf16.msra.mxu0 0
        %2766 = vmatprep.subr.bf16.mxu0 0
        %2767 = vmatpush1.bf16.msra.mxu0 0
        %2768 = vmatprep.subr.bf16.mxu0 0
        %2769 = vmatpush1.bf16.msra.mxu0 0
        %2770 = vmatprep.subr.bf16.mxu0 0
        %2771 = vmatpush1.bf16.msra.mxu0 0
        %2772 = vmatprep.subr.bf16.mxu0 0
        %2773 = vmatpush1.bf16.msra.mxu0 0
        %2774 = vmatprep.subr.bf16.mxu0 0
        %2775 = vmatpush1.bf16.msra.mxu0 0
        %2776 = vmatprep.subr.bf16.mxu0 0
        %2777 = vmatpush1.bf16.msra.mxu0 0
        %2778 = vmatprep.subr.bf16.mxu0 0
        %2779 = vmatpush1.bf16.msra.mxu0 0
        %2780 = vmatprep.mubr.bf16.mxu0 0
        %2781 = vmatmul.mubr.bf16.gmra.mrb[0].mxu0 %v2743
        %v2782 = vpop.f32.mrb[0].mxu0
        %v2783 = vadd.f32 0.0, %v2782
        %v2784 = vpop.f32.mrb[0].mxu0
        %v2785 = vpop.f32.mrb[0].mxu0
        %v2786 = vpop.f32.mrb[0].mxu0
        %2787 = vdwg.mxu0
        %v2789 = vsel %vm2272, %v2456, 0
        %v2792 = vsel %vm2468, %v1526, 0
        %2794 = vmatprep.subr.bf16.mxu0 0
        %2795 = vmatpush1.bf16.msra.mxu0 %v2792
        %2796 = vmatprep.subr.bf16.mxu0 0
        %2797 = vmatpush1.bf16.msra.mxu0 0
        %2798 = vmatprep.subr.bf16.mxu0 0
        %2799 = vmatpush1.bf16.msra.mxu0 0
        %2800 = vmatprep.subr.bf16.mxu0 0
        %2801 = vmatpush1.bf16.msra.mxu0 0
        %2802 = vmatprep.subr.bf16.mxu0 0
        %2803 = vmatpush1.bf16.msra.mxu0 0
        %2804 = vmatprep.subr.bf16.mxu0 0
        %2805 = vmatpush1.bf16.msra.mxu0 0
        %2806 = vmatprep.subr.bf16.mxu0 0
        %2807 = vmatpush1.bf16.msra.mxu0 0
        %2808 = vmatprep.subr.bf16.mxu0 0
        %2809 = vmatpush1.bf16.msra.mxu0 0
        %2810 = vmatprep.subr.bf16.mxu0 0
        %2811 = vmatpush1.bf16.msra.mxu0 0
        %2812 = vmatprep.subr.bf16.mxu0 0
        %2813 = vmatpush1.bf16.msra.mxu0 0
        %2814 = vmatprep.subr.bf16.mxu0 0
        %2815 = vmatpush1.bf16.msra.mxu0 0
        %2816 = vmatprep.subr.bf16.mxu0 0
        %2817 = vmatpush1.bf16.msra.mxu0 0
        %2818 = vmatprep.subr.bf16.mxu0 0
        %2819 = vmatpush1.bf16.msra.mxu0 0
        %2820 = vmatprep.subr.bf16.mxu0 0
        %2821 = vmatpush1.bf16.msra.mxu0 0
        %2822 = vmatprep.subr.bf16.mxu0 0
        %2823 = vmatpush1.bf16.msra.mxu0 0
        %2824 = vmatprep.subr.bf16.mxu0 0
        %2825 = vmatpush1.bf16.msra.mxu0 0
        %2826 = vmatprep.mubr.bf16.mxu0 0
        %2827 = vmatmul.mubr.bf16.gmra.mrb[0].mxu0 %v2789
        %v2828 = vpop.f32.mrb[0].mxu0
        %v2829 = vadd.f32 0.0, %v2828
        %v2830 = vpop.f32.mrb[0].mxu0
        %v2831 = vpop.f32.mrb[0].mxu0
        %v2832 = vpop.f32.mrb[0].mxu0
        %2833 = vdwg.mxu0
        %v2835 = vsel %vm2272, %v2457, 0
        %v2838 = vsel %vm2468, %v1527, 0
        %2840 = vmatprep.subr.bf16.mxu0 0
        %2841 = vmatpush1.bf16.msra.mxu0 %v2838
        %2842 = vmatprep.subr.bf16.mxu0 0
        %2843 = vmatpush1.bf16.msra.mxu0 0
        %2844 = vmatprep.subr.bf16.mxu0 0
        %2845 = vmatpush1.bf16.msra.mxu0 0
        %2846 = vmatprep.subr.bf16.mxu0 0
        %2847 = vmatpush1.bf16.msra.mxu0 0
        %2848 = vmatprep.subr.bf16.mxu0 0
        %2849 = vmatpush1.bf16.msra.mxu0 0
        %2850 = vmatprep.subr.bf16.mxu0 0
        %2851 = vmatpush1.bf16.msra.mxu0 0
        %2852 = vmatprep.subr.bf16.mxu0 0
        %2853 = vmatpush1.bf16.msra.mxu0 0
        %2854 = vmatprep.subr.bf16.mxu0 0
        %2855 = vmatpush1.bf16.msra.mxu0 0
        %2856 = vmatprep.subr.bf16.mxu0 0
        %2857 = vmatpush1.bf16.msra.mxu0 0
        %2858 = vmatprep.subr.bf16.mxu0 0
        %2859 = vmatpush1.bf16.msra.mxu0 0
        %2860 = vmatprep.subr.bf16.mxu0 0
        %2861 = vmatpush1.bf16.msra.mxu0 0
        %2862 = vmatprep.subr.bf16.mxu0 0
        %2863 = vmatpush1.bf16.msra.mxu0 0
        %2864 = vmatprep.subr.bf16.mxu0 0
        %2865 = vmatpush1.bf16.msra.mxu0 0
        %2866 = vmatprep.subr.bf16.mxu0 0
        %2867 = vmatpush1.bf16.msra.mxu0 0
        %2868 = vmatprep.subr.bf16.mxu0 0
        %2869 = vmatpush1.bf16.msra.mxu0 0
        %2870 = vmatprep.subr.bf16.mxu0 0
        %2871 = vmatpush1.bf16.msra.mxu0 0
        %2872 = vmatprep.mubr.bf16.mxu0 0
        %2873 = vmatmul.mubr.bf16.gmra.mrb[0].mxu0 %v2835
        %v2874 = vpop.f32.mrb[0].mxu0
        %v2875 = vadd.f32 0.0, %v2874
        %v2876 = vpop.f32.mrb[0].mxu0
        %v2877 = vpop.f32.mrb[0].mxu0
        %v2878 = vpop.f32.mrb[0].mxu0
        %2879 = vdwg.mxu0
        %v2881 = vsel %vm2272, %v2458, 0
        %v2884 = vsel %vm2468, %v1528, 0
        %2886 = vmatprep.subr.bf16.mxu0 0
        %2887 = vmatpush1.bf16.msra.mxu0 %v2884
        %2888 = vmatprep.subr.bf16.mxu0 0
        %2889 = vmatpush1.bf16.msra.mxu0 0
        %2890 = vmatprep.subr.bf16.mxu0 0
        %2891 = vmatpush1.bf16.msra.mxu0 0
        %2892 = vmatprep.subr.bf16.mxu0 0
        %2893 = vmatpush1.bf16.msra.mxu0 0
        %2894 = vmatprep.subr.bf16.mxu0 0
        %2895 = vmatpush1.bf16.msra.mxu0 0
        %2896 = vmatprep.subr.bf16.mxu0 0
        %2897 = vmatpush1.bf16.msra.mxu0 0
        %2898 = vmatprep.subr.bf16.mxu0 0
        %2899 = vmatpush1.bf16.msra.mxu0 0
        %2900 = vmatprep.subr.bf16.mxu0 0
        %2901 = vmatpush1.bf16.msra.mxu0 0
        %2902 = vmatprep.subr.bf16.mxu0 0
        %2903 = vmatpush1.bf16.msra.mxu0 0
        %2904 = vmatprep.subr.bf16.mxu0 0
        %2905 = vmatpush1.bf16.msra.mxu0 0
        %2906 = vmatprep.subr.bf16.mxu0 0
        %2907 = vmatpush1.bf16.msra.mxu0 0
        %2908 = vmatprep.subr.bf16.mxu0 0
        %2909 = vmatpush1.bf16.msra.mxu0 0
        %2910 = vmatprep.subr.bf16.mxu0 0
        %2911 = vmatpush1.bf16.msra.mxu0 0
        %2912 = vmatprep.subr.bf16.mxu0 0
        %2913 = vmatpush1.bf16.msra.mxu0 0
        %2914 = vmatprep.subr.bf16.mxu0 0
        %2915 = vmatpush1.bf16.msra.mxu0 0
        %2916 = vmatprep.subr.bf16.mxu0 0
        %2917 = vmatpush1.bf16.msra.mxu0 0
        %2918 = vmatprep.mubr.bf16.mxu0 0
        %2919 = vmatmul.mubr.bf16.gmra.mrb[0].mxu0 %v2881
        %v2920 = vpop.f32.mrb[0].mxu0
        %v2921 = vadd.f32 0.0, %v2920
        %v2922 = vpop.f32.mrb[0].mxu0
        %v2923 = vpop.f32.mrb[0].mxu0
        %v2924 = vpop.f32.mrb[0].mxu0
        %2925 = vdwg.mxu0
        %v2927 = vsel %vm2272, %v2459, 0
        %v2930 = vsel %vm2468, %v1529, 0
        %2932 = vmatprep.subr.bf16.mxu0 0
        %2933 = vmatpush1.bf16.msra.mxu0 %v2930
        %2934 = vmatprep.subr.bf16.mxu0 0
        %2935 = vmatpush1.bf16.msra.mxu0 0
        %2936 = vmatprep.subr.bf16.mxu0 0
        %2937 = vmatpush1.bf16.msra.mxu0 0
        %2938 = vmatprep.subr.bf16.mxu0 0
        %2939 = vmatpush1.bf16.msra.mxu0 0
        %2940 = vmatprep.subr.bf16.mxu0 0
        %2941 = vmatpush1.bf16.msra.mxu0 0
        %2942 = vmatprep.subr.bf16.mxu0 0
        %2943 = vmatpush1.bf16.msra.mxu0 0
        %2944 = vmatprep.subr.bf16.mxu0 0
        %2945 = vmatpush1.bf16.msra.mxu0 0
        %2946 = vmatprep.subr.bf16.mxu0 0
        %2947 = vmatpush1.bf16.msra.mxu0 0
        %2948 = vmatprep.subr.bf16.mxu0 0
        %2949 = vmatpush1.bf16.msra.mxu0 0
        %2950 = vmatprep.subr.bf16.mxu0 0
        %2951 = vmatpush1.bf16.msra.mxu0 0
        %2952 = vmatprep.subr.bf16.mxu0 0
        %2953 = vmatpush1.bf16.msra.mxu0 0
        %2954 = vmatprep.subr.bf16.mxu0 0
        %2955 = vmatpush1.bf16.msra.mxu0 0
        %2956 = vmatprep.subr.bf16.mxu0 0
        %2957 = vmatpush1.bf16.msra.mxu0 0
        %2958 = vmatprep.subr.bf16.mxu0 0
        %2959 = vmatpush1.bf16.msra.mxu0 0
        %2960 = vmatprep.subr.bf16.mxu0 0
        %2961 = vmatpush1.bf16.msra.mxu0 0
        %2962 = vmatprep.subr.bf16.mxu0 0
        %2963 = vmatpush1.bf16.msra.mxu0 0
        %2964 = vmatprep.mubr.bf16.mxu0 0
        %2965 = vmatmul.mubr.bf16.gmra.mrb[0].mxu0 %v2927
        %v2966 = vpop.f32.mrb[0].mxu0
        %v2967 = vadd.f32 0.0, %v2966
        %v2968 = vpop.f32.mrb[0].mxu0
        %v2969 = vpop.f32.mrb[0].mxu0
        %v2970 = vpop.f32.mrb[0].mxu0
        %2971 = vdwg.mxu0
        %v2973 = vsel %vm2272, %v2460, 0
        %v2976 = vsel %vm2468, %v1530, 0
        %2978 = vmatprep.subr.bf16.mxu0 0
        %2979 = vmatpush1.bf16.msra.mxu0 %v2976
        %2980 = vmatprep.subr.bf16.mxu0 0
        %2981 = vmatpush1.bf16.msra.mxu0 0
        %2982 = vmatprep.subr.bf16.mxu0 0
        %2983 = vmatpush1.bf16.msra.mxu0 0
        %2984 = vmatprep.subr.bf16.mxu0 0
        %2985 = vmatpush1.bf16.msra.mxu0 0
        %2986 = vmatprep.subr.bf16.mxu0 0
        %2987 = vmatpush1.bf16.msra.mxu0 0
        %2988 = vmatprep.subr.bf16.mxu0 0
        %2989 = vmatpush1.bf16.msra.mxu0 0
        %2990 = vmatprep.subr.bf16.mxu0 0
        %2991 = vmatpush1.bf16.msra.mxu0 0
        %2992 = vmatprep.subr.bf16.mxu0 0
        %2993 = vmatpush1.bf16.msra.mxu0 0
        %2994 = vmatprep.subr.bf16.mxu0 0
        %2995 = vmatpush1.bf16.msra.mxu0 0
        %2996 = vmatprep.subr.bf16.mxu0 0
        %2997 = vmatpush1.bf16.msra.mxu0 0
        %2998 = vmatprep.subr.bf16.mxu0 0
        %2999 = vmatpush1.bf16.msra.mxu0 0
        %3000 = vmatprep.subr.bf16.mxu0 0
        %3001 = vmatpush1.bf16.msra.mxu0 0
        %3002 = vmatprep.subr.bf16.mxu0 0
        %3003 = vmatpush1.bf16.msra.mxu0 0
        %3004 = vmatprep.subr.bf16.mxu0 0
        %3005 = vmatpush1.bf16.msra.mxu0 0
        %3006 = vmatprep.subr.bf16.mxu0 0
        %3007 = vmatpush1.bf16.msra.mxu0 0
        %3008 = vmatprep.subr.bf16.mxu0 0
        %3009 = vmatpush1.bf16.msra.mxu0 0
        %3010 = vmatprep.mubr.bf16.mxu0 0
        %3011 = vmatmul.mubr.bf16.gmra.mrb[0].mxu0 %v2973
        %v3012 = vpop.f32.mrb[0].mxu0
        %v3013 = vadd.f32 0.0, %v3012
        %v3014 = vpop.f32.mrb[0].mxu0
        %v3015 = vpop.f32.mrb[0].mxu0
        %v3016 = vpop.f32.mrb[0].mxu0
        %3017 = vdwg.mxu0
        %v3019 = vsel %vm2272, %v2461, 0
        %v3022 = vsel %vm2468, %v1531, 0
        %3024 = vmatprep.subr.bf16.mxu0 0
        %3025 = vmatpush1.bf16.msra.mxu0 %v3022
        %3026 = vmatprep.subr.bf16.mxu0 0
        %3027 = vmatpush1.bf16.msra.mxu0 0
        %3028 = vmatprep.subr.bf16.mxu0 0
        %3029 = vmatpush1.bf16.msra.mxu0 0
        %3030 = vmatprep.subr.bf16.mxu0 0
        %3031 = vmatpush1.bf16.msra.mxu0 0
        %3032 = vmatprep.subr.bf16.mxu0 0
        %3033 = vmatpush1.bf16.msra.mxu0 0
        %3034 = vmatprep.subr.bf16.mxu0 0
        %3035 = vmatpush1.bf16.msra.mxu0 0
        %3036 = vmatprep.subr.bf16.mxu0 0
        %3037 = vmatpush1.bf16.msra.mxu0 0
        %3038 = vmatprep.subr.bf16.mxu0 0
        %3039 = vmatpush1.bf16.msra.mxu0 0
        %3040 = vmatprep.subr.bf16.mxu0 0
        %3041 = vmatpush1.bf16.msra.mxu0 0
        %3042 = vmatprep.subr.bf16.mxu0 0
        %3043 = vmatpush1.bf16.msra.mxu0 0
        %3044 = vmatprep.subr.bf16.mxu0 0
        %3045 = vmatpush1.bf16.msra.mxu0 0
        %3046 = vmatprep.subr.bf16.mxu0 0
        %3047 = vmatpush1.bf16.msra.mxu0 0
        %3048 = vmatprep.subr.bf16.mxu0 0
        %3049 = vmatpush1.bf16.msra.mxu0 0
        %3050 = vmatprep.subr.bf16.mxu0 0
        %3051 = vmatpush1.bf16.msra.mxu0 0
        %3052 = vmatprep.subr.bf16.mxu0 0
        %3053 = vmatpush1.bf16.msra.mxu0 0
        %3054 = vmatprep.subr.bf16.mxu0 0
        %3055 = vmatpush1.bf16.msra.mxu0 0
        %3056 = vmatprep.mubr.bf16.mxu0 0
        %3057 = vmatmul.mubr.bf16.gmra.mrb[0].mxu0 %v3019
        %v3058 = vpop.f32.mrb[0].mxu0
        %v3059 = vadd.f32 0.0, %v3058
        %v3060 = vpop.f32.mrb[0].mxu0
        %v3061 = vpop.f32.mrb[0].mxu0
        %v3062 = vpop.f32.mrb[0].mxu0
        %3063 = vdwg.mxu0
        %v3065 = vsel %vm2272, %v2462, 0
        %v3068 = vsel %vm2468, %v1532, 0
        %3070 = vmatprep.subr.bf16.mxu0 0
        %3071 = vmatpush1.bf16.msra.mxu0 %v3068
        %3072 = vmatprep.subr.bf16.mxu0 0
        %3073 = vmatpush1.bf16.msra.mxu0 0
        %3074 = vmatprep.subr.bf16.mxu0 0
        %3075 = vmatpush1.bf16.msra.mxu0 0
        %3076 = vmatprep.subr.bf16.mxu0 0
        %3077 = vmatpush1.bf16.msra.mxu0 0
        %3078 = vmatprep.subr.bf16.mxu0 0
        %3079 = vmatpush1.bf16.msra.mxu0 0
        %3080 = vmatprep.subr.bf16.mxu0 0
        %3081 = vmatpush1.bf16.msra.mxu0 0
        %3082 = vmatprep.subr.bf16.mxu0 0
        %3083 = vmatpush1.bf16.msra.mxu0 0
        %3084 = vmatprep.subr.bf16.mxu0 0
        %3085 = vmatpush1.bf16.msra.mxu0 0
        %3086 = vmatprep.subr.bf16.mxu0 0
        %3087 = vmatpush1.bf16.msra.mxu0 0
        %3088 = vmatprep.subr.bf16.mxu0 0
        %3089 = vmatpush1.bf16.msra.mxu0 0
        %3090 = vmatprep.subr.bf16.mxu0 0
        %3091 = vmatpush1.bf16.msra.mxu0 0
        %3092 = vmatprep.subr.bf16.mxu0 0
        %3093 = vmatpush1.bf16.msra.mxu0 0
        %3094 = vmatprep.subr.bf16.mxu0 0
        %3095 = vmatpush1.bf16.msra.mxu0 0
        %3096 = vmatprep.subr.bf16.mxu0 0
        %3097 = vmatpush1.bf16.msra.mxu0 0
        %3098 = vmatprep.subr.bf16.mxu0 0
        %3099 = vmatpush1.bf16.msra.mxu0 0
        %3100 = vmatprep.subr.bf16.mxu0 0
        %3101 = vmatpush1.bf16.msra.mxu0 0
        %3102 = vmatprep.mubr.bf16.mxu0 0
        %3103 = vmatmul.mubr.bf16.gmra.mrb[0].mxu0 %v3065
        %v3104 = vpop.f32.mrb[0].mxu0
        %v3105 = vadd.f32 0.0, %v3104
        %v3106 = vpop.f32.mrb[0].mxu0
        %v3107 = vpop.f32.mrb[0].mxu0
        %v3108 = vpop.f32.mrb[0].mxu0
        %3109 = vdwg.mxu0
        %v3111 = vsel %vm2272, %v2463, 0
        %v3114 = vsel %vm2468, %v1533, 0
        %3116 = vmatprep.subr.bf16.mxu0 0
        %3117 = vmatpush1.bf16.msra.mxu0 %v3114
        %3118 = vmatprep.subr.bf16.mxu0 0
        %3119 = vmatpush1.bf16.msra.mxu0 0
        %3120 = vmatprep.subr.bf16.mxu0 0
        %3121 = vmatpush1.bf16.msra.mxu0 0
        %3122 = vmatprep.subr.bf16.mxu0 0
        %3123 = vmatpush1.bf16.msra.mxu0 0
        %3124 = vmatprep.subr.bf16.mxu0 0
        %3125 = vmatpush1.bf16.msra.mxu0 0
        %3126 = vmatprep.subr.bf16.mxu0 0
        %3127 = vmatpush1.bf16.msra.mxu0 0
        %3128 = vmatprep.subr.bf16.mxu0 0
        %3129 = vmatpush1.bf16.msra.mxu0 0
        %3130 = vmatprep.subr.bf16.mxu0 0
        %3131 = vmatpush1.bf16.msra.mxu0 0
        %3132 = vmatprep.subr.bf16.mxu0 0
        %3133 = vmatpush1.bf16.msra.mxu0 0
        %3134 = vmatprep.subr.bf16.mxu0 0
        %3135 = vmatpush1.bf16.msra.mxu0 0
        %3136 = vmatprep.subr.bf16.mxu0 0
        %3137 = vmatpush1.bf16.msra.mxu0 0
        %3138 = vmatprep.subr.bf16.mxu0 0
        %3139 = vmatpush1.bf16.msra.mxu0 0
        %3140 = vmatprep.subr.bf16.mxu0 0
        %3141 = vmatpush1.bf16.msra.mxu0 0
        %3142 = vmatprep.subr.bf16.mxu0 0
        %3143 = vmatpush1.bf16.msra.mxu0 0
        %3144 = vmatprep.subr.bf16.mxu0 0
        %3145 = vmatpush1.bf16.msra.mxu0 0
        %3146 = vmatprep.subr.bf16.mxu0 0
        %3147 = vmatpush1.bf16.msra.mxu0 0
        %3148 = vmatprep.mubr.bf16.mxu0 0
        %3149 = vmatmul.mubr.bf16.gmra.mrb[0].mxu0 %v3111
        %v3150 = vpop.f32.mrb[0].mxu0
        %v3151 = vadd.f32 0.0, %v3150
        %v3152 = vpop.f32.mrb[0].mxu0
        %v3153 = vpop.f32.mrb[0].mxu0
        %v3154 = vpop.f32.mrb[0].mxu0
        %3155 = vdwg.mxu0
        %v3157 = vsel %vm2272, %v2464, 0
        %v3160 = vsel %vm2468, %v1534, 0
        %3162 = vmatprep.subr.bf16.mxu0 0
        %3163 = vmatpush1.bf16.msra.mxu0 %v3160
        %3164 = vmatprep.subr.bf16.mxu0 0
        %3165 = vmatpush1.bf16.msra.mxu0 0
        %3166 = vmatprep.subr.bf16.mxu0 0
        %3167 = vmatpush1.bf16.msra.mxu0 0
        %3168 = vmatprep.subr.bf16.mxu0 0
        %3169 = vmatpush1.bf16.msra.mxu0 0
        %3170 = vmatprep.subr.bf16.mxu0 0
        %3171 = vmatpush1.bf16.msra.mxu0 0
        %3172 = vmatprep.subr.bf16.mxu0 0
        %3173 = vmatpush1.bf16.msra.mxu0 0
        %3174 = vmatprep.subr.bf16.mxu0 0
        %3175 = vmatpush1.bf16.msra.mxu0 0
        %3176 = vmatprep.subr.bf16.mxu0 0
        %3177 = vmatpush1.bf16.msra.mxu0 0
        %3178 = vmatprep.subr.bf16.mxu0 0
        %3179 = vmatpush1.bf16.msra.mxu0 0
        %3180 = vmatprep.subr.bf16.mxu0 0
        %3181 = vmatpush1.bf16.msra.mxu0 0
        %3182 = vmatprep.subr.bf16.mxu0 0
        %3183 = vmatpush1.bf16.msra.mxu0 0
        %3184 = vmatprep.subr.bf16.mxu0 0
        %3185 = vmatpush1.bf16.msra.mxu0 0
        %3186 = vmatprep.subr.bf16.mxu0 0
        %3187 = vmatpush1.bf16.msra.mxu0 0
        %3188 = vmatprep.subr.bf16.mxu0 0
        %3189 = vmatpush1.bf16.msra.mxu0 0
        %3190 = vmatprep.subr.bf16.mxu0 0
        %3191 = vmatpush1.bf16.msra.mxu0 0
        %3192 = vmatprep.subr.bf16.mxu0 0
        %3193 = vmatpush1.bf16.msra.mxu0 0
        %3194 = vmatprep.mubr.bf16.mxu0 0
        %3195 = vmatmul.mubr.bf16.gmra.mrb[0].mxu0 %v3157
        %v3196 = vpop.f32.mrb[0].mxu0
        %v3197 = vadd.f32 0.0, %v3196
        %v3198 = vpop.f32.mrb[0].mxu0
        %v3199 = vpop.f32.mrb[0].mxu0
        %v3200 = vpop.f32.mrb[0].mxu0
        %3201 = vdwg.mxu0
        %3206 = vrot.lane.b32.xlu0 %v2691, 32
        %v3207 = vpop.permute.xlu0 %3206
        %3208 = vrot.lane.b32.xlu0 %v2737, 32
        %v3209 = vpop.permute.xlu0 %3208
        %3210 = vrot.lane.b32.xlu0 %v2783, 32
        %v3211 = vpop.permute.xlu0 %3210
        %3212 = vrot.lane.b32.xlu0 %v2829, 32
        %v3213 = vpop.permute.xlu0 %3212
        %3222 = vrot.lane.b32.xlu0 %v2875, 64
        %v3223 = vpop.permute.xlu0 %3222
        %3224 = vrot.lane.b32.xlu0 %v2921, 64
        %v3225 = vpop.permute.xlu0 %3224
        %3226 = vrot.lane.b32.xlu0 %v2967, 64
        %v3227 = vpop.permute.xlu0 %3226
        %3228 = vrot.lane.b32.xlu0 %v3013, 64
        %v3229 = vpop.permute.xlu0 %3228
        %3238 = vrot.lane.b32.xlu0 %v3059, 96
        %v3239 = vpop.permute.xlu0 %3238
        %3240 = vrot.lane.b32.xlu0 %v3105, 96
        %v3241 = vpop.permute.xlu0 %3240
        %3242 = vrot.lane.b32.xlu0 %v3151, 96
        %v3243 = vpop.permute.xlu0 %3242
        %3244 = vrot.lane.b32.xlu0 %v3197, 96
        %v3245 = vpop.permute.xlu0 %3244
        %v3250 = vsel %vm1535, %v2507, %v3207
        %v3251 = vsel %vm1535, %v2553, %v3209
        %v3252 = vsel %vm1535, %v2599, %v3211
        %v3253 = vsel %vm1535, %v2645, %v3213
        %vm3254 = vcmask 523264
        %v3255 = vsel %vm3254, %v3250, %v3223
        %v3256 = vsel %vm3254, %v3251, %v3225
        %v3257 = vsel %vm3254, %v3252, %v3227
        %v3258 = vsel %vm3254, %v3253, %v3229
        %vm3259 = vcmask 785408
        %v3260 = vsel %vm3259, %v3255, %v3239
        %v3261 = vsel %vm3259, %v3256, %v3241
        %v3262 = vsel %vm3259, %v3257, %v3243
        %v3263 = vsel %vm3259, %v3258, %v3245
        %v3264 = vpack.c.bf16 %v3261, %v3260
        %v3265 = vpack.c.bf16 %v3263, %v3262
        %v3282 = vunpack.c.l.b16 %v927
        %v3283 = vunpack.c.l.b16 %v928
        %v3284 = vunpack.c.l.b16 %v929
        %v3285 = vunpack.c.l.b16 %v930
        %v3286 = vunpack.c.l.b16 %v931
        %v3287 = vunpack.c.l.b16 %v932
        %v3288 = vunpack.c.l.b16 %v933
        %v3289 = vunpack.c.l.b16 %v934
        %v3290 = vunpack.c.l.b16 %v935
        %v3291 = vunpack.c.l.b16 %v936
        %v3292 = vunpack.c.l.b16 %v937
        %v3293 = vunpack.c.l.b16 %v938
        %v3294 = vunpack.c.l.b16 %v939
        %v3295 = vunpack.c.l.b16 %v940
        %v3296 = vunpack.c.l.b16 %v941
        %v3297 = vunpack.c.l.b16 %v942
        %v3298 = vpack.c.b16 %v3283, %v3282
        %v3299 = vpack.c.b16 %v3285, %v3284
        %v3300 = vpack.c.b16 %v3287, %v3286
        %v3301 = vpack.c.b16 %v3289, %v3288
        %v3302 = vpack.c.b16 %v3291, %v3290
        %v3303 = vpack.c.b16 %v3293, %v3292
        %v3304 = vpack.c.b16 %v3295, %v3294
        %v3305 = vpack.c.b16 %v3297, %v3296
        %3314 = vmatprep.subr.bf16.mxu0 0
        %3315 = vmatpush1.bf16.msra.mxu0 %v3298
        %3316 = vmatprep.subr.bf16.mxu0 0
        %3317 = vmatpush1.bf16.msra.mxu0 %v3299
        %3318 = vmatprep.subr.bf16.mxu0 0
        %3319 = vmatpush1.bf16.msra.mxu0 %v3300
        %3320 = vmatprep.subr.bf16.mxu0 0
        %3321 = vmatpush1.bf16.msra.mxu0 %v3301
        %3322 = vmatprep.subr.bf16.mxu0 0
        %3323 = vmatpush1.bf16.msra.mxu0 %v3302
        %3324 = vmatprep.subr.bf16.mxu0 0
        %3325 = vmatpush1.bf16.msra.mxu0 %v3303
        %3326 = vmatprep.subr.bf16.mxu0 0
        %3327 = vmatpush1.bf16.msra.mxu0 %v3304
        %3328 = vmatprep.subr.bf16.mxu0 0
        %3329 = vmatpush1.bf16.msra.mxu0 %v3305
        %3330 = vmatprep.subr.bf16.mxu0 0
        %3331 = vmatpush1.bf16.msra.mxu0 0
        %3332 = vmatprep.subr.bf16.mxu0 0
        %3333 = vmatpush1.bf16.msra.mxu0 0
        %3334 = vmatprep.subr.bf16.mxu0 0
        %3335 = vmatpush1.bf16.msra.mxu0 0
        %3336 = vmatprep.subr.bf16.mxu0 0
        %3337 = vmatpush1.bf16.msra.mxu0 0
        %3338 = vmatprep.subr.bf16.mxu0 0
        %3339 = vmatpush1.bf16.msra.mxu0 0
        %3340 = vmatprep.subr.bf16.mxu0 0
        %3341 = vmatpush1.bf16.msra.mxu0 0
        %3342 = vmatprep.subr.bf16.mxu0 0
        %3343 = vmatpush1.bf16.msra.mxu0 0
        %3344 = vmatprep.subr.bf16.mxu0 0
        %3345 = vmatpush1.bf16.msra.mxu0 0
        %3346 = vmatprep.mubr.bf16.mxu0 0
        %3347 = vmatmul.mubr.bf16.gmra.mrb[0].mxu0 %v3264
        %v3348 = vpop.f32.mrb[0].mxu0
        %v3349 = vadd.f32 0.0, %v3348
        %v3350 = vpop.f32.mrb[0].mxu0
        %v3351 = vpop.f32.mrb[0].mxu0
        %v3352 = vadd.f32 0.0, %v3351
        %v3353 = vpop.f32.mrb[0].mxu0
        %3354 = vmatprep.mubr.bf16.mxu0 0
        %3355 = vmatmul.mubr.bf16.gmra.mrb[0].mxu0 %v3265
        %v3356 = vpop.f32.mrb[0].mxu0
        %v3357 = vadd.f32 0.0, %v3356
        %v3358 = vpop.f32.mrb[0].mxu0
        %v3359 = vpop.f32.mrb[0].mxu0
        %v3360 = vadd.f32 0.0, %v3359
        %v3361 = vpop.f32.mrb[0].mxu0
        %3362 = vdwg.mxu0
        %v3363 = vadd.f32 %v889, %v3349
        %v3364 = vadd.f32 %v890, %v3352
        %v3365 = vadd.f32 %v891, %v3357
        %v3366 = vadd.f32 %v892, %v3360
        %v3368 = vlaneseq
        %v3369 = vshrl.u32 %v3368, 7
        %v3370 = vsub.s32 0, %v3369
        %v3371 = vrot.slane %v943, %v3370
        %v3373 = vadd.f32 %v3363, %v3371
        %v3374 = vadd.f32 %v3364, %v3371
        %v3375 = vadd.f32 %v3365, %v3371
        %v3376 = vadd.f32 %v3366, %v3371
        %3377 = vadd.xlane.f32.xlu0 %v3373
        %v3378 = vpop.xlane.xlu0 %3377
        %3379 = vadd.xlane.f32.xlu0 %v3374
        %v3380 = vpop.xlane.xlu0 %3379
        %3381 = vadd.xlane.f32.xlu0 %v3375
        %v3382 = vpop.xlane.xlu0 %3381
        %3383 = vadd.xlane.f32.xlu0 %v3376
        %v3384 = vpop.xlane.xlu0 %3383
        %v3385 = vmul.f32 %v3378, %v1054
        %v3386 = vmul.f32 %v3380, %v1054
        %v3387 = vmul.f32 %v3382, %v1054
        %v3388 = vmul.f32 %v3384, %v1054
        %v3389 = vmul.f32 %v3373, %v3373
        %v3390 = vmul.f32 %v3374, %v3374
        %v3391 = vmul.f32 %v3375, %v3375
        %v3392 = vmul.f32 %v3376, %v3376
        %3393 = vadd.xlane.f32.xlu0 %v3389
        %v3394 = vpop.xlane.xlu0 %3393
        %3395 = vadd.xlane.f32.xlu0 %v3390
        %v3396 = vpop.xlane.xlu0 %3395
        %3397 = vadd.xlane.f32.xlu0 %v3391
        %v3398 = vpop.xlane.xlu0 %3397
        %3399 = vadd.xlane.f32.xlu0 %v3392
        %v3400 = vpop.xlane.xlu0 %3399
        %v3401 = vmul.f32 %v3394, %v1054
        %v3402 = vmul.f32 %v3396, %v1054
        %v3403 = vmul.f32 %v3398, %v1054
        %v3404 = vmul.f32 %v3400, %v1054
        %v3405 = vmul.f32 %v3385, %v3385
        %v3406 = vmul.f32 %v3386, %v3386
        %v3407 = vmul.f32 %v3387, %v3387
        %v3408 = vmul.f32 %v3388, %v3388
        %v3409 = vsub.f32 %v3401, %v3405
        %v3410 = vsub.f32 %v3402, %v3406
        %v3411 = vsub.f32 %v3403, %v3407
        %v3412 = vsub.f32 %v3404, %v3408
        %v3413 = vsub.f32 %v3373, %v3385
        %v3414 = vsub.f32 %v3374, %v3386
        %v3415 = vsub.f32 %v3375, %v3387
        %v3416 = vsub.f32 %v3376, %v3388
        %v3417 = vadd.f32 %v3409, 1e-05
        %v3418 = vadd.f32 %v3410, 1e-05
        %v3419 = vadd.f32 %v3411, 1e-05
        %v3420 = vadd.f32 %v3412, 1e-05
        %v3421 = vrsqrt.pop %v3417
        %v3422 = vrsqrt.pop %v3418
        %v3423 = vrsqrt.pop %v3419
        %v3424 = vrsqrt.pop %v3420
        %v3425 = vmul.f32 %v3413, %v3421
        %v3426 = vmul.f32 %v3414, %v3422
        %v3427 = vmul.f32 %v3415, %v3423
        %v3428 = vmul.f32 %v3416, %v3424
        %v3430 = vlaneseq
        %v3431 = vshrl.u32 %v3430, 7
        %v3432 = vsub.s32 0, %v3431
        %v3433 = vrot.slane %v946, %v3432
        %v3435 = vmul.f32 %v3425, %v3433
        %v3436 = vmul.f32 %v3426, %v3433
        %v3437 = vmul.f32 %v3427, %v3433
        %v3438 = vmul.f32 %v3428, %v3433
        %v3440 = vlaneseq
        %v3441 = vshrl.u32 %v3440, 7
        %v3442 = vsub.s32 0, %v3441
        %v3443 = vrot.slane %v947, %v3442
        %v3445 = vadd.f32 %v3435, %v3443
        %v3446 = vadd.f32 %v3436, %v3443
        %v3447 = vadd.f32 %v3437, %v3443
        %v3448 = vadd.f32 %v3438, %v3443
        %v3449 = vpack.c.bf16 %v3446, %v3445
        %v3450 = vpack.c.bf16 %v3448, %v3447
        %v3452 = vlaneseq
        %v3453 = vshrl.u32 %v3452, 7
        %v3454 = vsub.s32 0, %v3453
        %v3455 = vrot.slane %v980, %v3454
        %v3456 = vlaneseq
        %v3457 = vshrl.u32 %v3456, 7
        %v3458 = vsub.s32 1, %v3457
        %v3459 = vrot.slane %v980, %v3458
        %v3460 = vlaneseq
        %v3461 = vshrl.u32 %v3460, 7
        %v3462 = vsub.s32 2, %v3461
        %v3463 = vrot.slane %v980, %v3462
        %v3464 = vlaneseq
        %v3465 = vshrl.u32 %v3464, 7
        %v3466 = vsub.s32 3, %v3465
        %v3467 = vrot.slane %v980, %v3466
        %v3504 = vunpack.c.l.b16 %v948
        %v3505 = vunpack.c.h.b16 %v948
        %v3506 = vunpack.c.l.b16 %v949
        %v3507 = vunpack.c.h.b16 %v949
        %v3508 = vunpack.c.l.b16 %v950
        %v3509 = vunpack.c.h.b16 %v950
        %v3510 = vunpack.c.l.b16 %v951
        %v3511 = vunpack.c.h.b16 %v951
        %v3512 = vunpack.c.l.b16 %v952
        %v3513 = vunpack.c.h.b16 %v952
        %v3514 = vunpack.c.l.b16 %v953
        %v3515 = vunpack.c.h.b16 %v953
        %v3516 = vunpack.c.l.b16 %v954
        %v3517 = vunpack.c.h.b16 %v954
        %v3518 = vunpack.c.l.b16 %v955
        %v3519 = vunpack.c.h.b16 %v955
        %v3520 = vunpack.c.l.b16 %v956
        %v3521 = vunpack.c.h.b16 %v956
        %v3522 = vunpack.c.l.b16 %v957
        %v3523 = vunpack.c.h.b16 %v957
        %v3524 = vunpack.c.l.b16 %v958
        %v3525 = vunpack.c.h.b16 %v958
        %v3526 = vunpack.c.l.b16 %v959
        %v3527 = vunpack.c.h.b16 %v959
        %v3528 = vunpack.c.l.b16 %v960
        %v3529 = vunpack.c.h.b16 %v960
        %v3530 = vunpack.c.l.b16 %v961
        %v3531 = vunpack.c.h.b16 %v961
        %v3532 = vunpack.c.l.b16 %v962
        %v3533 = vunpack.c.h.b16 %v962
        %v3534 = vunpack.c.l.b16 %v963
        %v3535 = vunpack.c.h.b16 %v963
        %v3536 = vunpack.c.l.b16 %v964
        %v3537 = vunpack.c.h.b16 %v964
        %v3538 = vunpack.c.l.b16 %v965
        %v3539 = vunpack.c.h.b16 %v965
        %v3540 = vunpack.c.l.b16 %v966
        %v3541 = vunpack.c.h.b16 %v966
        %v3542 = vunpack.c.l.b16 %v967
        %v3543 = vunpack.c.h.b16 %v967
        %v3544 = vunpack.c.l.b16 %v968
        %v3545 = vunpack.c.h.b16 %v968
        %v3546 = vunpack.c.l.b16 %v969
        %v3547 = vunpack.c.h.b16 %v969
        %v3548 = vunpack.c.l.b16 %v970
        %v3549 = vunpack.c.h.b16 %v970
        %v3550 = vunpack.c.l.b16 %v971
        %v3551 = vunpack.c.h.b16 %v971
        %v3552 = vunpack.c.l.b16 %v972
        %v3553 = vunpack.c.h.b16 %v972
        %v3554 = vunpack.c.l.b16 %v973
        %v3555 = vunpack.c.h.b16 %v973
        %v3556 = vunpack.c.l.b16 %v974
        %v3557 = vunpack.c.h.b16 %v974
        %v3558 = vunpack.c.l.b16 %v975
        %v3559 = vunpack.c.h.b16 %v975
        %v3560 = vunpack.c.l.b16 %v976
        %v3561 = vunpack.c.h.b16 %v976
        %v3562 = vunpack.c.l.b16 %v977
        %v3563 = vunpack.c.h.b16 %v977
        %v3564 = vunpack.c.l.b16 %v978
        %v3565 = vunpack.c.h.b16 %v978
        %v3566 = vunpack.c.l.b16 %v979
        %v3567 = vunpack.c.h.b16 %v979
        %v3568 = vpack.c.b16 %v3508, %v3504
        %v3569 = vpack.c.b16 %v3509, %v3505
        %v3570 = vpack.c.b16 %v3510, %v3506
        %v3571 = vpack.c.b16 %v3511, %v3507
        %v3572 = vpack.c.b16 %v3516, %v3512
        %v3573 = vpack.c.b16 %v3517, %v3513
        %v3574 = vpack.c.b16 %v3518, %v3514
        %v3575 = vpack.c.b16 %v3519, %v3515
        %v3576 = vpack.c.b16 %v3524, %v3520
        %v3577 = vpack.c.b16 %v3525, %v3521
        %v3578 = vpack.c.b16 %v3526, %v3522
        %v3579 = vpack.c.b16 %v3527, %v3523
        %v3580 = vpack.c.b16 %v3532, %v3528
        %v3581 = vpack.c.b16 %v3533, %v3529
        %v3582 = vpack.c.b16 %v3534, %v3530
        %v3583 = vpack.c.b16 %v3535, %v3531
        %v3584 = vpack.c.b16 %v3540, %v3536
        %v3585 = vpack.c.b16 %v3541, %v3537
        %v3586 = vpack.c.b16 %v3542, %v3538
        %v3587 = vpack.c.b16 %v3543, %v3539
        %v3588 = vpack.c.b16 %v3548, %v3544
        %v3589 = vpack.c.b16 %v3549, %v3545
        %v3590 = vpack.c.b16 %v3550, %v3546
        %v3591 = vpack.c.b16 %v3551, %v3547
        %v3592 = vpack.c.b16 %v3556, %v3552
        %v3593 = vpack.c.b16 %v3557, %v3553
        %v3594 = vpack.c.b16 %v3558, %v3554
        %v3595 = vpack.c.b16 %v3559, %v3555
        %v3596 = vpack.c.b16 %v3564, %v3560
        %v3597 = vpack.c.b16 %v3565, %v3561
        %v3598 = vpack.c.b16 %v3566, %v3562
        %v3599 = vpack.c.b16 %v3567, %v3563
        %3632 = vmatprep.subr.bf16.mxu0 %v3569
        %3633 = vmatpush1.bf16.msra.mxu0 %v3568
        %3634 = vmatprep.subr.bf16.mxu0 %v3573
        %3635 = vmatpush1.bf16.msra.mxu0 %v3572
        %3636 = vmatprep.subr.bf16.mxu0 %v3577
        %3637 = vmatpush1.bf16.msra.mxu0 %v3576
        %3638 = vmatprep.subr.bf16.mxu0 %v3581
        %3639 = vmatpush1.bf16.msra.mxu0 %v3580
        %3640 = vmatprep.subr.bf16.mxu0 %v3585
        %3641 = vmatpush1.bf16.msra.mxu0 %v3584
        %3642 = vmatprep.subr.bf16.mxu0 %v3589
        %3643 = vmatpush1.bf16.msra.mxu0 %v3588
        %3644 = vmatprep.subr.bf16.mxu0 %v3593
        %3645 = vmatpush1.bf16.msra.mxu0 %v3592
        %3646 = vmatprep.subr.bf16.mxu0 %v3597
        %3647 = vmatpush1.bf16.msra.mxu0 %v3596
        %3648 = vmatprep.subr.bf16.mxu0 0
        %3649 = vmatpush1.bf16.msra.mxu0 0
        %3650 = vmatprep.subr.bf16.mxu0 0
        %3651 = vmatpush1.bf16.msra.mxu0 0
        %3652 = vmatprep.subr.bf16.mxu0 0
        %3653 = vmatpush1.bf16.msra.mxu0 0
        %3654 = vmatprep.subr.bf16.mxu0 0
        %3655 = vmatpush1.bf16.msra.mxu0 0
        %3656 = vmatprep.subr.bf16.mxu0 0
        %3657 = vmatpush1.bf16.msra.mxu0 0
        %3658 = vmatprep.subr.bf16.mxu0 0
        %3659 = vmatpush1.bf16.msra.mxu0 0
        %3660 = vmatprep.subr.bf16.mxu0 0
        %3661 = vmatpush1.bf16.msra.mxu0 0
        %3662 = vmatprep.subr.bf16.mxu0 0
        %3663 = vmatpush1.bf16.msra.mxu0 0
        %3664 = vmatprep.mubr.bf16.mxu0 0
        %3665 = vmatmul.mubr.bf16.gmra.mrb[0].mxu0 %v3449
        %v3666 = vpop.f32.mrb[0].mxu0
        %v3667 = vadd.f32 %v3455, %v3666
        %v3668 = vpop.f32.mrb[0].mxu0
        %v3669 = vadd.f32 %v3459, %v3668
        %v3670 = vpop.f32.mrb[0].mxu0
        %v3671 = vadd.f32 %v3455, %v3670
        %v3672 = vpop.f32.mrb[0].mxu0
        %v3673 = vadd.f32 %v3459, %v3672
        %3674 = vmatprep.mubr.bf16.mxu0 0
        %3675 = vmatmul.mubr.bf16.gmra.mrb[0].mxu0 %v3450
        %v3676 = vpop.f32.mrb[0].mxu0
        %v3677 = vadd.f32 %v3455, %v3676
        %v3678 = vpop.f32.mrb[0].mxu0
        %v3679 = vadd.f32 %v3459, %v3678
        %v3680 = vpop.f32.mrb[0].mxu0
        %v3681 = vadd.f32 %v3455, %v3680
        %v3682 = vpop.f32.mrb[0].mxu0
        %v3683 = vadd.f32 %v3459, %v3682
        %3684 = vdwg.mxu0
        %3685 = vmatprep.subr.bf16.mxu0 %v3571
        %3686 = vmatpush1.bf16.msra.mxu0 %v3570
        %3687 = vmatprep.subr.bf16.mxu0 %v3575
        %3688 = vmatpush1.bf16.msra.mxu0 %v3574
        %3689 = vmatprep.subr.bf16.mxu0 %v3579
        %3690 = vmatpush1.bf16.msra.mxu0 %v3578
        %3691 = vmatprep.subr.bf16.mxu0 %v3583
        %3692 = vmatpush1.bf16.msra.mxu0 %v3582
        %3693 = vmatprep.subr.bf16.mxu0 %v3587
        %3694 = vmatpush1.bf16.msra.mxu0 %v3586
        %3695 = vmatprep.subr.bf16.mxu0 %v3591
        %3696 = vmatpush1.bf16.msra.mxu0 %v3590
        %3697 = vmatprep.subr.bf16.mxu0 %v3595
        %3698 = vmatpush1.bf16.msra.mxu0 %v3594
        %3699 = vmatprep.subr.bf16.mxu0 %v3599
        %3700 = vmatpush1.bf16.msra.mxu0 %v3598
        %3701 = vmatprep.subr.bf16.mxu0 0
        %3702 = vmatpush1.bf16.msra.mxu0 0
        %3703 = vmatprep.subr.bf16.mxu0 0
        %3704 = vmatpush1.bf16.msra.mxu0 0
        %3705 = vmatprep.subr.bf16.mxu0 0
        %3706 = vmatpush1.bf16.msra.mxu0 0
        %3707 = vmatprep.subr.bf16.mxu0 0
        %3708 = vmatpush1.bf16.msra.mxu0 0
        %3709 = vmatprep.subr.bf16.mxu0 0
        %3710 = vmatpush1.bf16.msra.mxu0 0
        %3711 = vmatprep.subr.bf16.mxu0 0
        %3712 = vmatpush1.bf16.msra.mxu0 0
        %3713 = vmatprep.subr.bf16.mxu0 0
        %3714 = vmatpush1.bf16.msra.mxu0 0
        %3715 = vmatprep.subr.bf16.mxu0 0
        %3716 = vmatpush1.bf16.msra.mxu0 0
        %3717 = vmatprep.mubr.bf16.mxu0 0
        %3718 = vmatmul.mubr.bf16.gmra.mrb[0].mxu0 %v3449
        %v3719 = vpop.f32.mrb[0].mxu0
        %v3720 = vadd.f32 %v3463, %v3719
        %v3721 = vpop.f32.mrb[0].mxu0
        %v3722 = vadd.f32 %v3467, %v3721
        %v3723 = vpop.f32.mrb[0].mxu0
        %v3724 = vadd.f32 %v3463, %v3723
        %v3725 = vpop.f32.mrb[0].mxu0
        %v3726 = vadd.f32 %v3467, %v3725
        %3727 = vmatprep.mubr.bf16.mxu0 0
        %3728 = vmatmul.mubr.bf16.gmra.mrb[0].mxu0 %v3450
        %v3729 = vpop.f32.mrb[0].mxu0
        %v3730 = vadd.f32 %v3463, %v3729
        %v3731 = vpop.f32.mrb[0].mxu0
        %v3732 = vadd.f32 %v3467, %v3731
        %v3733 = vpop.f32.mrb[0].mxu0
        %v3734 = vadd.f32 %v3463, %v3733
        %v3735 = vpop.f32.mrb[0].mxu0
        %v3736 = vadd.f32 %v3467, %v3735
        %3737 = vdwg.mxu0
        %v3738 = vmul.f32 %v3667, %v3667
        %v3739 = vmul.f32 %v3669, %v3669
        %v3740 = vmul.f32 %v3720, %v3720
        %v3741 = vmul.f32 %v3722, %v3722
        %v3742 = vmul.f32 %v3671, %v3671
        %v3743 = vmul.f32 %v3673, %v3673
        %v3744 = vmul.f32 %v3724, %v3724
        %v3745 = vmul.f32 %v3726, %v3726
        %v3746 = vmul.f32 %v3677, %v3677
        %v3747 = vmul.f32 %v3679, %v3679
        %v3748 = vmul.f32 %v3730, %v3730
        %v3749 = vmul.f32 %v3732, %v3732
        %v3750 = vmul.f32 %v3681, %v3681
        %v3751 = vmul.f32 %v3683, %v3683
        %v3752 = vmul.f32 %v3734, %v3734
        %v3753 = vmul.f32 %v3736, %v3736
        %v3754 = vmul.f32 %v3667, %v3738
        %v3755 = vmul.f32 %v3669, %v3739
        %v3756 = vmul.f32 %v3720, %v3740
        %v3757 = vmul.f32 %v3722, %v3741
        %v3758 = vmul.f32 %v3671, %v3742
        %v3759 = vmul.f32 %v3673, %v3743
        %v3760 = vmul.f32 %v3724, %v3744
        %v3761 = vmul.f32 %v3726, %v3745
        %v3762 = vmul.f32 %v3677, %v3746
        %v3763 = vmul.f32 %v3679, %v3747
        %v3764 = vmul.f32 %v3730, %v3748
        %v3765 = vmul.f32 %v3732, %v3749
        %v3766 = vmul.f32 %v3681, %v3750
        %v3767 = vmul.f32 %v3683, %v3751
        %v3768 = vmul.f32 %v3734, %v3752
        %v3769 = vmul.f32 %v3736, %v3753
        %v3770 = vmul.f32 %v3754, 0.044715
        %v3771 = vmul.f32 %v3755, 0.044715
        %v3772 = vmul.f32 %v3756, 0.044715
        %v3773 = vmul.f32 %v3757, 0.044715
        %v3774 = vmul.f32 %v3758, 0.044715
        %v3775 = vmul.f32 %v3759, 0.044715
        %v3776 = vmul.f32 %v3760, 0.044715
        %v3777 = vmul.f32 %v3761, 0.044715
        %v3778 = vmul.f32 %v3762, 0.044715
        %v3779 = vmul.f32 %v3763, 0.044715
        %v3780 = vmul.f32 %v3764, 0.044715
        %v3781 = vmul.f32 %v3765, 0.044715
        %v3782 = vmul.f32 %v3766, 0.044715
        %v3783 = vmul.f32 %v3767, 0.044715
        %v3784 = vmul.f32 %v3768, 0.044715
        %v3785 = vmul.f32 %v3769, 0.044715
        %v3786 = vadd.f32 %v3667, %v3770
        %v3787 = vadd.f32 %v3669, %v3771
        %v3788 = vadd.f32 %v3720, %v3772
        %v3789 = vadd.f32 %v3722, %v3773
        %v3790 = vadd.f32 %v3671, %v3774
        %v3791 = vadd.f32 %v3673, %v3775
        %v3792 = vadd.f32 %v3724, %v3776
        %v3793 = vadd.f32 %v3726, %v3777
        %v3794 = vadd.f32 %v3677, %v3778
        %v3795 = vadd.f32 %v3679, %v3779
        %v3796 = vadd.f32 %v3730, %v3780
        %v3797 = vadd.f32 %v3732, %v3781
        %v3798 = vadd.f32 %v3681, %v3782
        %v3799 = vadd.f32 %v3683, %v3783
        %v3800 = vadd.f32 %v3734, %v3784
        %v3801 = vadd.f32 %v3736, %v3785
        %v3802 = vmul.f32 %v3786, 0.7978846
        %v3803 = vmul.f32 %v3787, 0.7978846
        %v3804 = vmul.f32 %v3788, 0.7978846
        %v3805 = vmul.f32 %v3789, 0.7978846
        %v3806 = vmul.f32 %v3790, 0.7978846
        %v3807 = vmul.f32 %v3791, 0.7978846
        %v3808 = vmul.f32 %v3792, 0.7978846
        %v3809 = vmul.f32 %v3793, 0.7978846
        %v3810 = vmul.f32 %v3794, 0.7978846
        %v3811 = vmul.f32 %v3795, 0.7978846
        %v3812 = vmul.f32 %v3796, 0.7978846
        %v3813 = vmul.f32 %v3797, 0.7978846
        %v3814 = vmul.f32 %v3798, 0.7978846
        %v3815 = vmul.f32 %v3799, 0.7978846
        %v3816 = vmul.f32 %v3800, 0.7978846
        %v3817 = vmul.f32 %v3801, 0.7978846
        %v3818 = vtanh.pop %v3802
        %v3819 = vtanh.pop %v3803
        %v3820 = vtanh.pop %v3804
        %v3821 = vtanh.pop %v3805
        %v3822 = vtanh.pop %v3806
        %v3823 = vtanh.pop %v3807
        %v3824 = vtanh.pop %v3808
        %v3825 = vtanh.pop %v3809
        %v3826 = vtanh.pop %v3810
        %v3827 = vtanh.pop %v3811
        %v3828 = vtanh.pop %v3812
        %v3829 = vtanh.pop %v3813
        %v3830 = vtanh.pop %v3814
        %v3831 = vtanh.pop %v3815
        %v3832 = vtanh.pop %v3816
        %v3833 = vtanh.pop %v3817
        %v3834 = vadd.f32 %v3818, 1.0
        %v3835 = vadd.f32 %v3819, 1.0
        %v3836 = vadd.f32 %v3820, 1.0
        %v3837 = vadd.f32 %v3821, 1.0
        %v3838 = vadd.f32 %v3822, 1.0
        %v3839 = vadd.f32 %v3823, 1.0
        %v3840 = vadd.f32 %v3824, 1.0
        %v3841 = vadd.f32 %v3825, 1.0
        %v3842 = vadd.f32 %v3826, 1.0
        %v3843 = vadd.f32 %v3827, 1.0
        %v3844 = vadd.f32 %v3828, 1.0
        %v3845 = vadd.f32 %v3829, 1.0
        %v3846 = vadd.f32 %v3830, 1.0
        %v3847 = vadd.f32 %v3831, 1.0
        %v3848 = vadd.f32 %v3832, 1.0
        %v3849 = vadd.f32 %v3833, 1.0
        %v3850 = vmul.f32 %v3834, 0.5
        %v3851 = vmul.f32 %v3835, 0.5
        %v3852 = vmul.f32 %v3836, 0.5
        %v3853 = vmul.f32 %v3837, 0.5
        %v3854 = vmul.f32 %v3838, 0.5
        %v3855 = vmul.f32 %v3839, 0.5
        %v3856 = vmul.f32 %v3840, 0.5
        %v3857 = vmul.f32 %v3841, 0.5
        %v3858 = vmul.f32 %v3842, 0.5
        %v3859 = vmul.f32 %v3843, 0.5
        %v3860 = vmul.f32 %v3844, 0.5
        %v3861 = vmul.f32 %v3845, 0.5
        %v3862 = vmul.f32 %v3846, 0.5
        %v3863 = vmul.f32 %v3847, 0.5
        %v3864 = vmul.f32 %v3848, 0.5
        %v3865 = vmul.f32 %v3849, 0.5
        %v3866 = vmul.f32 %v3667, %v3850
        %v3867 = vmul.f32 %v3669, %v3851
        %v3868 = vmul.f32 %v3720, %v3852
        %v3869 = vmul.f32 %v3722, %v3853
        %v3870 = vmul.f32 %v3671, %v3854
        %v3871 = vmul.f32 %v3673, %v3855
        %v3872 = vmul.f32 %v3724, %v3856
        %v3873 = vmul.f32 %v3726, %v3857
        %v3874 = vmul.f32 %v3677, %v3858
        %v3875 = vmul.f32 %v3679, %v3859
        %v3876 = vmul.f32 %v3730, %v3860
        %v3877 = vmul.f32 %v3732, %v3861
        %v3878 = vmul.f32 %v3681, %v3862
        %v3879 = vmul.f32 %v3683, %v3863
        %v3880 = vmul.f32 %v3734, %v3864
        %v3881 = vmul.f32 %v3736, %v3865
        %v3882 = vpack.c.bf16 %v3870, %v3866
        %v3883 = vpack.c.bf16 %v3871, %v3867
        %v3884 = vpack.c.bf16 %v3872, %v3868
        %v3885 = vpack.c.bf16 %v3873, %v3869
        %v3886 = vpack.c.bf16 %v3878, %v3874
        %v3887 = vpack.c.bf16 %v3879, %v3875
        %v3888 = vpack.c.bf16 %v3880, %v3876
        %v3889 = vpack.c.bf16 %v3881, %v3877
        %v3954 = vunpack.c.l.b16 %v981
        %v3955 = vunpack.c.l.b16 %v982
        %v3956 = vunpack.c.l.b16 %v983
        %v3957 = vunpack.c.l.b16 %v984
        %v3958 = vunpack.c.l.b16 %v985
        %v3959 = vunpack.c.l.b16 %v986
        %v3960 = vunpack.c.l.b16 %v987
        %v3961 = vunpack.c.l.b16 %v988
        %v3962 = vunpack.c.l.b16 %v989
        %v3963 = vunpack.c.l.b16 %v990
        %v3964 = vunpack.c.l.b16 %v991
        %v3965 = vunpack.c.l.b16 %v992
        %v3966 = vunpack.c.l.b16 %v993
        %v3967 = vunpack.c.l.b16 %v994
        %v3968 = vunpack.c.l.b16 %v995
        %v3969 = vunpack.c.l.b16 %v996
        %v3970 = vunpack.c.l.b16 %v997
        %v3971 = vunpack.c.l.b16 %v998
        %v3972 = vunpack.c.l.b16 %v999
        %v3973 = vunpack.c.l.b16 %v1000
        %v3974 = vunpack.c.l.b16 %v1001
        %v3975 = vunpack.c.l.b16 %v1002
        %v3976 = vunpack.c.l.b16 %v1003
        %v3977 = vunpack.c.l.b16 %v1004
        %v3978 = vunpack.c.l.b16 %v1005
        %v3979 = vunpack.c.l.b16 %v1006
        %v3980 = vunpack.c.l.b16 %v1007
        %v3981 = vunpack.c.l.b16 %v1008
        %v3982 = vunpack.c.l.b16 %v1009
        %v3983 = vunpack.c.l.b16 %v1010
        %v3984 = vunpack.c.l.b16 %v1011
        %v3985 = vunpack.c.l.b16 %v1012
        %v3986 = vunpack.c.l.b16 %v1013
        %v3987 = vunpack.c.l.b16 %v1014
        %v3988 = vunpack.c.l.b16 %v1015
        %v3989 = vunpack.c.l.b16 %v1016
        %v3990 = vunpack.c.l.b16 %v1017
        %v3991 = vunpack.c.l.b16 %v1018
        %v3992 = vunpack.c.l.b16 %v1019
        %v3993 = vunpack.c.l.b16 %v1020
        %v3994 = vunpack.c.l.b16 %v1021
        %v3995 = vunpack.c.l.b16 %v1022
        %v3996 = vunpack.c.l.b16 %v1023
        %v3997 = vunpack.c.l.b16 %v1024
        %v3998 = vunpack.c.l.b16 %v1025
        %v3999 = vunpack.c.l.b16 %v1026
        %v4000 = vunpack.c.l.b16 %v1027
        %v4001 = vunpack.c.l.b16 %v1028
        %v4002 = vunpack.c.l.b16 %v1029
        %v4003 = vunpack.c.l.b16 %v1030
        %v4004 = vunpack.c.l.b16 %v1031
        %v4005 = vunpack.c.l.b16 %v1032
        %v4006 = vunpack.c.l.b16 %v1033
        %v4007 = vunpack.c.l.b16 %v1034
        %v4008 = vunpack.c.l.b16 %v1035
        %v4009 = vunpack.c.l.b16 %v1036
        %v4010 = vunpack.c.l.b16 %v1037
        %v4011 = vunpack.c.l.b16 %v1038
        %v4012 = vunpack.c.l.b16 %v1039
        %v4013 = vunpack.c.l.b16 %v1040
        %v4014 = vunpack.c.l.b16 %v1041
        %v4015 = vunpack.c.l.b16 %v1042
        %v4016 = vunpack.c.l.b16 %v1043
        %v4017 = vunpack.c.l.b16 %v1044
        %v4018 = vpack.c.b16 %v3955, %v3954
        %v4019 = vpack.c.b16 %v3957, %v3956
        %v4020 = vpack.c.b16 %v3959, %v3958
        %v4021 = vpack.c.b16 %v3961, %v3960
        %v4022 = vpack.c.b16 %v3963, %v3962
        %v4023 = vpack.c.b16 %v3965, %v3964
        %v4024 = vpack.c.b16 %v3967, %v3966
        %v4025 = vpack.c.b16 %v3969, %v3968
        %v4026 = vpack.c.b16 %v3971, %v3970
        %v4027 = vpack.c.b16 %v3973, %v3972
        %v4028 = vpack.c.b16 %v3975, %v3974
        %v4029 = vpack.c.b16 %v3977, %v3976
        %v4030 = vpack.c.b16 %v3979, %v3978
        %v4031 = vpack.c.b16 %v3981, %v3980
        %v4032 = vpack.c.b16 %v3983, %v3982
        %v4033 = vpack.c.b16 %v3985, %v3984
        %v4034 = vpack.c.b16 %v3987, %v3986
        %v4035 = vpack.c.b16 %v3989, %v3988
        %v4036 = vpack.c.b16 %v3991, %v3990
        %v4037 = vpack.c.b16 %v3993, %v3992
        %v4038 = vpack.c.b16 %v3995, %v3994
        %v4039 = vpack.c.b16 %v3997, %v3996
        %v4040 = vpack.c.b16 %v3999, %v3998
        %v4041 = vpack.c.b16 %v4001, %v4000
        %v4042 = vpack.c.b16 %v4003, %v4002
        %v4043 = vpack.c.b16 %v4005, %v4004
        %v4044 = vpack.c.b16 %v4007, %v4006
        %v4045 = vpack.c.b16 %v4009, %v4008
        %v4046 = vpack.c.b16 %v4011, %v4010
        %v4047 = vpack.c.b16 %v4013, %v4012
        %v4048 = vpack.c.b16 %v4015, %v4014
        %v4049 = vpack.c.b16 %v4017, %v4016
        %4082 = vmatprep.subr.bf16.mxu0 0
        %4083 = vmatpush1.bf16.msra.mxu0 %v4018
        %4084 = vmatprep.subr.bf16.mxu0 0
        %4085 = vmatpush1.bf16.msra.mxu0 %v4019
        %4086 = vmatprep.subr.bf16.mxu0 0
        %4087 = vmatpush1.bf16.msra.mxu0 %v4020
        %4088 = vmatprep.subr.bf16.mxu0 0
        %4089 = vmatpush1.bf16.msra.mxu0 %v4021
        %4090 = vmatprep.subr.bf16.mxu0 0
        %4091 = vmatpush1.bf16.msra.mxu0 %v4022
        %4092 = vmatprep.subr.bf16.mxu0 0
        %4093 = vmatpush1.bf16.msra.mxu0 %v4023
        %4094 = vmatprep.subr.bf16.mxu0 0
        %4095 = vmatpush1.bf16.msra.mxu0 %v4024
        %4096 = vmatprep.subr.bf16.mxu0 0
        %4097 = vmatpush1.bf16.msra.mxu0 %v4025
        %4098 = vmatprep.subr.bf16.mxu0 0
        %4099 = vmatpush1.bf16.msra.mxu0 %v4026
        %4100 = vmatprep.subr.bf16.mxu0 0
        %4101 = vmatpush1.bf16.msra.mxu0 %v4027
        %4102 = vmatprep.subr.bf16.mxu0 0
        %4103 = vmatpush1.bf16.msra.mxu0 %v4028
        %4104 = vmatprep.subr.bf16.mxu0 0
        %4105 = vmatpush1.bf16.msra.mxu0 %v4029
        %4106 = vmatprep.subr.bf16.mxu0 0
        %4107 = vmatpush1.bf16.msra.mxu0 %v4030
        %4108 = vmatprep.subr.bf16.mxu0 0
        %4109 = vmatpush1.bf16.msra.mxu0 %v4031
        %4110 = vmatprep.subr.bf16.mxu0 0
        %4111 = vmatpush1.bf16.msra.mxu0 %v4032
        %4112 = vmatprep.subr.bf16.mxu0 0
        %4113 = vmatpush1.bf16.msra.mxu0 %v4033
        %4114 = vmatprep.mubr.bf16.mxu0 %v3883
        %4115 = vmatmul.mubr.bf16.gmra.mrb[0].mxu0 %v3882
        %v4116 = vpop.f32.mrb[0].mxu0
        %v4117 = vadd.f32 0.0, %v4116
        %v4118 = vpop.f32.mrb[0].mxu0
        %v4119 = vpop.f32.mrb[0].mxu0
        %v4120 = vadd.f32 0.0, %v4119
        %v4121 = vpop.f32.mrb[0].mxu0
        %4122 = vmatprep.mubr.bf16.mxu0 %v3887
        %4123 = vmatmul.mubr.bf16.gmra.mrb[0].mxu0 %v3886
        %v4124 = vpop.f32.mrb[0].mxu0
        %v4125 = vadd.f32 0.0, %v4124
        %v4126 = vpop.f32.mrb[0].mxu0
        %v4127 = vpop.f32.mrb[0].mxu0
        %v4128 = vadd.f32 0.0, %v4127
        %v4129 = vpop.f32.mrb[0].mxu0
        %4130 = vdwg.mxu0
        %4131 = vmatprep.subr.bf16.mxu0 0
        %4132 = vmatpush1.bf16.msra.mxu0 %v4034
        %4133 = vmatprep.subr.bf16.mxu0 0
        %4134 = vmatpush1.bf16.msra.mxu0 %v4035
        %4135 = vmatprep.subr.bf16.mxu0 0
        %4136 = vmatpush1.bf16.msra.mxu0 %v4036
        %4137 = vmatprep.subr.bf16.mxu0 0
        %4138 = vmatpush1.bf16.msra.mxu0 %v4037
        %4139 = vmatprep.subr.bf16.mxu0 0
        %4140 = vmatpush1.bf16.msra.mxu0 %v4038
        %4141 = vmatprep.subr.bf16.mxu0 0
        %4142 = vmatpush1.bf16.msra.mxu0 %v4039
        %4143 = vmatprep.subr.bf16.mxu0 0
        %4144 = vmatpush1.bf16.msra.mxu0 %v4040
        %4145 = vmatprep.subr.bf16.mxu0 0
        %4146 = vmatpush1.bf16.msra.mxu0 %v4041
        %4147 = vmatprep.subr.bf16.mxu0 0
        %4148 = vmatpush1.bf16.msra.mxu0 %v4042
        %4149 = vmatprep.subr.bf16.mxu0 0
        %4150 = vmatpush1.bf16.msra.mxu0 %v4043
        %4151 = vmatprep.subr.bf16.mxu0 0
        %4152 = vmatpush1.bf16.msra.mxu0 %v4044
        %4153 = vmatprep.subr.bf16.mxu0 0
        %4154 = vmatpush1.bf16.msra.mxu0 %v4045
        %4155 = vmatprep.subr.bf16.mxu0 0
        %4156 = vmatpush1.bf16.msra.mxu0 %v4046
        %4157 = vmatprep.subr.bf16.mxu0 0
        %4158 = vmatpush1.bf16.msra.mxu0 %v4047
        %4159 = vmatprep.subr.bf16.mxu0 0
        %4160 = vmatpush1.bf16.msra.mxu0 %v4048
        %4161 = vmatprep.subr.bf16.mxu0 0
        %4162 = vmatpush1.bf16.msra.mxu0 %v4049
        %4163 = vmatprep.mubr.bf16.mxu0 %v3885
        %4164 = vmatmul.mubr.bf16.gmra.mrb[0].mxu0 %v3884
        %v4165 = vpop.f32.mrb[0].mxu0
        %v4166 = vadd.f32 %v4117, %v4165
        %v4167 = vpop.f32.mrb[0].mxu0
        %v4168 = vpop.f32.mrb[0].mxu0
        %v4169 = vadd.f32 %v4120, %v4168
        %v4170 = vpop.f32.mrb[0].mxu0
        %4171 = vmatprep.mubr.bf16.mxu0 %v3889
        %4172 = vmatmul.mubr.bf16.gmra.mrb[0].mxu0 %v3888
        %v4173 = vpop.f32.mrb[0].mxu0
        %v4174 = vadd.f32 %v4125, %v4173
        %v4175 = vpop.f32.mrb[0].mxu0
        %v4176 = vpop.f32.mrb[0].mxu0
        %v4177 = vadd.f32 %v4128, %v4176
        %v4178 = vpop.f32.mrb[0].mxu0
        %4179 = vdwg.mxu0
        %v4180 = vadd.f32 %v3373, %v4166
        %v4181 = vadd.f32 %v3374, %v4169
        %v4182 = vadd.f32 %v3375, %v4174
        %v4183 = vadd.f32 %v3376, %v4177
        %v4185 = vlaneseq
        %v4186 = vshrl.u32 %v4185, 7
        %v4187 = vsub.s32 0, %v4186
        %v4188 = vrot.slane %v1045, %v4187
        %v4190 = vadd.f32 %v4180, %v4188
        %v4191 = vadd.f32 %v4181, %v4188
        %v4192 = vadd.f32 %v4182, %v4188
        %v4193 = vadd.f32 %v4183, %v4188
        %4194 = vst [vmem:[#allocation2] sm:$0xff] %v4190
        %4195 = vst [vmem:[#allocation2 + $0x8] sm:$0xff] %v4191
        %4196 = vst [vmem:[#allocation2 + $0x10] sm:$0xff] %v4192
        %4197 = vst [vmem:[#allocation2 + $0x18] sm:$0xff] %v4193
        %p4198 = scmp.eq.s32.totalorder %s35, 1
        // Predicated region
        $region125: #{tpu_custom_call.1} parent=91 // pred_check
          %p4199 = pneg %p4198
        $region126: #{tpu_custom_call.1} parent=91 // pred_check_branch
          %4201 = sbr.rel (%p4199) target = $region128
        $region127: #{tpu_custom_call.1} parent=91 // pred_region
          %v4202 = vld [vmem:[%s14] sm:$0x1]
          %v4203 = vld [vmem:[%s15] sm:$0x1]
          %4204 = vadd.xlane.f32.xlu0 %v4190
          %v4205 = vpop.xlane.xlu0 %4204
          %4206 = vadd.xlane.f32.xlu0 %v4191
          %v4207 = vpop.xlane.xlu0 %4206
          %4208 = vadd.xlane.f32.xlu0 %v4192
          %v4209 = vpop.xlane.xlu0 %4208
          %4210 = vadd.xlane.f32.xlu0 %v4193
          %v4211 = vpop.xlane.xlu0 %4210
          %v4212 = vmul.f32 %v4205, %v1054
          %v4213 = vmul.f32 %v4207, %v1054
          %v4214 = vmul.f32 %v4209, %v1054
          %v4215 = vmul.f32 %v4211, %v1054
          %v4216 = vmul.f32 %v4190, %v4190
          %v4217 = vmul.f32 %v4191, %v4191
          %v4218 = vmul.f32 %v4192, %v4192
          %v4219 = vmul.f32 %v4193, %v4193
          %4220 = vadd.xlane.f32.xlu0 %v4216
          %v4221 = vpop.xlane.xlu0 %4220
          %4222 = vadd.xlane.f32.xlu0 %v4217
          %v4223 = vpop.xlane.xlu0 %4222
          %4224 = vadd.xlane.f32.xlu0 %v4218
          %v4225 = vpop.xlane.xlu0 %4224
          %4226 = vadd.xlane.f32.xlu0 %v4219
          %v4227 = vpop.xlane.xlu0 %4226
          %v4228 = vmul.f32 %v4221, %v1054
          %v4229 = vmul.f32 %v4223, %v1054
          %v4230 = vmul.f32 %v4225, %v1054
          %v4231 = vmul.f32 %v4227, %v1054
          %v4232 = vmul.f32 %v4212, %v4212
          %v4233 = vmul.f32 %v4213, %v4213
          %v4234 = vmul.f32 %v4214, %v4214
          %v4235 = vmul.f32 %v4215, %v4215
          %v4236 = vsub.f32 %v4228, %v4232
          %v4237 = vsub.f32 %v4229, %v4233
          %v4238 = vsub.f32 %v4230, %v4234
          %v4239 = vsub.f32 %v4231, %v4235
          %v4240 = vsub.f32 %v4190, %v4212
          %v4241 = vsub.f32 %v4191, %v4213
          %v4242 = vsub.f32 %v4192, %v4214
          %v4243 = vsub.f32 %v4193, %v4215
          %v4244 = vadd.f32 %v4236, 1e-05
          %v4245 = vadd.f32 %v4237, 1e-05
          %v4246 = vadd.f32 %v4238, 1e-05
          %v4247 = vadd.f32 %v4239, 1e-05
          %v4248 = vrsqrt.pop %v4244
          %v4249 = vrsqrt.pop %v4245
          %v4250 = vrsqrt.pop %v4246
          %v4251 = vrsqrt.pop %v4247
          %v4252 = vmul.f32 %v4240, %v4248
          %v4253 = vmul.f32 %v4241, %v4249
          %v4254 = vmul.f32 %v4242, %v4250
          %v4255 = vmul.f32 %v4243, %v4251
          %v4257 = vlaneseq
          %v4258 = vshrl.u32 %v4257, 7
          %v4259 = vsub.s32 0, %v4258
          %v4260 = vrot.slane %v4202, %v4259
          %v4262 = vmul.f32 %v4252, %v4260
          %v4263 = vmul.f32 %v4253, %v4260
          %v4264 = vmul.f32 %v4254, %v4260
          %v4265 = vmul.f32 %v4255, %v4260
          %v4267 = vlaneseq
          %v4268 = vshrl.u32 %v4267, 7
          %v4269 = vsub.s32 0, %v4268
          %v4270 = vrot.slane %v4203, %v4269
          %v4272 = vadd.f32 %v4262, %v4270
          %v4273 = vadd.f32 %v4263, %v4270
          %v4274 = vadd.f32 %v4264, %v4270
          %v4275 = vadd.f32 %v4265, %v4270
          %4276 = vst [vmem:[#allocation13] sm:$0xff] %v4272
          %4277 = vst [vmem:[#allocation13 + $0x8] sm:$0xff] %v4273
          %4278 = vst [vmem:[#allocation13 + $0x10] sm:$0xff] %v4274
          %4279 = vst [vmem:[#allocation13 + $0x18] sm:$0xff] %v4275
          %v4280 = vld [vmem:[%s17] sm:$0x3]
          %v4281 = vpack.c.bf16 %v4273, %v4272
          %v4282 = vpack.c.bf16 %v4275, %v4274
          %v4284 = vsel %vm1535, %v4280, 0
          %4286 = vmatprep.subr.bf16.mxu0 0
          %4287 = vmatpush1.bf16.msra.mxu0 %v4281
          %4288 = vmatprep.subr.bf16.mxu0 0
          %4289 = vmatpush1.bf16.msra.mxu0 %v4282
          %4290 = vmatprep.subr.bf16.mxu0 0
          %4291 = vmatpush1.bf16.msra.mxu0 0
          %4292 = vmatprep.subr.bf16.mxu0 0
          %4293 = vmatpush1.bf16.msra.mxu0 0
          %4294 = vmatprep.subr.bf16.mxu0 0
          %4295 = vmatpush1.bf16.msra.mxu0 0
          %4296 = vmatprep.subr.bf16.mxu0 0
          %4297 = vmatpush1.bf16.msra.mxu0 0
          %4298 = vmatprep.subr.bf16.mxu0 0
          %4299 = vmatpush1.bf16.msra.mxu0 0
          %4300 = vmatprep.subr.bf16.mxu0 0
          %4301 = vmatpush1.bf16.msra.mxu0 0
          %4302 = vmatprep.subr.bf16.mxu0 0
          %4303 = vmatpush1.bf16.msra.mxu0 0
          %4304 = vmatprep.subr.bf16.mxu0 0
          %4305 = vmatpush1.bf16.msra.mxu0 0
          %4306 = vmatprep.subr.bf16.mxu0 0
          %4307 = vmatpush1.bf16.msra.mxu0 0
          %4308 = vmatprep.subr.bf16.mxu0 0
          %4309 = vmatpush1.bf16.msra.mxu0 0
          %4310 = vmatprep.subr.bf16.mxu0 0
          %4311 = vmatpush1.bf16.msra.mxu0 0
          %4312 = vmatprep.subr.bf16.mxu0 0
          %4313 = vmatpush1.bf16.msra.mxu0 0
          %4314 = vmatprep.subr.bf16.mxu0 0
          %4315 = vmatpush1.bf16.msra.mxu0 0
          %4316 = vmatprep.subr.bf16.mxu0 0
          %4317 = vmatpush1.bf16.msra.mxu0 0
          %4318 = vmatprep.mubr.bf16.mxu0 0
          %4319 = vmatmul.mubr.bf16.gmra.mrb[0].mxu0 %v4284
          %v4320 = vpop.f32.mrb[0].mxu0
          %v4321 = vadd.f32 0.0, %v4320
          %v4322 = vpop.f32.mrb[0].mxu0
          %v4323 = vpop.f32.mrb[0].mxu0
          %v4324 = vpop.f32.mrb[0].mxu0
          %4325 = vdwg.mxu0
          %v4326 = vld [vmem:[#allocation12] sm:$0xf]
          %v4327 = vld [vmem:[#allocation12 + $0x4] sm:$0xf]
          %v4328 = vld [vmem:[#allocation12 + $0x8] sm:$0xf]
          %v4329 = vld [vmem:[#allocation12 + $0xc] sm:$0xf]
          %v4330 = vld [vmem:[#allocation12 + $0x10] sm:$0xf]
          %v4331 = vld [vmem:[#allocation12 + $0x14] sm:$0xf]
          %v4332 = vld [vmem:[#allocation12 + $0x18] sm:$0xf]
          %v4333 = vld [vmem:[#allocation12 + $0x1c] sm:$0xf]
          %v4334 = vld [vmem:[#allocation12 + $0x20] sm:$0xf]
          %v4335 = vld [vmem:[#allocation12 + $0x24] sm:$0xf]
          %v4336 = vld [vmem:[#allocation12 + $0x28] sm:$0xf]
          %v4337 = vld [vmem:[#allocation12 + $0x2c] sm:$0xf]
          %v4338 = vld [vmem:[#allocation12 + $0x30] sm:$0xf]
          %v4339 = vld [vmem:[#allocation12 + $0x34] sm:$0xf]
          %v4340 = vld [vmem:[#allocation12 + $0x38] sm:$0xf]
          %v4341 = vld [vmem:[#allocation12 + $0x3c] sm:$0xf]
          %v4342 = vpack.c.bf16 %v4321, %v4321
          %v4359 = vunpack.c.l.b16 %v4326
          %v4360 = vunpack.c.l.b16 %v4327
          %v4361 = vunpack.c.l.b16 %v4328
          %v4362 = vunpack.c.l.b16 %v4329
          %v4363 = vunpack.c.l.b16 %v4330
          %v4364 = vunpack.c.l.b16 %v4331
          %v4365 = vunpack.c.l.b16 %v4332
          %v4366 = vunpack.c.l.b16 %v4333
          %v4367 = vunpack.c.l.b16 %v4334
          %v4368 = vunpack.c.l.b16 %v4335
          %v4369 = vunpack.c.l.b16 %v4336
          %v4370 = vunpack.c.l.b16 %v4337
          %v4371 = vunpack.c.l.b16 %v4338
          %v4372 = vunpack.c.l.b16 %v4339
          %v4373 = vunpack.c.l.b16 %v4340
          %v4374 = vunpack.c.l.b16 %v4341
          %v4375 = vpack.c.b16 %v4360, %v4359
          %v4376 = vpack.c.b16 %v4362, %v4361
          %v4377 = vpack.c.b16 %v4364, %v4363
          %v4378 = vpack.c.b16 %v4366, %v4365
          %v4379 = vpack.c.b16 %v4368, %v4367
          %v4380 = vpack.c.b16 %v4370, %v4369
          %v4381 = vpack.c.b16 %v4372, %v4371
          %v4382 = vpack.c.b16 %v4374, %v4373
          %4391 = vmatprep.subr.bf16.mxu0 0
          %4392 = vmatpush1.bf16.msra.mxu0 %v4375
          %4393 = vmatprep.subr.bf16.mxu0 0
          %4394 = vmatpush1.bf16.msra.mxu0 %v4376
          %4395 = vmatprep.subr.bf16.mxu0 0
          %4396 = vmatpush1.bf16.msra.mxu0 %v4377
          %4397 = vmatprep.subr.bf16.mxu0 0
          %4398 = vmatpush1.bf16.msra.mxu0 %v4378
          %4399 = vmatprep.subr.bf16.mxu0 0
          %4400 = vmatpush1.bf16.msra.mxu0 %v4379
          %4401 = vmatprep.subr.bf16.mxu0 0
          %4402 = vmatpush1.bf16.msra.mxu0 %v4380
          %4403 = vmatprep.subr.bf16.mxu0 0
          %4404 = vmatpush1.bf16.msra.mxu0 %v4381
          %4405 = vmatprep.subr.bf16.mxu0 0
          %4406 = vmatpush1.bf16.msra.mxu0 %v4382
          %4407 = vmatprep.subr.bf16.mxu0 0
          %4408 = vmatpush1.bf16.msra.mxu0 0
          %4409 = vmatprep.subr.bf16.mxu0 0
          %4410 = vmatpush1.bf16.msra.mxu0 0
          %4411 = vmatprep.subr.bf16.mxu0 0
          %4412 = vmatpush1.bf16.msra.mxu0 0
          %4413 = vmatprep.subr.bf16.mxu0 0
          %4414 = vmatpush1.bf16.msra.mxu0 0
          %4415 = vmatprep.subr.bf16.mxu0 0
          %4416 = vmatpush1.bf16.msra.mxu0 0
          %4417 = vmatprep.subr.bf16.mxu0 0
          %4418 = vmatpush1.bf16.msra.mxu0 0
          %4419 = vmatprep.subr.bf16.mxu0 0
          %4420 = vmatpush1.bf16.msra.mxu0 0
          %4421 = vmatprep.subr.bf16.mxu0 0
          %4422 = vmatpush1.bf16.msra.mxu0 0
          %4423 = vmatprep.mubr.bf16.mxu0 0
          %4424 = vmatmul.mubr.bf16.gmra.mrb[0].mxu0 %v4342
          %v4425 = vpop.f32.mrb[0].mxu0
          %v4426 = vadd.f32 0.0, %v4425
          %v4427 = vpop.f32.mrb[0].mxu0
          %v4428 = vpop.f32.mrb[0].mxu0
          %v4429 = vpop.f32.mrb[0].mxu0
          %4430 = vdwg.mxu0
          %v4431 = vmul.f32 %v4426, %v4426
          %v4432 = vsel %vm2468, %v4431, 0.0
          %4433 = vadd.xlane.f32.xlu0 %v4432
          %v4434 = vpop.xlane.xlu0 %4433
          %v4435 = vadd.f32 %v4434, 1e-12
          %v4436 = vrsqrt.pop %v4435
          %v4437 = vmul.f32 %v4426, %v4436
          %4438 = vst [vmem:[#allocation14] sm:$0xf] %v4437
        $region128: #{tpu_custom_call.1} parent=91 // pred_fallthru
          _
        // Predicated region
        $region129: #{tpu_custom_call.1} parent=91 // pred_check
          %p4439 = pneg %p486
        $region130: #{tpu_custom_call.1} parent=91 // pred_check_branch
          %4441 = sbr.rel (%p4439) target = $region132
        $region131: #{tpu_custom_call.1} parent=91 // pred_region
          %s4443 = ssub.s32 512, 512
          %4444 = vsyncadd [#allocation5], %s4443
          %s4445 = sshll.u32 [#allocation13], 4
          %s4446 = int_to_ptr.vmem [resolvable:$true] %s4445
          %4451 = dma.vmem_to_hbm [thread:$0]  %s4446, 512, %s18, [#allocation5], 128, 128, 8
        $region132: #{tpu_custom_call.1} parent=91 // pred_fallthru
          _
        // Predicated region
        $region133: #{tpu_custom_call.1} parent=91 // pred_check
          %p4452 = pneg %p507
        $region134: #{tpu_custom_call.1} parent=91 // pred_check_branch
          %4454 = sbr.rel (%p4452) target = $region136
        $region135: #{tpu_custom_call.1} parent=91 // pred_region
          %s4456 = ssub.s32 64, 64
          %4457 = vsyncadd [#allocation15], %s4456
          %s4459 = sshll.u32 [#allocation14], 4
          %s4460 = int_to_ptr.vmem [resolvable:$true] %s4459
          %4462 = dma.vmem_to_hbm [thread:$0]  %s4460, 64, %s19, [#allocation15]
        $region136: #{tpu_custom_call.1} parent=91 // pred_fallthru
          _
        // Predicated region
        $region137: #{tpu_custom_call.1} parent=91 // pred_check
          %p4463 = pneg %p486
        $region138: #{tpu_custom_call.1} parent=91 // pred_check_branch
          %4465 = sbr.rel (%p4463) target = $region140
        $region139: #{tpu_custom_call.1} parent=91 // pred_region
          %4466 = dma.done [#allocation5], 512
        $region140: #{tpu_custom_call.1} parent=91 // pred_fallthru
          _
        // Predicated region
        $region141: #{tpu_custom_call.1} parent=91 // pred_check
          %p4467 = pneg %p507
        $region142: #{tpu_custom_call.1} parent=91 // pred_check_branch
          %4469 = sbr.rel (%p4467) target = $region144
        $region143: #{tpu_custom_call.1} parent=91 // pred_region
          %4470 = dma.done [#allocation15], 64
        $region144: #{tpu_custom_call.1} parent=91 // pred_fallthru
          _
      $region92: #{tpu_custom_call.1} parent=5 // pred_fallthru
        _
      %p4471 = scmp.le.s32.totalorder 2, %s30
      // Predicated region
      $region145: #{tpu_custom_call.1} parent=5 // pred_check
        %p4472 = pneg %p4471
      $region146: #{tpu_custom_call.1} parent=5 // pred_check_branch
        %4474 = sbr.rel (%p4472) target = $region148
      $region147: #{tpu_custom_call.1} parent=5 // pred_region
        %s4475 = ssub.s32 %s30, 2
      $region148: #{tpu_custom_call.1} parent=5 // pred_fallthru
        _
    $region6: #{tpu_custom_call.1} parent=1 // loop_footer
      %s34 = sadd.s32 1, %s30
    $region7: #{tpu_custom_call.1} parent=1 // loop_footer_branch
      %29 = sbr.rel target = $region3
    $region8: #{tpu_custom_call.1} parent=1 // loop_exit
      _
    %4476 = vsyncpa [#allocation4], 1
    %s4477 = scalar_lea.sflag [#allocation4], 1
    %4478 = vsyncpa %s4477, 1
    %4479 = vsyncpa [#allocation7], 1
    %4480 = vsyncpa [#allocation5], 1
    %s4481 = scalar_lea.sflag [#allocation5], 1
    %4482 = vsyncpa %s4481, 1
    %4483 = vsyncpa [#allocation15], 1

</llo_original>
